<compile_context>
chip_gen: v7x
topology: tpu7x:2x2x1
jax: 0.10.0
libtpu: 0.0.40
codegen_flags: <defaults>
</compile_context>

<pallas_src>
import functools

import jax
import jax.numpy as jnp
import numpy as np
from jax import lax
from jax.experimental import pallas as pl
from jax.experimental.pallas import tpu as pltpu

EPS = 1e-5


# ----------------------------------------------------------------- kernels --

def _conv1x1_stats_kernel(x_ref, w_ref, t_ref, sum_ref, sq_ref):
    """1x1 conv (channel matmul) + per-tile channel sum / sum-of-squares."""
    f = w_ref.shape[1]
    t = jnp.dot(x_ref[...].astype(w_ref.dtype), w_ref[...],
                preferred_element_type=jnp.float32)
    t_ref[...] = t.astype(t_ref.dtype)
    sum_ref[...] = jnp.sum(t, axis=0, keepdims=True).reshape(1, 1, f)
    sq_ref[...] = jnp.sum(t * t, axis=0, keepdims=True).reshape(1, 1, f)


def _conv3x3_stats_kernel(t1_ref, scale_ref, shift_ref, w2w_ref,
                          t2_ref, sum_ref, m2_ref):
    """Per image: BN1 affine -> 3x3 conv (pad=1) as ONE wide MXU matmul
    (K = 3*f1, output lanes = 3*f2) followed by +/-W sublane rolls of the
    narrow f2-wide result slices; also emits per-image channel sums and the
    f2 x f2 second-moment (gram) matrix (f32 operands, no explicit transpose)."""
    H, W, f1 = t1_ref.shape[1], t1_ref.shape[2], t1_ref.shape[3]
    f2 = w2w_ref.shape[1] // 3
    HW = H * W
    cdt = w2w_ref.dtype

    # BN1 as a precomputed per-channel affine (global batch stats), f32 math.
    # (scale is kept in-kernel rather than folded into w2w so the gamma == 0
    #  corner case stays exact; it is one fused VPU multiply-add per element.)
    y = (t1_ref[0].astype(jnp.float32) * scale_ref[...]
         + shift_ref[...]).astype(cdt)                                 # (H, W, f1)

    # +/-1 width (kw) taps via XLU roll + border masks, concatenated on the
    # lane axis -> K = 3*f1.  No padded scratch, no big zero fill.
    w_idx = lax.broadcasted_iota(jnp.int32, (H, W, f1), 1)
    zero = jnp.zeros_like(y)
    left = jnp.where(w_idx == 0, zero, pltpu.roll(y, 1, 1))            # kw = 0
    right = jnp.where(w_idx == W - 1, zero, pltpu.roll(y, W - 1, 1))   # kw = 2
    taps = jnp.concatenate([left, y, right], axis=-1)                  # (H, W, 3*f1)
    taps2d = taps.reshape(HW, 3 * f1)

    # ONE wide matmul: r[:, kh*f2:(kh+1)*f2] = taps2d @ w2c[kh].
    r = jnp.dot(taps2d, w2w_ref[...], preferred_element_type=jnp.float32)

    # Combine kh contributions by shifting only the narrow (f2-wide) slices:
    #   out[p] = r0[p - W] (skip first image row) + r1[p] + r2[p + W] (skip last).
    r0 = r[:, 0:f2]
    r1 = r[:, f2:2 * f2]
    r2 = r[:, 2 * f2:3 * f2]
    p_idx = lax.broadcasted_iota(jnp.int32, (HW, f2), 0)
    zrow = jnp.zeros((HW, f2), jnp.float32)
    acc = (jnp.where(p_idx < W, zrow, pltpu.roll(r0, W, 0))
           + r1
           + jnp.where(p_idx >= HW - W, zrow, pltpu.roll(r2, HW - W, 0)))

    t2_ref[...] = acc.reshape(1, H, W, f2).astype(t2_ref.dtype)
    sum_ref[...] = jnp.sum(acc, axis=0, keepdims=True).reshape(1, 1, f2)
    # Gram matrix with f32 operands, contracting dim 0 directly (no acc.T).
    m2_ref[...] = lax.dot_general(
        acc, acc, (((0,), (0,)), ((), ())),
        preferred_element_type=jnp.float32).reshape(1, f2, f2)


def _conv1x1_bias_residual_kernel(t2_ref, x_ref, w_ref, bias_ref, out_ref):
    """out = t2 @ w + bias + x   (conv3 with BN2 and BN3 folded into w / bias)."""
    y = jnp.dot(t2_ref[...].astype(w_ref.dtype), w_ref[...],
                preferred_element_type=jnp.float32)
    out_ref[...] = (y + bias_ref[...] + x_ref[...].astype(jnp.float32)
                    ).astype(out_ref.dtype)


# ----------------------------------------------------------------- wrapper --

def _row_tile(p, max_rows):
    """Largest multiple-of-8 divisor of p that is <= max_rows (else p)."""
    m = min(max_rows, p)
    for cand in range(m, 7, -1):
        if p % cand == 0 and cand % 8 == 0:
            return cand
    return p


def _chip_config():
    """(vmem_limit_bytes, max_rows) picked per TPU generation."""
    kind = ""
    try:
        kind = jax.devices()[0].device_kind.lower()
    except Exception:
        pass
    if "v7" in kind or "7x" in kind:
        # v7x: only 64 MiB VMEM per TensorCore -> cap scoped limit and tiles.
        return 44 * 1024 * 1024, 2048
    if "v6" in kind:
        return 64 * 1024 * 1024, 4096
    if "v5" in kind:
        return 64 * 1024 * 1024, 8192
    return 32 * 1024 * 1024, 2048   # conservative default for unknown chips


def _cparams(vmem_limit, n_axes=1):
    return pltpu.CompilerParams(
        dimension_semantics=("parallel",) * n_axes,
        vmem_limit_bytes=vmem_limit)


def identical_block_nhwc(x, params, *, compute_dtype=jnp.bfloat16,
                         max_rows=None, vmem_limit_bytes=None):
    """x: (N, H, W, C) float32 (NHWC).  Returns (N, H, W, f3) float32."""
    w1, g1, b1, w2, g2, b2, w3, g3, b3 = params
    N, H, W, C = x.shape
    f1 = w1.shape[1]
    f2 = w2.shape[3]
    f3 = w3.shape[1]
    assert f3 == C, "identity block requires f3 == in_channels for the residual"
    P = N * H * W

    vdef, rdef = _chip_config()
    if vmem_limit_bytes is None:
        vmem_limit_bytes = vdef
    if max_rows is None:
        max_rows = rdef

    TP = _row_tile(P, max_rows)
    nt = P // TP
    cdt = compute_dtype
    csz = jnp.dtype(cdt).itemsize

    x2d = x.reshape(P, C)

    # ---- pass 1: conv1 (1x1) + BN1 batch-statistics partials ---------------
    t1, s1, q1 = pl.pallas_call(
        _conv1x1_stats_kernel,
        grid=(nt,),
        in_specs=[pl.BlockSpec((TP, C), lambda i: (i, 0)),
                  pl.BlockSpec((C, f1), lambda i: (0, 0))],
        out_specs=[pl.BlockSpec((TP, f1), lambda i: (i, 0)),
                   pl.BlockSpec((1, 1, f1), lambda i: (i, 0, 0)),
                   pl.BlockSpec((1, 1, f1), lambda i: (i, 0, 0))],
        out_shape=[jax.ShapeDtypeStruct((P, f1), cdt),
                   jax.ShapeDtypeStruct((nt, 1, f1), jnp.float32),
                   jax.ShapeDtypeStruct((nt, 1, f1), jnp.float32)],
        compiler_params=_cparams(vmem_limit_bytes),
        cost_estimate=pl.CostEstimate(
            flops=2 * P * C * f1, transcendentals=0,
            bytes_accessed=4 * P * C + csz * (P * f1 + C * f1) + 8 * nt * f1),
    )(x2d, w1.astype(cdt))

    mu1 = jnp.sum(s1, axis=(0, 1)) / P
    var1 = jnp.sum(q1, axis=(0, 1)) / P - mu1 * mu1
    scale1 = lax.rsqrt(var1 + EPS) * g1
    shift1 = b1 - mu1 * scale1

    # ---- pass 2: BN1 affine + 3x3 conv + BN2/BN3 statistics ----------------
    t1_img = t1.reshape(N, H, W, f1)
    # Wide 3x3 weight: columns [kh*f2:(kh+1)*f2] hold the kh-th kw-major slice.
    w2c = w2.reshape(3, 3 * f1, f2)
    w2w = jnp.concatenate([w2c[0], w2c[1], w2c[2]], axis=1).astype(cdt)

    # TODO(synk): for v7x with very small batch, tile this pass over row strips
    # (grid=(N, H//TH) with a 1-row halo) so both TensorCores stay busy.
    t2, s2, m2 = pl.pallas_call(
        _conv3x3_stats_kernel,
        grid=(N,),
        in_specs=[pl.BlockSpec((1, H, W, f1), lambda n: (n, 0, 0, 0)),
                  pl.BlockSpec((1, f1), lambda n: (0, 0)),
                  pl.BlockSpec((1, f1), lambda n: (0, 0)),
                  pl.BlockSpec((3 * f1, 3 * f2), lambda n: (0, 0))],
        out_specs=[pl.BlockSpec((1, H, W, f2), lambda n: (n, 0, 0, 0)),
                   pl.BlockSpec((1, 1, f2), lambda n: (n, 0, 0)),
                   pl.BlockSpec((1, f2, f2), lambda n: (n, 0, 0))],
        out_shape=[jax.ShapeDtypeStruct((N, H, W, f2), cdt),
                   jax.ShapeDtypeStruct((N, 1, f2), jnp.float32),
                   jax.ShapeDtypeStruct((N, f2, f2), jnp.float32)],
        compiler_params=_cparams(vmem_limit_bytes),
        cost_estimate=pl.CostEstimate(
            flops=2 * P * 9 * f1 * f2 + 2 * P * f2 * f2, transcendentals=0,
            bytes_accessed=csz * (P * f1 + P * f2 + 9 * f1 * f2)
            + 4 * N * (f2 + f2 * f2)),
    )(t1_img, scale1.reshape(1, f1), shift1.reshape(1, f1), w2w)

    mu2 = jnp.sum(s2, axis=(0, 1)) / P
    M2 = jnp.sum(m2, axis=0)                         # (f2, f2) = sum_p t2 t2^T
    var2 = jnp.diagonal(M2) / P - mu2 * mu2          # sumsq from the gram diag
    scale2 = lax.rsqrt(var2 + EPS) * g2
    shift2 = b2 - mu2 * scale2

    # Fold BN2 into conv3 (exact, 1x1 conv):  conv3(BN2(t2)) = t2 @ w3_eff + bias3
    w3_eff = scale2[:, None] * w3                    # (f2, f3)
    bias3 = shift2 @ w3                              # (f3,)

    # BN3 batch statistics of t3 = t2 @ w3_eff + bias3, derived exactly from the
    # channel mean and second-moment matrix of t2 (no extra full-tensor pass).
    e_a = mu2 @ w3_eff                               # E[t2 @ w3_eff]
    mean3 = e_a + bias3
    e_a2 = jnp.einsum('jk,jl,lk->k', w3_eff, M2, w3_eff) / P
    var3 = e_a2 + 2.0 * bias3 * e_a + bias3 * bias3 - mean3 * mean3
    scale3 = lax.rsqrt(var3 + EPS) * g3
    shift3 = b3 - mean3 * scale3

    # Fold BN3 on top:  BN3(t3) = t2 @ w3_final + bias_final
    w3_final = (w3_eff * scale3[None, :]).astype(cdt)
    bias_final = (bias3 * scale3 + shift3).reshape(1, f3).astype(jnp.float32)

    # ---- pass 3: folded conv3 + residual add --------------------------------
    t2_2d = t2.reshape(P, f2)
    out = pl.pallas_call(
        _conv1x1_bias_residual_kernel,
        grid=(nt,),
        in_specs=[pl.BlockSpec((TP, f2), lambda i: (i, 0)),
                  pl.BlockSpec((TP, C), lambda i: (i, 0)),
                  pl.BlockSpec((f2, f3), lambda i: (0, 0)),
                  pl.BlockSpec((1, f3), lambda i: (0, 0))],
        out_specs=pl.BlockSpec((TP, f3), lambda i: (i, 0)),
        out_shape=jax.ShapeDtypeStruct((P, f3), x.dtype),
        compiler_params=_cparams(vmem_limit_bytes),
        cost_estimate=pl.CostEstimate(
            flops=2 * P * f2 * f3, transcendentals=0,
            bytes_accessed=csz * (P * f2 + f2 * f3) + 4 * P * (C + f3)),
    )(t2_2d, x2d, w3_final, bias_final)

    return out.reshape(N, H, W, f3)


def identical_block(x_nchw, params, *, compute_dtype=jnp.bfloat16,
                    max_rows=None, vmem_limit_bytes=None):
    """Torch-layout entry point: x (N, C, H, W) -> (N, f3, H, W).

    NOTE: the two transposes are an HBM round-trip each; NHWC-native models
    should call identical_block_nhwc directly.
    """
    x = jnp.transpose(x_nchw, (0, 2, 3, 1))
    out = identical_block_nhwc(x, params, compute_dtype=compute_dtype,
                               max_rows=max_rows,
                               vmem_limit_bytes=vmem_limit_bytes)
    return jnp.transpose(out, (0, 3, 1, 2))


# --------------------------------------------------------------- reference --

def reference(x_nchw, params):
    """Pure-JAX f32 reference with exact PyTorch training-mode semantics."""
    w1, g1, b1, w2, g2, b2, w3, g3, b3 = params
    x = jnp.transpose(x_nchw, (0, 2, 3, 1)).astype(jnp.float32)
    N, H, W, C = x.shape
    mm = functools.partial(jnp.einsum, precision=lax.Precision.HIGHEST)

    def bn(t, g, b):
        mu = jnp.mean(t, axis=(0, 1, 2), keepdims=True)
        var = jnp.mean(jnp.square(t - mu), axis=(0, 1, 2), keepdims=True)
        return (t - mu) * lax.rsqrt(var + EPS) * g + b

    t1 = bn(mm('nhwc,cf->nhwf', x, w1), g1, b1)
    xp = jnp.pad(t1, ((0, 0), (1, 1), (1, 1), (0, 0)))
    t2 = jnp.zeros((N, H, W, w2.shape[3]), jnp.float32)
    for dh in range(3):
        for dw in range(3):
            t2 = t2 + mm('nhwc,cf->nhwf',
                         xp[:, dh:dh + H, dw:dw + W, :], w2[dh, dw])
    t2 = bn(t2, g2, b2)
    t3 = bn(mm('nhwc,cf->nhwf', t2, w3), g3, b3)
    return jnp.transpose(t3 + x, (0, 3, 1, 2))   # no ReLU in forward()


# -------------------------------------------------------------------- main --

if __name__ == "__main__":
    key = jax.random.PRNGKey(0)
    N, C, H, W = 2, 4, 16, 16
    f1, f2, f3 = 8, 8, 4     # f3 must equal in_channel for the residual add

    ks = jax.random.split(key, 10)
    # Conv weights, pre-transposed from torch's (out, in, kh, kw):
    #   1x1: (in, out);  3x3: (kh, kw, in, out)
    w1 = 0.1 * jax.random.normal(ks[0], (C, f1), jnp.float32)
    g1 = 1.0 + 0.1 * jax.random.normal(ks[1], (f1,), jnp.float32)
    b1 = 0.1 * jax.random.normal(ks[2], (f1,), jnp.float32)
    w2 = 0.1 * jax.random.normal(ks[3], (3, 3, f1, f2), jnp.float32)
    g2 = 1.0 + 0.1 * jax.random.normal(ks[4], (f2,), jnp.float32)
    b2 = 0.1 * jax.random.normal(ks[5], (f2,), jnp.float32)
    w3 = 0.1 * jax.random.normal(ks[6], (f2, f3), jnp.float32)
    g3 = 1.0 + 0.1 * jax.random.normal(ks[7], (f3,), jnp.float32)
    b3 = 0.1 * jax.random.normal(ks[8], (f3,), jnp.float32)
    params = (w1, g1, b1, w2, g2, b2, w3, g3, b3)

    x = jax.random.normal(ks[9], (N, C, H, W), jnp.float32)

    ref = jax.block_until_ready(reference(x, params))

    # Exactness check: f32 MXU operands must match the PyTorch math tightly
    # (validates the wide-matmul conv restructure, the tiling, the two-phase
    #  batch statistics and the BN folds).
    fwd_f32 = jax.jit(functools.partial(
        identical_block, compute_dtype=jnp.float32, max_rows=128))
    out_f32 = jax.block_until_ready(fwd_f32(x, params))
    assert out_f32.shape == (N, f3, H, W)
    np.testing.assert_allclose(np.asarray(out_f32), np.asarray(ref),
                               rtol=1e-3, atol=1e-3)

    # Fast path: bf16 MXU operands / f32 accumulation & f32 BN statistics.
    fwd_bf16 = jax.jit(functools.partial(
        identical_block, compute_dtype=jnp.bfloat16, max_rows=128))
    out_bf16 = jax.block_until_ready(fwd_bf16(x, params))
    np.testing.assert_allclose(np.asarray(out_bf16), np.asarray(ref),
                               rtol=1e-1, atol=1e-1)

    print("KERNEL_OK")
</pallas_src>

<mosaic_0001>
module attributes {stable_mosaic.version = 11 : i64} {
  func.func @_conv1x1_stats_kernel(%arg0: i32, %arg1: memref<128x4xf32, #tpu.memory_space<vmem>>, %arg2: memref<4x8xf32, #tpu.memory_space<vmem>>, %arg3: memref<128x8xf32, #tpu.memory_space<vmem>>, %arg4: memref<1x1x8xf32, #tpu.memory_space<vmem>>, %arg5: memref<1x1x8xf32, #tpu.memory_space<vmem>>) attributes {dimension_semantics = [#tpu.dimension_semantics<parallel>], iteration_bounds = array<i64: 4>, scalar_prefetch = 0 : i64, scratch_operands = 0 : i64, tpu.core_type = #tpu.core_type<tc>, window_params = [{transform_indices = @transform_0, window_bounds = array<i64: 128, 4>}, {pipeline_mode = #tpu.pipeline_mode<synchronous>, transform_indices = @transform_1, window_bounds = array<i64: 4, 8>}, {transform_indices = @transform_2, window_bounds = array<i64: 128, 8>}, {transform_indices = @transform_3, window_bounds = array<i64: 1, 1, 8>}, {transform_indices = @transform_4, window_bounds = array<i64: 1, 1, 8>}]} {
    %c0 = arith.constant 0 : index
    %c0_0 = arith.constant 0 : index
    %0 = vector.load %arg1[%c0, %c0_0] : memref<128x4xf32, #tpu.memory_space<vmem>>, vector<128x4xf32>
    %c0_1 = arith.constant 0 : index
    %c0_2 = arith.constant 0 : index
    %1 = vector.load %arg2[%c0_1, %c0_2] : memref<4x8xf32, #tpu.memory_space<vmem>>, vector<4x8xf32>
    %cst = arith.constant dense<0.000000e+00> : vector<128x8xf32>
    %2 = tpu.matmul %0, %1, %cst {dimension_numbers = #tpu.dot_dimension_numbers<[1], [0], [0], [1], [0, 0, 1, 1], [], []>} : vector<128x4xf32>, vector<4x8xf32>, vector<128x8xf32> -> vector<128x8xf32>
    %c0_3 = arith.constant 0 : index
    %c0_4 = arith.constant 0 : index
    %3 = vector.load %arg3[%c0_3, %c0_4] : memref<128x8xf32, #tpu.memory_space<vmem>>, vector<128x8xf32>
    tpu.vector_store %arg3[%c0_3, %c0_4], %2 {strides = array<i32>} : memref<128x8xf32, #tpu.memory_space<vmem>>, vector<128x8xf32>,
    %cst_5 = arith.constant dense<0.000000e+00> : vector<8xf32>
    %4 = vector.multi_reduction <add>, %2, %cst_5 [0] : vector<128x8xf32> to vector<8xf32>
    %5 = vector.shape_cast %4 : vector<8xf32> to vector<1x8xf32>
    %6 = vector.shape_cast %5 : vector<1x8xf32> to vector<1x1x8xf32>
    %c0_6 = arith.constant 0 : index
    %c0_7 = arith.constant 0 : index
    %c0_8 = arith.constant 0 : index
    %7 = vector.load %arg4[%c0_6, %c0_7, %c0_8] : memref<1x1x8xf32, #tpu.memory_space<vmem>>, vector<1x1x8xf32>
    tpu.vector_store %arg4[%c0_6, %c0_7, %c0_8], %6 {strides = array<i32>} : memref<1x1x8xf32, #tpu.memory_space<vmem>>, vector<1x1x8xf32>,
    %8 = arith.mulf %2, %2 : vector<128x8xf32>
    %cst_9 = arith.constant dense<0.000000e+00> : vector<8xf32>
    %9 = vector.multi_reduction <add>, %8, %cst_9 [0] : vector<128x8xf32> to vector<8xf32>
    %10 = vector.shape_cast %9 : vector<8xf32> to vector<1x8xf32>
    %11 = vector.shape_cast %10 : vector<1x8xf32> to vector<1x1x8xf32>
    %c0_10 = arith.constant 0 : index
    %c0_11 = arith.constant 0 : index
    %c0_12 = arith.constant 0 : index
    %12 = vector.load %arg5[%c0_10, %c0_11, %c0_12] : memref<1x1x8xf32, #tpu.memory_space<vmem>>, vector<1x1x8xf32>
    tpu.vector_store %arg5[%c0_10, %c0_11, %c0_12], %11 {strides = array<i32>} : memref<1x1x8xf32, #tpu.memory_space<vmem>>, vector<1x1x8xf32>,
    return
  }
  func.func @transform_0(%arg0: i32) -> (i32, i32) {
    %c0_i32 = arith.constant 0 : i32
    %c0_i32_0 = arith.constant 0 : i32
    return %arg0, %c0_i32 : i32, i32
  }
  func.func @transform_1(%arg0: i32) -> (i32, i32) {
    %c0_i32 = arith.constant 0 : i32
    %c0_i32_0 = arith.constant 0 : i32
    %c0_i32_1 = arith.constant 0 : i32
    return %c0_i32, %c0_i32_0 : i32, i32
  }
  func.func @transform_2(%arg0: i32) -> (i32, i32) {
    %c0_i32 = arith.constant 0 : i32
    %c0_i32_0 = arith.constant 0 : i32
    return %arg0, %c0_i32 : i32, i32
  }
  func.func @transform_3(%arg0: i32) -> (i32, i32, i32) {
    %c0_i32 = arith.constant 0 : i32
    %c0_i32_0 = arith.constant 0 : i32
    %c0_i32_1 = arith.constant 0 : i32
    return %arg0, %c0_i32, %c0_i32_0 : i32, i32, i32
  }
  func.func @transform_4(%arg0: i32) -> (i32, i32, i32) {
    %c0_i32 = arith.constant 0 : i32
    %c0_i32_0 = arith.constant 0 : i32
    %c0_i32_1 = arith.constant 0 : i32
    return %arg0, %c0_i32, %c0_i32_0 : i32, i32, i32
  }
}

module attributes {stable_mosaic.version = 11 : i64} {
  func.func @_conv3x3_stats_kernel(%arg0: i32, %arg1: memref<1x16x16x8xf32, #tpu.memory_space<vmem>>, %arg2: memref<1x8xf32, #tpu.memory_space<vmem>>, %arg3: memref<1x8xf32, #tpu.memory_space<vmem>>, %arg4: memref<24x24xf32, #tpu.memory_space<vmem>>, %arg5: memref<1x16x16x8xf32, #tpu.memory_space<vmem>>, %arg6: memref<1x1x8xf32, #tpu.memory_space<vmem>>, %arg7: memref<1x8x8xf32, #tpu.memory_space<vmem>>) attributes {dimension_semantics = [#tpu.dimension_semantics<parallel>], iteration_bounds = array<i64: 2>, scalar_prefetch = 0 : i64, scratch_operands = 0 : i64, tpu.core_type = #tpu.core_type<tc>, window_params = [{transform_indices = @transform_0, window_bounds = array<i64: 1, 16, 16, 8>}, {pipeline_mode = #tpu.pipeline_mode<synchronous>, transform_indices = @transform_1, window_bounds = array<i64: 1, 8>}, {pipeline_mode = #tpu.pipeline_mode<synchronous>, transform_indices = @transform_2, window_bounds = array<i64: 1, 8>}, {pipeline_mode = #tpu.pipeline_mode<synchronous>, transform_indices = @transform_3, window_bounds = array<i64: 24, 24>}, {transform_indices = @transform_4, window_bounds = array<i64: 1, 16, 16, 8>}, {transform_indices = @transform_5, window_bounds = array<i64: 1, 1, 8>}, {transform_indices = @transform_6, window_bounds = array<i64: 1, 8, 8>}]} {
    %c0 = arith.constant 0 : index
    %c0_0 = arith.constant 0 : index
    %c0_1 = arith.constant 0 : index
    %c0_2 = arith.constant 0 : index
    %0 = vector.load %arg1[%c0, %c0_0, %c0_1, %c0_2] : memref<1x16x16x8xf32, #tpu.memory_space<vmem>>, vector<1x16x16x8xf32>
    %1 = vector.shape_cast %0 : vector<1x16x16x8xf32> to vector<16x16x8xf32>
    %c0_3 = arith.constant 0 : index
    %c0_4 = arith.constant 0 : index
    %2 = vector.load %arg2[%c0_3, %c0_4] : memref<1x8xf32, #tpu.memory_space<vmem>>, vector<1x8xf32>
    %3 = vector.shape_cast %2 : vector<1x8xf32> to vector<1x1x8xf32>
    %4 = vector.broadcast %3 : vector<1x1x8xf32> to vector<16x16x8xf32>
    %5 = arith.mulf %1, %4 : vector<16x16x8xf32>
    %c0_5 = arith.constant 0 : index
    %c0_6 = arith.constant 0 : index
    %6 = vector.load %arg3[%c0_5, %c0_6] : memref<1x8xf32, #tpu.memory_space<vmem>>, vector<1x8xf32>
    %7 = vector.shape_cast %6 : vector<1x8xf32> to vector<1x1x8xf32>
    %8 = vector.broadcast %7 : vector<1x1x8xf32> to vector<16x16x8xf32>
    %9 = arith.addf %5, %8 : vector<16x16x8xf32>
    %10 = tpu.iota {dimensions = array<i32: 1>} : vector<16x16x8xi32>
    %cst = arith.constant 0.000000e+00 : f32
    %11 = vector.broadcast %cst : f32 to vector<16x16x8xf32>
    %c0_i32 = arith.constant 0 : i32
    %12 = vector.broadcast %c0_i32 : i32 to vector<16x16x8xi32>
    %13 = arith.cmpi eq, %10, %12 : vector<16x16x8xi32>
    %c1_i32 = arith.constant 1 : i32
    %14 = tpu.dynamic_rotate %9 by %c1_i32 dim 1 : vector<16x16x8xf32>, i32 -> vector<16x16x8xf32>
    %15 = arith.select %13, %11, %14 : vector<16x16x8xi1>, vector<16x16x8xf32>
    %c15_i32 = arith.constant 15 : i32
    %16 = vector.broadcast %c15_i32 : i32 to vector<16x16x8xi32>
    %17 = arith.cmpi eq, %10, %16 : vector<16x16x8xi32>
    %c15_i32_7 = arith.constant 15 : i32
    %18 = tpu.dynamic_rotate %9 by %c15_i32_7 dim 1 : vector<16x16x8xf32>, i32 -> vector<16x16x8xf32>
    %19 = arith.select %17, %11, %18 : vector<16x16x8xi1>, vector<16x16x8xf32>
    %20 = tpu.concatenate %15, %9, %19 in 2 : vector<16x16x8xf32>, vector<16x16x8xf32>, vector<16x16x8xf32> -> vector<16x16x24xf32>
    %21 = vector.shape_cast %20 : vector<16x16x24xf32> to vector<256x24xf32>
    %c0_8 = arith.constant 0 : index
    %c0_9 = arith.constant 0 : index
    %22 = vector.load %arg4[%c0_8, %c0_9] : memref<24x24xf32, #tpu.memory_space<vmem>>, vector<24x24xf32>
    %cst_10 = arith.constant dense<0.000000e+00> : vector<256x24xf32>
    %23 = tpu.matmul %21, %22, %cst_10 {dimension_numbers = #tpu.dot_dimension_numbers<[1], [0], [0], [1], [0, 0, 1, 1], [], []>} : vector<256x24xf32>, vector<24x24xf32>, vector<256x24xf32> -> vector<256x24xf32>
    %24 = vector.extract_strided_slice %23 {offsets = [0, 0], sizes = [256, 8], strides = [1, 1]} : vector<256x24xf32> to vector<256x8xf32>
    %25 = vector.extract_strided_slice %23 {offsets = [0, 8], sizes = [256, 8], strides = [1, 1]} : vector<256x24xf32> to vector<256x8xf32>
    %26 = vector.extract_strided_slice %23 {offsets = [0, 16], sizes = [256, 8], strides = [1, 1]} : vector<256x24xf32> to vector<256x8xf32>
    %27 = tpu.iota {dimensions = array<i32: 0>} : vector<256x8xi32>
    %cst_11 = arith.constant 0.000000e+00 : f32
    %28 = vector.broadcast %cst_11 : f32 to vector<256x8xf32>
    %c16_i32 = arith.constant 16 : i32
    %29 = vector.broadcast %c16_i32 : i32 to vector<256x8xi32>
    %30 = arith.cmpi slt, %27, %29 : vector<256x8xi32>
    %c16_i32_12 = arith.constant 16 : i32
    %31 = tpu.dynamic_rotate %24 by %c16_i32_12 dim 0 : vector<256x8xf32>, i32 -> vector<256x8xf32>
    %32 = arith.select %30, %28, %31 : vector<256x8xi1>, vector<256x8xf32>
    %33 = arith.addf %32, %25 : vector<256x8xf32>
    %c240_i32 = arith.constant 240 : i32
    %34 = vector.broadcast %c240_i32 : i32 to vector<256x8xi32>
    %35 = arith.cmpi sge, %27, %34 : vector<256x8xi32>
    %c240_i32_13 = arith.constant 240 : i32
    %36 = tpu.dynamic_rotate %26 by %c240_i32_13 dim 0 : vector<256x8xf32>, i32 -> vector<256x8xf32>
    %37 = arith.select %35, %28, %36 : vector<256x8xi1>, vector<256x8xf32>
    %38 = arith.addf %33, %37 : vector<256x8xf32>
    %39 = vector.shape_cast %38 : vector<256x8xf32> to vector<1x16x16x8xf32>
    %c0_14 = arith.constant 0 : index
    %c0_15 = arith.constant 0 : index
    %c0_16 = arith.constant 0 : index
    %c0_17 = arith.constant 0 : index
    %40 = vector.load %arg5[%c0_14, %c0_15, %c0_16, %c0_17] : memref<1x16x16x8xf32, #tpu.memory_space<vmem>>, vector<1x16x16x8xf32>
    tpu.vector_store %arg5[%c0_14, %c0_15, %c0_16, %c0_17], %39 {strides = array<i32>} : memref<1x16x16x8xf32, #tpu.memory_space<vmem>>, vector<1x16x16x8xf32>,
    %cst_18 = arith.constant dense<0.000000e+00> : vector<8xf32>
    %41 = vector.multi_reduction <add>, %38, %cst_18 [0] : vector<256x8xf32> to vector<8xf32>
    %42 = vector.shape_cast %41 : vector<8xf32> to vector<1x8xf32>
    %43 = vector.shape_cast %42 : vector<1x8xf32> to vector<1x1x8xf32>
    %c0_19 = arith.constant 0 : index
    %c0_20 = arith.constant 0 : index
    %c0_21 = arith.constant 0 : index
    %44 = vector.load %arg6[%c0_19, %c0_20, %c0_21] : memref<1x1x8xf32, #tpu.memory_space<vmem>>, vector<1x1x8xf32>
    tpu.vector_store %arg6[%c0_19, %c0_20, %c0_21], %43 {strides = array<i32>} : memref<1x1x8xf32, #tpu.memory_space<vmem>>, vector<1x1x8xf32>,
    %cst_22 = arith.constant dense<0.000000e+00> : vector<8x8xf32>
    %45 = tpu.matmul %38, %38, %cst_22 {dimension_numbers = #tpu.dot_dimension_numbers<[0], [0], [1], [1], [0, 1, 1, 1], [], []>} : vector<256x8xf32>, vector<256x8xf32>, vector<8x8xf32> -> vector<8x8xf32>
    %46 = vector.shape_cast %45 : vector<8x8xf32> to vector<1x8x8xf32>
    %c0_23 = arith.constant 0 : index
    %c0_24 = arith.constant 0 : index
    %c0_25 = arith.constant 0 : index
    %47 = vector.load %arg7[%c0_23, %c0_24, %c0_25] : memref<1x8x8xf32, #tpu.memory_space<vmem>>, vector<1x8x8xf32>
    tpu.vector_store %arg7[%c0_23, %c0_24, %c0_25], %46 {strides = array<i32>} : memref<1x8x8xf32, #tpu.memory_space<vmem>>, vector<1x8x8xf32>,
    return
  }
  func.func @transform_0(%arg0: i32) -> (i32, i32, i32, i32) {
    %c0_i32 = arith.constant 0 : i32
    %c0_i32_0 = arith.constant 0 : i32
    %c0_i32_1 = arith.constant 0 : i32
    %c0_i32_2 = arith.constant 0 : i32
    return %arg0, %c0_i32, %c0_i32_0, %c0_i32_1 : i32, i32, i32, i32
  }
  func.func @transform_1(%arg0: i32) -> (i32, i32) {
    %c0_i32 = arith.constant 0 : i32
    %c0_i32_0 = arith.constant 0 : i32
    %c0_i32_1 = arith.constant 0 : i32
    return %c0_i32, %c0_i32_0 : i32, i32
  }
  func.func @transform_2(%arg0: i32) -> (i32, i32) {
    %c0_i32 = arith.constant 0 : i32
    %c0_i32_0 = arith.constant 0 : i32
    %c0_i32_1 = arith.constant 0 : i32
    return %c0_i32, %c0_i32_0 : i32, i32
  }
  func.func @transform_3(%arg0: i32) -> (i32, i32) {
    %c0_i32 = arith.constant 0 : i32
    %c0_i32_0 = arith.constant 0 : i32
    %c0_i32_1 = arith.constant 0 : i32
    return %c0_i32, %c0_i32_0 : i32, i32
  }
  func.func @transform_4(%arg0: i32) -> (i32, i32, i32, i32) {
    %c0_i32 = arith.constant 0 : i32
    %c0_i32_0 = arith.constant 0 : i32
    %c0_i32_1 = arith.constant 0 : i32
    %c0_i32_2 = arith.constant 0 : i32
    return %arg0, %c0_i32, %c0_i32_0, %c0_i32_1 : i32, i32, i32, i32
  }
  func.func @transform_5(%arg0: i32) -> (i32, i32, i32) {
    %c0_i32 = arith.constant 0 : i32
    %c0_i32_0 = arith.constant 0 : i32
    %c0_i32_1 = arith.constant 0 : i32
    return %arg0, %c0_i32, %c0_i32_0 : i32, i32, i32
  }
  func.func @transform_6(%arg0: i32) -> (i32, i32, i32) {
    %c0_i32 = arith.constant 0 : i32
    %c0_i32_0 = arith.constant 0 : i32
    %c0_i32_1 = arith.constant 0 : i32
    return %arg0, %c0_i32, %c0_i32_0 : i32, i32, i32
  }
}

module attributes {stable_mosaic.version = 11 : i64} {
  func.func @_conv1x1_bias_residual_kernel(%arg0: i32, %arg1: memref<128x8xf32, #tpu.memory_space<vmem>>, %arg2: memref<128x4xf32, #tpu.memory_space<vmem>>, %arg3: memref<8x4xf32, #tpu.memory_space<vmem>>, %arg4: memref<1x4xf32, #tpu.memory_space<vmem>>, %arg5: memref<128x4xf32, #tpu.memory_space<vmem>>) attributes {dimension_semantics = [#tpu.dimension_semantics<parallel>], iteration_bounds = array<i64: 4>, scalar_prefetch = 0 : i64, scratch_operands = 0 : i64, tpu.core_type = #tpu.core_type<tc>, window_params = [{transform_indices = @transform_0, window_bounds = array<i64: 128, 8>}, {transform_indices = @transform_1, window_bounds = array<i64: 128, 4>}, {pipeline_mode = #tpu.pipeline_mode<synchronous>, transform_indices = @transform_2, window_bounds = array<i64: 8, 4>}, {pipeline_mode = #tpu.pipeline_mode<synchronous>, transform_indices = @transform_3, window_bounds = array<i64: 1, 4>}, {transform_indices = @transform_4, window_bounds = array<i64: 128, 4>}]} {
    %c0 = arith.constant 0 : index
    %c0_0 = arith.constant 0 : index
    %0 = vector.load %arg1[%c0, %c0_0] : memref<128x8xf32, #tpu.memory_space<vmem>>, vector<128x8xf32>
    %c0_1 = arith.constant 0 : index
    %c0_2 = arith.constant 0 : index
    %1 = vector.load %arg3[%c0_1, %c0_2] : memref<8x4xf32, #tpu.memory_space<vmem>>, vector<8x4xf32>
    %cst = arith.constant dense<0.000000e+00> : vector<128x4xf32>
    %2 = tpu.matmul %0, %1, %cst {dimension_numbers = #tpu.dot_dimension_numbers<[1], [0], [0], [1], [0, 0, 1, 1], [], []>} : vector<128x8xf32>, vector<8x4xf32>, vector<128x4xf32> -> vector<128x4xf32>
    %c0_3 = arith.constant 0 : index
    %c0_4 = arith.constant 0 : index
    %3 = vector.load %arg4[%c0_3, %c0_4] : memref<1x4xf32, #tpu.memory_space<vmem>>, vector<1x4xf32>
    %4 = vector.broadcast %3 : vector<1x4xf32> to vector<128x4xf32>
    %5 = arith.addf %2, %4 : vector<128x4xf32>
    %c0_5 = arith.constant 0 : index
    %c0_6 = arith.constant 0 : index
    %6 = vector.load %arg2[%c0_5, %c0_6] : memref<128x4xf32, #tpu.memory_space<vmem>>, vector<128x4xf32>
    %7 = arith.addf %5, %6 : vector<128x4xf32>
    %c0_7 = arith.constant 0 : index
    %c0_8 = arith.constant 0 : index
    %8 = vector.load %arg5[%c0_7, %c0_8] : memref<128x4xf32, #tpu.memory_space<vmem>>, vector<128x4xf32>
    tpu.vector_store %arg5[%c0_7, %c0_8], %7 {strides = array<i32>} : memref<128x4xf32, #tpu.memory_space<vmem>>, vector<128x4xf32>,
    return
  }
  func.func @transform_0(%arg0: i32) -> (i32, i32) {
    %c0_i32 = arith.constant 0 : i32
    %c0_i32_0 = arith.constant 0 : i32
    return %arg0, %c0_i32 : i32, i32
  }
  func.func @transform_1(%arg0: i32) -> (i32, i32) {
    %c0_i32 = arith.constant 0 : i32
    %c0_i32_0 = arith.constant 0 : i32
    return %arg0, %c0_i32 : i32, i32
  }
  func.func @transform_2(%arg0: i32) -> (i32, i32) {
    %c0_i32 = arith.constant 0 : i32
    %c0_i32_0 = arith.constant 0 : i32
    %c0_i32_1 = arith.constant 0 : i32
    return %c0_i32, %c0_i32_0 : i32, i32
  }
  func.func @transform_3(%arg0: i32) -> (i32, i32) {
    %c0_i32 = arith.constant 0 : i32
    %c0_i32_0 = arith.constant 0 : i32
    %c0_i32_1 = arith.constant 0 : i32
    return %c0_i32, %c0_i32_0 : i32, i32
  }
  func.func @transform_4(%arg0: i32) -> (i32, i32) {
    %c0_i32 = arith.constant 0 : i32
    %c0_i32_0 = arith.constant 0 : i32
    return %arg0, %c0_i32 : i32, i32
  }
}

</mosaic_0001>

<llo_original>
// kernel: identical_block.3
$region0: #{identical_block.3}
  #allocation0 [shape = 'u32[]', space=smem, size = 0x4, offset = 0x4, fixed_abs, tag = 'smem constant byte address 0x4 - core index']
  #allocation1 [shape = 'u32[144,128]{1,0:T(1,128)}', space=vmem, size = 0x12000, scoped, tag = 'internal scratch']
  %s0 = inlined_call_operand.vmem [shape: f32[512,4], index: 0, kind: input, shape index: {}]
  %s1 = inlined_call_operand.vmem [shape: f32[4,8], index: 1, kind: input, shape index: {}]
  %s2 = inlined_call_operand.vmem [shape: f32[512,8], index: 2, kind: output, shape index: {0}]
  %s3 = inlined_call_operand.vmem [shape: f32[4,1,8], index: 3, kind: output, shape index: {1}]
  %s4 = inlined_call_operand.vmem [shape: f32[4,1,8], index: 4, kind: output, shape index: {2}]
  %5 = xla_tuple %s2, %s3, %s4
  %s6 = sld [smem:[#allocation0]]
  $region57: #{identical_block.3} parent=0
    _
  %s8 = ssub.s32 1, %s6
  %s9 = scalar_select 0, %s8, %s6
  loop: start=0, step=1, limit=6
  $region2: #{identical_block.3} parent=0 // loop_pre_header
    _
  $region3: #{identical_block.3} parent=0 // loop_header
    %s11 = sphi 0, %s15
    %p12 = scmp.ge.s32.totalorder %s11, 6
    %s21 = sphi 0, %s23
    %s24 = sphi 0, %s21
    %s25 = sphi 0, %s24
    %s41 = sphi 0, %s25
    %s45 = sphi 0, %s45
    %s47 = sphi 0, %s45
    %s48 = sphi 0, %s47
    %s62 = sphi 0, %s48
    %s68 = sphi 0, %s70
    %s71 = sphi 0, %s68
    %s72 = sphi 0, %s71
    %s88 = sphi 0, %s72
    %s94 = sphi 0, %s96
    %s97 = sphi 0, %s94
    %s98 = sphi 0, %s97
    %s114 = sphi 0, %s98
    %s120 = sphi 0, %s122
    %s123 = sphi 0, %s120
    %s124 = sphi 0, %s123
    %s140 = sphi 0, %s124
  $region4: #{identical_block.3} parent=0 // loop_header_branch
    %14 = sbr.rel (%p12) target = $region8
  $region5: #{identical_block.3} parent=0 // loop_body
    %s16 = ssub.s32 %s11, 1
    %s17 = ssub.s32 %s11, 2
    %s18 = sadd.s32 %s11, 1
    %s19 = ssub.s32 %s11, %s18
    %p20 = scmp.eq.s32.totalorder %s19, 0
    %s22 = sadd.s32 %s21, 1
    %s23 = scalar_select %p20, %s21, %s22
    %p26 = pneg %p20
    %p27 = scmp.eq.s32.totalorder %s11, 3
    %p28 = por %p26, %p27
    %p29 = scmp.ne.s32.totalorder %s21, %s24
    %p30 = scmp.eq.s32.totalorder %s11, 0
    %p31 = por %p29, %p30
    %p32 = scmp.ne.s32.totalorder %s21, %s24
    %p33 = scmp.eq.s32.totalorder %s16, 3
    %p34 = por %p32, %p33
    %p35 = scmp.ne.s32.totalorder %s24, %s25
    %p36 = scmp.eq.s32.totalorder %s16, 0
    %p37 = por %p35, %p36
    %p38 = scmp.ne.s32.totalorder %s24, %s25
    %p39 = scmp.eq.s32.totalorder %s17, 3
    %p40 = por %p38, %p39
    %p42 = scmp.ne.s32.totalorder %s25, %s41
    %p43 = scmp.eq.s32.totalorder %s17, 0
    %p44 = por %p42, %p43
    %s46 = sadd.s32 %s45, 1
    %p49 = scmp.eq.s32.totalorder %s11, 3
    %p50 = scmp.ne.s32.totalorder %s45, %s47
    %p51 = scmp.eq.s32.totalorder %s11, 0
    %p52 = por %p50, %p51
    %p53 = scmp.ne.s32.totalorder %s45, %s47
    %p54 = scmp.eq.s32.totalorder %s16, 3
    %p55 = por %p53, %p54
    %p56 = scmp.ne.s32.totalorder %s47, %s48
    %p57 = scmp.eq.s32.totalorder %s16, 0
    %p58 = por %p56, %p57
    %p59 = scmp.ne.s32.totalorder %s47, %s48
    %p60 = scmp.eq.s32.totalorder %s17, 3
    %p61 = por %p59, %p60
    %p63 = scmp.ne.s32.totalorder %s48, %s62
    %p64 = scmp.eq.s32.totalorder %s17, 0
    %p65 = por %p63, %p64
    %s66 = ssub.s32 %s11, %s18
    %p67 = scmp.eq.s32.totalorder %s66, 0
    %s69 = sadd.s32 %s68, 1
    %s70 = scalar_select %p67, %s68, %s69
    %p73 = pneg %p67
    %p74 = scmp.eq.s32.totalorder %s11, 3
    %p75 = por %p73, %p74
    %p76 = scmp.ne.s32.totalorder %s68, %s71
    %p77 = scmp.eq.s32.totalorder %s11, 0
    %p78 = por %p76, %p77
    %p79 = scmp.ne.s32.totalorder %s68, %s71
    %p80 = scmp.eq.s32.totalorder %s16, 3
    %p81 = por %p79, %p80
    %p82 = scmp.ne.s32.totalorder %s71, %s72
    %p83 = scmp.eq.s32.totalorder %s16, 0
    %p84 = por %p82, %p83
    %p85 = scmp.ne.s32.totalorder %s71, %s72
    %p86 = scmp.eq.s32.totalorder %s17, 3
    %p87 = por %p85, %p86
    %p89 = scmp.ne.s32.totalorder %s72, %s88
    %p90 = scmp.eq.s32.totalorder %s17, 0
    %p91 = por %p89, %p90
    %s92 = ssub.s32 %s11, %s18
    %p93 = scmp.eq.s32.totalorder %s92, 0
    %s95 = sadd.s32 %s94, 1
    %s96 = scalar_select %p93, %s94, %s95
    %p99 = pneg %p93
    %p100 = scmp.eq.s32.totalorder %s11, 3
    %p101 = por %p99, %p100
    %p102 = scmp.ne.s32.totalorder %s94, %s97
    %p103 = scmp.eq.s32.totalorder %s11, 0
    %p104 = por %p102, %p103
    %p105 = scmp.ne.s32.totalorder %s94, %s97
    %p106 = scmp.eq.s32.totalorder %s16, 3
    %p107 = por %p105, %p106
    %p108 = scmp.ne.s32.totalorder %s97, %s98
    %p109 = scmp.eq.s32.totalorder %s16, 0
    %p110 = por %p108, %p109
    %p111 = scmp.ne.s32.totalorder %s97, %s98
    %p112 = scmp.eq.s32.totalorder %s17, 3
    %p113 = por %p111, %p112
    %p115 = scmp.ne.s32.totalorder %s98, %s114
    %p116 = scmp.eq.s32.totalorder %s17, 0
    %p117 = por %p115, %p116
    %s118 = ssub.s32 %s11, %s18
    %p119 = scmp.eq.s32.totalorder %s118, 0
    %s121 = sadd.s32 %s120, 1
    %s122 = scalar_select %p119, %s120, %s121
    %p125 = pneg %p119
    %p126 = scmp.eq.s32.totalorder %s11, 3
    %p127 = por %p125, %p126
    %p128 = scmp.ne.s32.totalorder %s120, %s123
    %p129 = scmp.eq.s32.totalorder %s11, 0
    %p130 = por %p128, %p129
    %p131 = scmp.ne.s32.totalorder %s120, %s123
    %p132 = scmp.eq.s32.totalorder %s16, 3
    %p133 = por %p131, %p132
    %p134 = scmp.ne.s32.totalorder %s123, %s124
    %p135 = scmp.eq.s32.totalorder %s16, 0
    %p136 = por %p134, %p135
    %p137 = scmp.ne.s32.totalorder %s123, %s124
    %p138 = scmp.eq.s32.totalorder %s17, 3
    %p139 = por %p137, %p138
    %p141 = scmp.ne.s32.totalorder %s124, %s140
    %p142 = scmp.eq.s32.totalorder %s17, 0
    %p143 = por %p141, %p142
    %p144 = scmp.le.s32.totalorder 1, %s11
    %p145 = scmp.lt.s32.totalorder %s11, 5
    %p146 = pnand %p144, %p145
    %p147 = pneg %p146
    // Predicated region
    $region9: #{identical_block.3} parent=5 // pred_check
      _
    $region10: #{identical_block.3} parent=5 // pred_check_branch
      %149 = sbr.rel (%p146) target = $region12
    $region11: #{identical_block.3} parent=5 // pred_region
      %s150 = ssub.s32 %s11, 1
      // Predicated region
      $region13: #{identical_block.3} parent=11 // pred_check
        %p151 = pneg %p58
      $region14: #{identical_block.3} parent=11 // pred_check_branch
        %153 = sbr.rel (%p151) target = $region16
      $region15: #{identical_block.3} parent=11 // pred_region
        _
      $region16: #{identical_block.3} parent=11 // pred_fallthru
        _
    $region12: #{identical_block.3} parent=5 // pred_fallthru
      _
    %p154 = scmp.lt.s32.totalorder %s11, 4
    // Predicated region
    $region17: #{identical_block.3} parent=5 // pred_check
      %p155 = pneg %p154
    $region18: #{identical_block.3} parent=5 // pred_check_branch
      %157 = sbr.rel (%p155) target = $region20
    $region19: #{identical_block.3} parent=5 // pred_region
      // Predicated region
      $region21: #{identical_block.3} parent=19 // pred_check
        %p158 = pneg %p31
      $region22: #{identical_block.3} parent=19 // pred_check_branch
        %160 = sbr.rel (%p158) target = $region24
      $region23: #{identical_block.3} parent=19 // pred_region
        %s161 = smul.u32 16, %s11
        %p162 = scmp.lt.s32.totalorder %s161, 63
        %s163 = scalar_select %p162, %s161, 63
        %s164 = smul.addr %s163, 8
        %s165 = scalar_lea.vmem %s0, %s164
        %s166 = smul.u32 16, %s11
      $region24: #{identical_block.3} parent=19 // pred_fallthru
        _
    $region20: #{identical_block.3} parent=5 // pred_fallthru
      _
    %p167 = scmp.le.s32.totalorder 1, %s11
    %p168 = scmp.lt.s32.totalorder %s11, 5
    %p169 = pnand %p167, %p168
    %p170 = pneg %p169
    // Predicated region
    $region25: #{identical_block.3} parent=5 // pred_check
      _
    $region26: #{identical_block.3} parent=5 // pred_check_branch
      %172 = sbr.rel (%p169) target = $region28
    $region27: #{identical_block.3} parent=5 // pred_region
      %s173 = ssub.s32 %s11, 1
      %s174 = smul.u32 16, %s16
      %p175 = scmp.lt.s32.totalorder %s174, 63
      %s176 = scalar_select %p175, %s174, 63
      %s177 = smul.addr %s176, 8
      %s178 = scalar_lea.vmem %s0, %s177
      %p179 = pneg %p37
      %p180 = pneg %p34
      %p181 = pneg %p58
      %p182 = pneg %p55
      %p183 = pneg %p84
      %p184 = pneg %p81
      %s185 = smul.u32 16, %s16
      %p186 = scmp.lt.s32.totalorder %s185, 63
      %s187 = scalar_select %p186, %s185, 63
      %s188 = smul.addr %s187, 8
      %s189 = scalar_lea.vmem %s2, %s188
      %p190 = pneg %p110
      %p191 = pneg %p107
      %p192 = scmp.lt.s32.totalorder %s16, 3
      %s193 = scalar_select %p192, %s16, 3
      %s194 = scalar_lea.vmem %s3, %s193
      %p195 = pneg %p136
      %p196 = pneg %p133
      %p197 = scmp.lt.s32.totalorder %s16, 3
      %s198 = scalar_select %p197, %s16, 3
      %s199 = scalar_lea.vmem %s4, %s198
      %s200 = smul.u32 16, %s16
      %p201 = scmp.lt.s32.totalorder %s200, 63
      %s202 = scalar_select %p201, %s200, 63
      %s203 = smul.addr %s202, 8
      %s204 = scalar_lea.vmem %s0, %s203
      %s205 = smul.u32 16, %s16
      %s206 = smul.u32 16, %s16
      %p207 = scmp.lt.s32.totalorder %s206, 63
      %s208 = scalar_select %p207, %s206, 63
      %s209 = smul.addr %s208, 8
      %s210 = scalar_lea.vmem %s2, %s209
      %s211 = smul.u32 16, %s16
      %p212 = scmp.lt.s32.totalorder %s16, 3
      %s213 = scalar_select %p212, %s16, 3
      %s214 = scalar_lea.vmem %s3, %s213
      %p215 = scmp.lt.s32.totalorder %s16, 3
      %s216 = scalar_select %p215, %s16, 3
      %s217 = scalar_lea.vmem %s4, %s216
      %v218 = vld [vmem:[%s204] sm:$0xff]
      %v219 = vld [vmem:[%s204 + $0x8] sm:$0xff]
      %v220 = vld [vmem:[%s204 + $0x10] sm:$0xff]
      %v221 = vld [vmem:[%s204 + $0x18] sm:$0xff]
      %v222 = vld [vmem:[%s204 + $0x20] sm:$0xff]
      %v223 = vld [vmem:[%s204 + $0x28] sm:$0xff]
      %v224 = vld [vmem:[%s204 + $0x30] sm:$0xff]
      %v225 = vld [vmem:[%s204 + $0x38] sm:$0xff]
      %v226 = vld [vmem:[%s204 + $0x40] sm:$0xff]
      %v227 = vld [vmem:[%s204 + $0x48] sm:$0xff]
      %v228 = vld [vmem:[%s204 + $0x50] sm:$0xff]
      %v229 = vld [vmem:[%s204 + $0x58] sm:$0xff]
      %v230 = vld [vmem:[%s204 + $0x60] sm:$0xff]
      %v231 = vld [vmem:[%s204 + $0x68] sm:$0xff]
      %v232 = vld [vmem:[%s204 + $0x70] sm:$0xff]
      %v233 = vld [vmem:[%s204 + $0x78] sm:$0xff]
      %v234 = vld [vmem:[%s1] sm:$0xf]
      %vm235 = vcmask 31744
      %v237 = vsel %vm235, %v218, 0
      %v240 = vsel %vm235, %v219, 0
      %v243 = vsel %vm235, %v220, 0
      %v246 = vsel %vm235, %v221, 0
      %v249 = vsel %vm235, %v222, 0
      %v252 = vsel %vm235, %v223, 0
      %v255 = vsel %vm235, %v224, 0
      %v258 = vsel %vm235, %v225, 0
      %v261 = vsel %vm235, %v226, 0
      %v264 = vsel %vm235, %v227, 0
      %v267 = vsel %vm235, %v228, 0
      %v270 = vsel %vm235, %v229, 0
      %v273 = vsel %vm235, %v230, 0
      %v276 = vsel %vm235, %v231, 0
      %v279 = vsel %vm235, %v232, 0
      %v282 = vsel %vm235, %v233, 0
      %vm284 = vcmask 1043456
      %v286 = vsel %vm284, %v234, 0
      %288 = vmatprep.subr.mxu0 0.0
      %289 = vmatpush1.msra.mxu0 %v286
      %290 = vmatprep.subr.mxu0 0.0
      %291 = vmatpush1.msra.mxu0 0.0
      %292 = vmatprep.subr.mxu0 0.0
      %293 = vmatpush1.msra.mxu0 0.0
      %294 = vmatprep.subr.mxu0 0.0
      %295 = vmatpush1.msra.mxu0 0.0
      %296 = vmatprep.subr.mxu0 0.0
      %297 = vmatpush1.msra.mxu0 0.0
      %298 = vmatprep.subr.mxu0 0.0
      %299 = vmatpush1.msra.mxu0 0.0
      %300 = vmatprep.subr.mxu0 0.0
      %301 = vmatpush1.msra.mxu0 0.0
      %302 = vmatprep.subr.mxu0 0.0
      %303 = vmatpush1.msra.mxu0 0.0
      %304 = vmatprep.subr.mxu0 0.0
      %305 = vmatpush1.msra.mxu0 0.0
      %306 = vmatprep.subr.mxu0 0.0
      %307 = vmatpush1.msra.mxu0 0.0
      %308 = vmatprep.subr.mxu0 0.0
      %309 = vmatpush1.msra.mxu0 0.0
      %310 = vmatprep.subr.mxu0 0.0
      %311 = vmatpush1.msra.mxu0 0.0
      %312 = vmatprep.subr.mxu0 0.0
      %313 = vmatpush1.msra.mxu0 0.0
      %314 = vmatprep.subr.mxu0 0.0
      %315 = vmatpush1.msra.mxu0 0.0
      %316 = vmatprep.subr.mxu0 0.0
      %317 = vmatpush1.msra.mxu0 0.0
      %318 = vmatprep.subr.mxu0 0.0
      %319 = vmatpush1.msra.mxu0 0.0
      %320 = vmatprep.subr.mxu0 0.0
      %321 = vmatpush1.msra.mxu0 0.0
      %322 = vmatprep.subr.mxu0 0.0
      %323 = vmatpush1.msra.mxu0 0.0
      %324 = vmatprep.subr.mxu0 0.0
      %325 = vmatpush1.msra.mxu0 0.0
      %326 = vmatprep.subr.mxu0 0.0
      %327 = vmatpush1.msra.mxu0 0.0
      %328 = vmatprep.subr.mxu0 0.0
      %329 = vmatpush1.msra.mxu0 0.0
      %330 = vmatprep.subr.mxu0 0.0
      %331 = vmatpush1.msra.mxu0 0.0
      %332 = vmatprep.subr.mxu0 0.0
      %333 = vmatpush1.msra.mxu0 0.0
      %334 = vmatprep.subr.mxu0 0.0
      %335 = vmatpush1.msra.mxu0 0.0
      %336 = vmatprep.subr.mxu0 0.0
      %337 = vmatpush1.msra.mxu0 0.0
      %338 = vmatprep.subr.mxu0 0.0
      %339 = vmatpush1.msra.mxu0 0.0
      %340 = vmatprep.subr.mxu0 0.0
      %341 = vmatpush1.msra.mxu0 0.0
      %342 = vmatprep.subr.mxu0 0.0
      %343 = vmatpush1.msra.mxu0 0.0
      %344 = vmatprep.subr.mxu0 0.0
      %345 = vmatpush1.msra.mxu0 0.0
      %346 = vmatprep.subr.mxu0 0.0
      %347 = vmatpush1.msra.mxu0 0.0
      %348 = vmatprep.subr.mxu0 0.0
      %349 = vmatpush1.msra.mxu0 0.0
      %350 = vmatprep.subr.mxu0 0.0
      %351 = vmatpush1.msra.mxu0 0.0
      %352 = vmatprep.mubr.f32.mxu0 0.0
      %353 = vmatmul.mubr.f32.gmra.mrb[0].mxu0 %v237
      %v354 = vpop.f32.mrb[0].mxu0
      %v355 = vadd.f32 0.0, %v354
      %v356 = vpop.f32.mrb[0].mxu0
      %357 = vmatprep.mubr.f32.mxu0 0.0
      %358 = vmatmul.mubr.f32.gmra.mrb[0].mxu0 %v240
      %v359 = vpop.f32.mrb[0].mxu0
      %v360 = vadd.f32 0.0, %v359
      %v361 = vpop.f32.mrb[0].mxu0
      %362 = vmatprep.mubr.f32.mxu0 0.0
      %363 = vmatmul.mubr.f32.gmra.mrb[0].mxu0 %v243
      %v364 = vpop.f32.mrb[0].mxu0
      %v365 = vadd.f32 0.0, %v364
      %v366 = vpop.f32.mrb[0].mxu0
      %367 = vmatprep.mubr.f32.mxu0 0.0
      %368 = vmatmul.mubr.f32.gmra.mrb[0].mxu0 %v246
      %v369 = vpop.f32.mrb[0].mxu0
      %v370 = vadd.f32 0.0, %v369
      %v371 = vpop.f32.mrb[0].mxu0
      %372 = vmatprep.mubr.f32.mxu0 0.0
      %373 = vmatmul.mubr.f32.gmra.mrb[0].mxu0 %v249
      %v374 = vpop.f32.mrb[0].mxu0
      %v375 = vadd.f32 0.0, %v374
      %v376 = vpop.f32.mrb[0].mxu0
      %377 = vmatprep.mubr.f32.mxu0 0.0
      %378 = vmatmul.mubr.f32.gmra.mrb[0].mxu0 %v252
      %v379 = vpop.f32.mrb[0].mxu0
      %v380 = vadd.f32 0.0, %v379
      %v381 = vpop.f32.mrb[0].mxu0
      %382 = vmatprep.mubr.f32.mxu0 0.0
      %383 = vmatmul.mubr.f32.gmra.mrb[0].mxu0 %v255
      %v384 = vpop.f32.mrb[0].mxu0
      %v385 = vadd.f32 0.0, %v384
      %v386 = vpop.f32.mrb[0].mxu0
      %387 = vmatprep.mubr.f32.mxu0 0.0
      %388 = vmatmul.mubr.f32.gmra.mrb[0].mxu0 %v258
      %v389 = vpop.f32.mrb[0].mxu0
      %v390 = vadd.f32 0.0, %v389
      %v391 = vpop.f32.mrb[0].mxu0
      %392 = vmatprep.mubr.f32.mxu0 0.0
      %393 = vmatmul.mubr.f32.gmra.mrb[0].mxu0 %v261
      %v394 = vpop.f32.mrb[0].mxu0
      %v395 = vadd.f32 0.0, %v394
      %v396 = vpop.f32.mrb[0].mxu0
      %397 = vmatprep.mubr.f32.mxu0 0.0
      %398 = vmatmul.mubr.f32.gmra.mrb[0].mxu0 %v264
      %v399 = vpop.f32.mrb[0].mxu0
      %v400 = vadd.f32 0.0, %v399
      %v401 = vpop.f32.mrb[0].mxu0
      %402 = vmatprep.mubr.f32.mxu0 0.0
      %403 = vmatmul.mubr.f32.gmra.mrb[0].mxu0 %v267
      %v404 = vpop.f32.mrb[0].mxu0
      %v405 = vadd.f32 0.0, %v404
      %v406 = vpop.f32.mrb[0].mxu0
      %407 = vmatprep.mubr.f32.mxu0 0.0
      %408 = vmatmul.mubr.f32.gmra.mrb[0].mxu0 %v270
      %v409 = vpop.f32.mrb[0].mxu0
      %v410 = vadd.f32 0.0, %v409
      %v411 = vpop.f32.mrb[0].mxu0
      %412 = vmatprep.mubr.f32.mxu0 0.0
      %413 = vmatmul.mubr.f32.gmra.mrb[0].mxu0 %v273
      %v414 = vpop.f32.mrb[0].mxu0
      %v415 = vadd.f32 0.0, %v414
      %v416 = vpop.f32.mrb[0].mxu0
      %417 = vmatprep.mubr.f32.mxu0 0.0
      %418 = vmatmul.mubr.f32.gmra.mrb[0].mxu0 %v276
      %v419 = vpop.f32.mrb[0].mxu0
      %v420 = vadd.f32 0.0, %v419
      %v421 = vpop.f32.mrb[0].mxu0
      %422 = vmatprep.mubr.f32.mxu0 0.0
      %423 = vmatmul.mubr.f32.gmra.mrb[0].mxu0 %v279
      %v424 = vpop.f32.mrb[0].mxu0
      %v425 = vadd.f32 0.0, %v424
      %v426 = vpop.f32.mrb[0].mxu0
      %427 = vmatprep.mubr.f32.mxu0 0.0
      %428 = vmatmul.mubr.f32.gmra.mrb[0].mxu0 %v282
      %v429 = vpop.f32.mrb[0].mxu0
      %v430 = vadd.f32 0.0, %v429
      %v431 = vpop.f32.mrb[0].mxu0
      %432 = vdwg.mxu0
      %vm433 = vcmask 64512
      %434 = vst.msk [vmem:[%s210] sm:$0xff] %vm433, %v355
      %435 = vst.msk [vmem:[%s210 + $0x8] sm:$0xff] %vm433, %v360
      %436 = vst.msk [vmem:[%s210 + $0x10] sm:$0xff] %vm433, %v365
      %437 = vst.msk [vmem:[%s210 + $0x18] sm:$0xff] %vm433, %v370
      %438 = vst.msk [vmem:[%s210 + $0x20] sm:$0xff] %vm433, %v375
      %439 = vst.msk [vmem:[%s210 + $0x28] sm:$0xff] %vm433, %v380
      %440 = vst.msk [vmem:[%s210 + $0x30] sm:$0xff] %vm433, %v385
      %441 = vst.msk [vmem:[%s210 + $0x38] sm:$0xff] %vm433, %v390
      %442 = vst.msk [vmem:[%s210 + $0x40] sm:$0xff] %vm433, %v395
      %443 = vst.msk [vmem:[%s210 + $0x48] sm:$0xff] %vm433, %v400
      %444 = vst.msk [vmem:[%s210 + $0x50] sm:$0xff] %vm433, %v405
      %445 = vst.msk [vmem:[%s210 + $0x58] sm:$0xff] %vm433, %v410
      %446 = vst.msk [vmem:[%s210 + $0x60] sm:$0xff] %vm433, %v415
      %447 = vst.msk [vmem:[%s210 + $0x68] sm:$0xff] %vm433, %v420
      %448 = vst.msk [vmem:[%s210 + $0x70] sm:$0xff] %vm433, %v425
      %449 = vst.msk [vmem:[%s210 + $0x78] sm:$0xff] %vm433, %v430
      %v450 = vsel %vm433, %v355, 0.0
      %v451 = vsel %vm433, %v360, 0.0
      %v452 = vadd.f32 %v450, %v451
      %v453 = vsel %vm433, %v365, 0.0
      %v454 = vadd.f32 %v452, %v453
      %v455 = vsel %vm433, %v370, 0.0
      %v456 = vadd.f32 %v454, %v455
      %v457 = vsel %vm433, %v375, 0.0
      %v458 = vadd.f32 %v456, %v457
      %v459 = vsel %vm433, %v380, 0.0
      %v460 = vadd.f32 %v458, %v459
      %v461 = vsel %vm433, %v385, 0.0
      %v462 = vadd.f32 %v460, %v461
      %v463 = vsel %vm433, %v390, 0.0
      %v464 = vadd.f32 %v462, %v463
      %v465 = vsel %vm433, %v395, 0.0
      %v466 = vadd.f32 %v464, %v465
      %v467 = vsel %vm433, %v400, 0.0
      %v468 = vadd.f32 %v466, %v467
      %v469 = vsel %vm433, %v405, 0.0
      %v470 = vadd.f32 %v468, %v469
      %v471 = vsel %vm433, %v410, 0.0
      %v472 = vadd.f32 %v470, %v471
      %v473 = vsel %vm433, %v415, 0.0
      %v474 = vadd.f32 %v472, %v473
      %v475 = vsel %vm433, %v420, 0.0
      %v476 = vadd.f32 %v474, %v475
      %v477 = vsel %vm433, %v425, 0.0
      %v478 = vadd.f32 %v476, %v477
      %v479 = vsel %vm433, %v430, 0.0
      %v480 = vadd.f32 %v478, %v479
      %v481 = vrot.slane %v480, 4
      %v482 = vadd.f32 %v480, %v481
      %v483 = vrot.slane %v482, 2
      %v484 = vadd.f32 %v482, %v483
      %v485 = vrot.slane %v484, 1
      %v486 = vadd.f32 %v484, %v485
      %vm487 = vcmask 57344
      %488 = vst.msk [vmem:[%s214] sm:$0x1] %vm487, %v486
      %v489 = vmul.f32 %v355, %v355
      %v490 = vmul.f32 %v360, %v360
      %v491 = vmul.f32 %v365, %v365
      %v492 = vmul.f32 %v370, %v370
      %v493 = vmul.f32 %v375, %v375
      %v494 = vmul.f32 %v380, %v380
      %v495 = vmul.f32 %v385, %v385
      %v496 = vmul.f32 %v390, %v390
      %v497 = vmul.f32 %v395, %v395
      %v498 = vmul.f32 %v400, %v400
      %v499 = vmul.f32 %v405, %v405
      %v500 = vmul.f32 %v410, %v410
      %v501 = vmul.f32 %v415, %v415
      %v502 = vmul.f32 %v420, %v420
      %v503 = vmul.f32 %v425, %v425
      %v504 = vmul.f32 %v430, %v430
      %v505 = vsel %vm433, %v489, 0.0
      %v506 = vsel %vm433, %v490, 0.0
      %v507 = vadd.f32 %v505, %v506
      %v508 = vsel %vm433, %v491, 0.0
      %v509 = vadd.f32 %v507, %v508
      %v510 = vsel %vm433, %v492, 0.0
      %v511 = vadd.f32 %v509, %v510
      %v512 = vsel %vm433, %v493, 0.0
      %v513 = vadd.f32 %v511, %v512
      %v514 = vsel %vm433, %v494, 0.0
      %v515 = vadd.f32 %v513, %v514
      %v516 = vsel %vm433, %v495, 0.0
      %v517 = vadd.f32 %v515, %v516
      %v518 = vsel %vm433, %v496, 0.0
      %v519 = vadd.f32 %v517, %v518
      %v520 = vsel %vm433, %v497, 0.0
      %v521 = vadd.f32 %v519, %v520
      %v522 = vsel %vm433, %v498, 0.0
      %v523 = vadd.f32 %v521, %v522
      %v524 = vsel %vm433, %v499, 0.0
      %v525 = vadd.f32 %v523, %v524
      %v526 = vsel %vm433, %v500, 0.0
      %v527 = vadd.f32 %v525, %v526
      %v528 = vsel %vm433, %v501, 0.0
      %v529 = vadd.f32 %v527, %v528
      %v530 = vsel %vm433, %v502, 0.0
      %v531 = vadd.f32 %v529, %v530
      %v532 = vsel %vm433, %v503, 0.0
      %v533 = vadd.f32 %v531, %v532
      %v534 = vsel %vm433, %v504, 0.0
      %v535 = vadd.f32 %v533, %v534
      %v536 = vrot.slane %v535, 4
      %v537 = vadd.f32 %v535, %v536
      %v538 = vrot.slane %v537, 2
      %v539 = vadd.f32 %v537, %v538
      %v540 = vrot.slane %v539, 1
      %v541 = vadd.f32 %v539, %v540
      %542 = vst.msk [vmem:[%s217] sm:$0x1] %vm487, %v541
      %s543 = smul.u32 16, %s16
      %p544 = scmp.lt.s32.totalorder %s543, 63
      %s545 = scalar_select %p544, %s543, 63
      %s546 = smul.addr %s545, 8
      %s547 = scalar_lea.vmem %s2, %s546
      %p548 = scmp.lt.s32.totalorder %s16, 3
      %s549 = scalar_select %p548, %s16, 3
      %s550 = scalar_lea.vmem %s3, %s549
      %p551 = scmp.lt.s32.totalorder %s16, 3
      %s552 = scalar_select %p551, %s16, 3
      %s553 = scalar_lea.vmem %s4, %s552
      // Predicated region
      $region29: #{identical_block.3} parent=27 // pred_check
        %p554 = pneg %p81
      $region30: #{identical_block.3} parent=27 // pred_check_branch
        %556 = sbr.rel (%p554) target = $region32
      $region31: #{identical_block.3} parent=27 // pred_region
        %s557 = smul.u32 16, %s16
      $region32: #{identical_block.3} parent=27 // pred_fallthru
        _
      // Predicated region
      $region33: #{identical_block.3} parent=27 // pred_check
        %p558 = pneg %p107
      $region34: #{identical_block.3} parent=27 // pred_check_branch
        %560 = sbr.rel (%p558) target = $region36
      $region35: #{identical_block.3} parent=27 // pred_region
        _
      $region36: #{identical_block.3} parent=27 // pred_fallthru
        _
      // Predicated region
      $region37: #{identical_block.3} parent=27 // pred_check
        %p561 = pneg %p133
      $region38: #{identical_block.3} parent=27 // pred_check_branch
        %563 = sbr.rel (%p561) target = $region40
      $region39: #{identical_block.3} parent=27 // pred_region
        _
      $region40: #{identical_block.3} parent=27 // pred_fallthru
        _
    $region28: #{identical_block.3} parent=5 // pred_fallthru
      _
    %p564 = scmp.le.s32.totalorder 2, %s11
    // Predicated region
    $region41: #{identical_block.3} parent=5 // pred_check
      %p565 = pneg %p564
    $region42: #{identical_block.3} parent=5 // pred_check_branch
      %567 = sbr.rel (%p565) target = $region44
    $region43: #{identical_block.3} parent=5 // pred_region
      %s568 = ssub.s32 %s11, 2
      // Predicated region
      $region45: #{identical_block.3} parent=43 // pred_check
        %p569 = pneg %p87
      $region46: #{identical_block.3} parent=43 // pred_check_branch
        %571 = sbr.rel (%p569) target = $region48
      $region47: #{identical_block.3} parent=43 // pred_region
        %s572 = smul.u32 16, %s17
        %p573 = scmp.lt.s32.totalorder %s572, 63
        %s574 = scalar_select %p573, %s572, 63
        %s575 = smul.addr %s574, 8
        %s576 = scalar_lea.vmem %s2, %s575
      $region48: #{identical_block.3} parent=43 // pred_fallthru
        _
      // Predicated region
      $region49: #{identical_block.3} parent=43 // pred_check
        %p577 = pneg %p113
      $region50: #{identical_block.3} parent=43 // pred_check_branch
        %579 = sbr.rel (%p577) target = $region52
      $region51: #{identical_block.3} parent=43 // pred_region
        %p580 = scmp.lt.s32.totalorder %s17, 3
        %s581 = scalar_select %p580, %s17, 3
        %s582 = scalar_lea.vmem %s3, %s581
      $region52: #{identical_block.3} parent=43 // pred_fallthru
        _
      // Predicated region
      $region53: #{identical_block.3} parent=43 // pred_check
        %p583 = pneg %p139
      $region54: #{identical_block.3} parent=43 // pred_check_branch
        %585 = sbr.rel (%p583) target = $region56
      $region55: #{identical_block.3} parent=43 // pred_region
        %p586 = scmp.lt.s32.totalorder %s17, 3
        %s587 = scalar_select %p586, %s17, 3
        %s588 = scalar_lea.vmem %s4, %s587
      $region56: #{identical_block.3} parent=43 // pred_fallthru
        _
    $region44: #{identical_block.3} parent=5 // pred_fallthru
      _
  $region6: #{identical_block.3} parent=0 // loop_footer
    %s15 = sadd.s32 1, %s11
  $region7: #{identical_block.3} parent=0 // loop_footer_branch
    %10 = sbr.rel target = $region3
  $region8: #{identical_block.3} parent=0 // loop_exit
    _

// kernel: identical_block.5
$region0: #{identical_block.5}
  #allocation0 [shape = 'u32[]', space=smem, size = 0x4, offset = 0x4, fixed_abs, tag = 'smem constant byte address 0x4 - core index']
  #allocation1 [shape = 'u32[144,128]{1,0:T(1,128)}', space=vmem, size = 0x12000, scoped, tag = 'internal scratch']
  %s0 = inlined_call_operand.vmem [shape: f32[512,8], index: 0, kind: input, shape index: {}]
  %s1 = inlined_call_operand.vmem [shape: f32[512,4], index: 1, kind: input, shape index: {}]
  %s2 = inlined_call_operand.vmem [shape: f32[8,4], index: 2, kind: input, shape index: {}]
  %s3 = inlined_call_operand.vmem [shape: f32[1,4], index: 3, kind: input, shape index: {}]
  %s4 = inlined_call_operand.vmem [shape: f32[512,4], index: 4, kind: output, shape index: {}]
  %s5 = sld [smem:[#allocation0]]
  $region49: #{identical_block.5} parent=0
    _
  %s7 = ssub.s32 1, %s5
  %s8 = scalar_select 0, %s7, %s5
  loop: start=0, step=1, limit=6
  $region2: #{identical_block.5} parent=0 // loop_pre_header
    _
  $region3: #{identical_block.5} parent=0 // loop_header
    %s10 = sphi 0, %s14
    %p11 = scmp.ge.s32.totalorder %s10, 6
    %s20 = sphi 0, %s22
    %s23 = sphi 0, %s20
    %s24 = sphi 0, %s23
    %s40 = sphi 0, %s24
    %s46 = sphi 0, %s48
    %s49 = sphi 0, %s46
    %s50 = sphi 0, %s49
    %s66 = sphi 0, %s50
    %s70 = sphi 0, %s70
    %s72 = sphi 0, %s70
    %s73 = sphi 0, %s72
    %s87 = sphi 0, %s73
    %s91 = sphi 0, %s91
    %s93 = sphi 0, %s91
    %s94 = sphi 0, %s93
    %s108 = sphi 0, %s94
    %s114 = sphi 0, %s116
    %s117 = sphi 0, %s114
    %s118 = sphi 0, %s117
    %s134 = sphi 0, %s118
  $region4: #{identical_block.5} parent=0 // loop_header_branch
    %13 = sbr.rel (%p11) target = $region8
  $region5: #{identical_block.5} parent=0 // loop_body
    %s15 = ssub.s32 %s10, 1
    %s16 = ssub.s32 %s10, 2
    %s17 = sadd.s32 %s10, 1
    %s18 = ssub.s32 %s10, %s17
    %p19 = scmp.eq.s32.totalorder %s18, 0
    %s21 = sadd.s32 %s20, 1
    %s22 = scalar_select %p19, %s20, %s21
    %p25 = pneg %p19
    %p26 = scmp.eq.s32.totalorder %s10, 3
    %p27 = por %p25, %p26
    %p28 = scmp.ne.s32.totalorder %s20, %s23
    %p29 = scmp.eq.s32.totalorder %s10, 0
    %p30 = por %p28, %p29
    %p31 = scmp.ne.s32.totalorder %s20, %s23
    %p32 = scmp.eq.s32.totalorder %s15, 3
    %p33 = por %p31, %p32
    %p34 = scmp.ne.s32.totalorder %s23, %s24
    %p35 = scmp.eq.s32.totalorder %s15, 0
    %p36 = por %p34, %p35
    %p37 = scmp.ne.s32.totalorder %s23, %s24
    %p38 = scmp.eq.s32.totalorder %s16, 3
    %p39 = por %p37, %p38
    %p41 = scmp.ne.s32.totalorder %s24, %s40
    %p42 = scmp.eq.s32.totalorder %s16, 0
    %p43 = por %p41, %p42
    %s44 = ssub.s32 %s10, %s17
    %p45 = scmp.eq.s32.totalorder %s44, 0
    %s47 = sadd.s32 %s46, 1
    %s48 = scalar_select %p45, %s46, %s47
    %p51 = pneg %p45
    %p52 = scmp.eq.s32.totalorder %s10, 3
    %p53 = por %p51, %p52
    %p54 = scmp.ne.s32.totalorder %s46, %s49
    %p55 = scmp.eq.s32.totalorder %s10, 0
    %p56 = por %p54, %p55
    %p57 = scmp.ne.s32.totalorder %s46, %s49
    %p58 = scmp.eq.s32.totalorder %s15, 3
    %p59 = por %p57, %p58
    %p60 = scmp.ne.s32.totalorder %s49, %s50
    %p61 = scmp.eq.s32.totalorder %s15, 0
    %p62 = por %p60, %p61
    %p63 = scmp.ne.s32.totalorder %s49, %s50
    %p64 = scmp.eq.s32.totalorder %s16, 3
    %p65 = por %p63, %p64
    %p67 = scmp.ne.s32.totalorder %s50, %s66
    %p68 = scmp.eq.s32.totalorder %s16, 0
    %p69 = por %p67, %p68
    %s71 = sadd.s32 %s70, 1
    %p74 = scmp.eq.s32.totalorder %s10, 3
    %p75 = scmp.ne.s32.totalorder %s70, %s72
    %p76 = scmp.eq.s32.totalorder %s10, 0
    %p77 = por %p75, %p76
    %p78 = scmp.ne.s32.totalorder %s70, %s72
    %p79 = scmp.eq.s32.totalorder %s15, 3
    %p80 = por %p78, %p79
    %p81 = scmp.ne.s32.totalorder %s72, %s73
    %p82 = scmp.eq.s32.totalorder %s15, 0
    %p83 = por %p81, %p82
    %p84 = scmp.ne.s32.totalorder %s72, %s73
    %p85 = scmp.eq.s32.totalorder %s16, 3
    %p86 = por %p84, %p85
    %p88 = scmp.ne.s32.totalorder %s73, %s87
    %p89 = scmp.eq.s32.totalorder %s16, 0
    %p90 = por %p88, %p89
    %s92 = sadd.s32 %s91, 1
    %p95 = scmp.eq.s32.totalorder %s10, 3
    %p96 = scmp.ne.s32.totalorder %s91, %s93
    %p97 = scmp.eq.s32.totalorder %s10, 0
    %p98 = por %p96, %p97
    %p99 = scmp.ne.s32.totalorder %s91, %s93
    %p100 = scmp.eq.s32.totalorder %s15, 3
    %p101 = por %p99, %p100
    %p102 = scmp.ne.s32.totalorder %s93, %s94
    %p103 = scmp.eq.s32.totalorder %s15, 0
    %p104 = por %p102, %p103
    %p105 = scmp.ne.s32.totalorder %s93, %s94
    %p106 = scmp.eq.s32.totalorder %s16, 3
    %p107 = por %p105, %p106
    %p109 = scmp.ne.s32.totalorder %s94, %s108
    %p110 = scmp.eq.s32.totalorder %s16, 0
    %p111 = por %p109, %p110
    %s112 = ssub.s32 %s10, %s17
    %p113 = scmp.eq.s32.totalorder %s112, 0
    %s115 = sadd.s32 %s114, 1
    %s116 = scalar_select %p113, %s114, %s115
    %p119 = pneg %p113
    %p120 = scmp.eq.s32.totalorder %s10, 3
    %p121 = por %p119, %p120
    %p122 = scmp.ne.s32.totalorder %s114, %s117
    %p123 = scmp.eq.s32.totalorder %s10, 0
    %p124 = por %p122, %p123
    %p125 = scmp.ne.s32.totalorder %s114, %s117
    %p126 = scmp.eq.s32.totalorder %s15, 3
    %p127 = por %p125, %p126
    %p128 = scmp.ne.s32.totalorder %s117, %s118
    %p129 = scmp.eq.s32.totalorder %s15, 0
    %p130 = por %p128, %p129
    %p131 = scmp.ne.s32.totalorder %s117, %s118
    %p132 = scmp.eq.s32.totalorder %s16, 3
    %p133 = por %p131, %p132
    %p135 = scmp.ne.s32.totalorder %s118, %s134
    %p136 = scmp.eq.s32.totalorder %s16, 0
    %p137 = por %p135, %p136
    %p138 = scmp.le.s32.totalorder 1, %s10
    %p139 = scmp.lt.s32.totalorder %s10, 5
    %p140 = pnand %p138, %p139
    %p141 = pneg %p140
    // Predicated region
    $region9: #{identical_block.5} parent=5 // pred_check
      _
    $region10: #{identical_block.5} parent=5 // pred_check_branch
      %143 = sbr.rel (%p140) target = $region12
    $region11: #{identical_block.5} parent=5 // pred_region
      %s144 = ssub.s32 %s10, 1
      // Predicated region
      $region13: #{identical_block.5} parent=11 // pred_check
        %p145 = pneg %p83
      $region14: #{identical_block.5} parent=11 // pred_check_branch
        %147 = sbr.rel (%p145) target = $region16
      $region15: #{identical_block.5} parent=11 // pred_region
        _
      $region16: #{identical_block.5} parent=11 // pred_fallthru
        _
      // Predicated region
      $region17: #{identical_block.5} parent=11 // pred_check
        %p148 = pneg %p104
      $region18: #{identical_block.5} parent=11 // pred_check_branch
        %150 = sbr.rel (%p148) target = $region20
      $region19: #{identical_block.5} parent=11 // pred_region
        _
      $region20: #{identical_block.5} parent=11 // pred_fallthru
        _
    $region12: #{identical_block.5} parent=5 // pred_fallthru
      _
    %p151 = scmp.lt.s32.totalorder %s10, 4
    // Predicated region
    $region21: #{identical_block.5} parent=5 // pred_check
      %p152 = pneg %p151
    $region22: #{identical_block.5} parent=5 // pred_check_branch
      %154 = sbr.rel (%p152) target = $region24
    $region23: #{identical_block.5} parent=5 // pred_region
      // Predicated region
      $region25: #{identical_block.5} parent=23 // pred_check
        %p155 = pneg %p30
      $region26: #{identical_block.5} parent=23 // pred_check_branch
        %157 = sbr.rel (%p155) target = $region28
      $region27: #{identical_block.5} parent=23 // pred_region
        %s158 = smul.u32 16, %s10
        %p159 = scmp.lt.s32.totalorder %s158, 63
        %s160 = scalar_select %p159, %s158, 63
        %s161 = smul.addr %s160, 8
        %s162 = scalar_lea.vmem %s0, %s161
        %s163 = smul.u32 16, %s10
      $region28: #{identical_block.5} parent=23 // pred_fallthru
        _
      // Predicated region
      $region29: #{identical_block.5} parent=23 // pred_check
        %p164 = pneg %p56
      $region30: #{identical_block.5} parent=23 // pred_check_branch
        %166 = sbr.rel (%p164) target = $region32
      $region31: #{identical_block.5} parent=23 // pred_region
        %s167 = smul.u32 16, %s10
        %p168 = scmp.lt.s32.totalorder %s167, 63
        %s169 = scalar_select %p168, %s167, 63
        %s170 = smul.addr %s169, 8
        %s171 = scalar_lea.vmem %s1, %s170
        %s172 = smul.u32 16, %s10
      $region32: #{identical_block.5} parent=23 // pred_fallthru
        _
    $region24: #{identical_block.5} parent=5 // pred_fallthru
      _
    %p173 = scmp.le.s32.totalorder 1, %s10
    %p174 = scmp.lt.s32.totalorder %s10, 5
    %p175 = pnand %p173, %p174
    %p176 = pneg %p175
    // Predicated region
    $region33: #{identical_block.5} parent=5 // pred_check
      _
    $region34: #{identical_block.5} parent=5 // pred_check_branch
      %178 = sbr.rel (%p175) target = $region36
    $region35: #{identical_block.5} parent=5 // pred_region
      %s179 = ssub.s32 %s10, 1
      %s180 = smul.u32 16, %s15
      %p181 = scmp.lt.s32.totalorder %s180, 63
      %s182 = scalar_select %p181, %s180, 63
      %s183 = smul.addr %s182, 8
      %s184 = scalar_lea.vmem %s0, %s183
      %p185 = pneg %p36
      %p186 = pneg %p33
      %s187 = smul.u32 16, %s15
      %p188 = scmp.lt.s32.totalorder %s187, 63
      %s189 = scalar_select %p188, %s187, 63
      %s190 = smul.addr %s189, 8
      %s191 = scalar_lea.vmem %s1, %s190
      %p192 = pneg %p62
      %p193 = pneg %p59
      %p194 = pneg %p83
      %p195 = pneg %p80
      %p196 = pneg %p104
      %p197 = pneg %p101
      %p198 = pneg %p130
      %p199 = pneg %p127
      %s200 = smul.u32 16, %s15
      %p201 = scmp.lt.s32.totalorder %s200, 63
      %s202 = scalar_select %p201, %s200, 63
      %s203 = smul.addr %s202, 8
      %s204 = scalar_lea.vmem %s4, %s203
      %s205 = smul.u32 16, %s15
      %p206 = scmp.lt.s32.totalorder %s205, 63
      %s207 = scalar_select %p206, %s205, 63
      %s208 = smul.addr %s207, 8
      %s209 = scalar_lea.vmem %s0, %s208
      %s210 = smul.u32 16, %s15
      %s211 = smul.u32 16, %s15
      %p212 = scmp.lt.s32.totalorder %s211, 63
      %s213 = scalar_select %p212, %s211, 63
      %s214 = smul.addr %s213, 8
      %s215 = scalar_lea.vmem %s1, %s214
      %s216 = smul.u32 16, %s15
      %s217 = smul.u32 16, %s15
      %p218 = scmp.lt.s32.totalorder %s217, 63
      %s219 = scalar_select %p218, %s217, 63
      %s220 = smul.addr %s219, 8
      %s221 = scalar_lea.vmem %s4, %s220
      %s222 = smul.u32 16, %s15
      %v223 = vld [vmem:[%s209] sm:$0xff]
      %v224 = vld [vmem:[%s209 + $0x8] sm:$0xff]
      %v225 = vld [vmem:[%s209 + $0x10] sm:$0xff]
      %v226 = vld [vmem:[%s209 + $0x18] sm:$0xff]
      %v227 = vld [vmem:[%s209 + $0x20] sm:$0xff]
      %v228 = vld [vmem:[%s209 + $0x28] sm:$0xff]
      %v229 = vld [vmem:[%s209 + $0x30] sm:$0xff]
      %v230 = vld [vmem:[%s209 + $0x38] sm:$0xff]
      %v231 = vld [vmem:[%s209 + $0x40] sm:$0xff]
      %v232 = vld [vmem:[%s209 + $0x48] sm:$0xff]
      %v233 = vld [vmem:[%s209 + $0x50] sm:$0xff]
      %v234 = vld [vmem:[%s209 + $0x58] sm:$0xff]
      %v235 = vld [vmem:[%s209 + $0x60] sm:$0xff]
      %v236 = vld [vmem:[%s209 + $0x68] sm:$0xff]
      %v237 = vld [vmem:[%s209 + $0x70] sm:$0xff]
      %v238 = vld [vmem:[%s209 + $0x78] sm:$0xff]
      %v239 = vld [vmem:[%s2] sm:$0xff]
      %v240 = vld [vmem:[%s3] sm:$0x1]
      %v242 = vlaneseq
      %v243 = vshrl.u32 %v242, 7
      %v244 = vsub.s32 0, %v243
      %v245 = vrot.slane %v240, %v244
      %vm247 = vcmask 64512
      %v249 = vsel %vm247, %v223, 0
      %v252 = vsel %vm247, %v224, 0
      %v255 = vsel %vm247, %v225, 0
      %v258 = vsel %vm247, %v226, 0
      %v261 = vsel %vm247, %v227, 0
      %v264 = vsel %vm247, %v228, 0
      %v267 = vsel %vm247, %v229, 0
      %v270 = vsel %vm247, %v230, 0
      %v273 = vsel %vm247, %v231, 0
      %v276 = vsel %vm247, %v232, 0
      %v279 = vsel %vm247, %v233, 0
      %v282 = vsel %vm247, %v234, 0
      %v285 = vsel %vm247, %v235, 0
      %v288 = vsel %vm247, %v236, 0
      %v291 = vsel %vm247, %v237, 0
      %v294 = vsel %vm247, %v238, 0
      %296 = vmatprep.subr.mxu0 0.0
      %297 = vmatpush1.msra.mxu0 %v239
      %298 = vmatprep.subr.mxu0 0.0
      %299 = vmatpush1.msra.mxu0 0.0
      %300 = vmatprep.subr.mxu0 0.0
      %301 = vmatpush1.msra.mxu0 0.0
      %302 = vmatprep.subr.mxu0 0.0
      %303 = vmatpush1.msra.mxu0 0.0
      %304 = vmatprep.subr.mxu0 0.0
      %305 = vmatpush1.msra.mxu0 0.0
      %306 = vmatprep.subr.mxu0 0.0
      %307 = vmatpush1.msra.mxu0 0.0
      %308 = vmatprep.subr.mxu0 0.0
      %309 = vmatpush1.msra.mxu0 0.0
      %310 = vmatprep.subr.mxu0 0.0
      %311 = vmatpush1.msra.mxu0 0.0
      %312 = vmatprep.subr.mxu0 0.0
      %313 = vmatpush1.msra.mxu0 0.0
      %314 = vmatprep.subr.mxu0 0.0
      %315 = vmatpush1.msra.mxu0 0.0
      %316 = vmatprep.subr.mxu0 0.0
      %317 = vmatpush1.msra.mxu0 0.0
      %318 = vmatprep.subr.mxu0 0.0
      %319 = vmatpush1.msra.mxu0 0.0
      %320 = vmatprep.subr.mxu0 0.0
      %321 = vmatpush1.msra.mxu0 0.0
      %322 = vmatprep.subr.mxu0 0.0
      %323 = vmatpush1.msra.mxu0 0.0
      %324 = vmatprep.subr.mxu0 0.0
      %325 = vmatpush1.msra.mxu0 0.0
      %326 = vmatprep.subr.mxu0 0.0
      %327 = vmatpush1.msra.mxu0 0.0
      %328 = vmatprep.subr.mxu0 0.0
      %329 = vmatpush1.msra.mxu0 0.0
      %330 = vmatprep.subr.mxu0 0.0
      %331 = vmatpush1.msra.mxu0 0.0
      %332 = vmatprep.subr.mxu0 0.0
      %333 = vmatpush1.msra.mxu0 0.0
      %334 = vmatprep.subr.mxu0 0.0
      %335 = vmatpush1.msra.mxu0 0.0
      %336 = vmatprep.subr.mxu0 0.0
      %337 = vmatpush1.msra.mxu0 0.0
      %338 = vmatprep.subr.mxu0 0.0
      %339 = vmatpush1.msra.mxu0 0.0
      %340 = vmatprep.subr.mxu0 0.0
      %341 = vmatpush1.msra.mxu0 0.0
      %342 = vmatprep.subr.mxu0 0.0
      %343 = vmatpush1.msra.mxu0 0.0
      %344 = vmatprep.subr.mxu0 0.0
      %345 = vmatpush1.msra.mxu0 0.0
      %346 = vmatprep.subr.mxu0 0.0
      %347 = vmatpush1.msra.mxu0 0.0
      %348 = vmatprep.subr.mxu0 0.0
      %349 = vmatpush1.msra.mxu0 0.0
      %350 = vmatprep.subr.mxu0 0.0
      %351 = vmatpush1.msra.mxu0 0.0
      %352 = vmatprep.subr.mxu0 0.0
      %353 = vmatpush1.msra.mxu0 0.0
      %354 = vmatprep.subr.mxu0 0.0
      %355 = vmatpush1.msra.mxu0 0.0
      %356 = vmatprep.subr.mxu0 0.0
      %357 = vmatpush1.msra.mxu0 0.0
      %358 = vmatprep.subr.mxu0 0.0
      %359 = vmatpush1.msra.mxu0 0.0
      %360 = vmatprep.mubr.f32.mxu0 0.0
      %361 = vmatmul.mubr.f32.gmra.mrb[0].mxu0 %v249
      %v362 = vpop.f32.mrb[0].mxu0
      %v363 = vadd.f32 %v245, %v362
      %v364 = vpop.f32.mrb[0].mxu0
      %365 = vmatprep.mubr.f32.mxu0 0.0
      %366 = vmatmul.mubr.f32.gmra.mrb[0].mxu0 %v252
      %v367 = vpop.f32.mrb[0].mxu0
      %v368 = vadd.f32 %v245, %v367
      %v369 = vpop.f32.mrb[0].mxu0
      %370 = vmatprep.mubr.f32.mxu0 0.0
      %371 = vmatmul.mubr.f32.gmra.mrb[0].mxu0 %v255
      %v372 = vpop.f32.mrb[0].mxu0
      %v373 = vadd.f32 %v245, %v372
      %v374 = vpop.f32.mrb[0].mxu0
      %375 = vmatprep.mubr.f32.mxu0 0.0
      %376 = vmatmul.mubr.f32.gmra.mrb[0].mxu0 %v258
      %v377 = vpop.f32.mrb[0].mxu0
      %v378 = vadd.f32 %v245, %v377
      %v379 = vpop.f32.mrb[0].mxu0
      %380 = vmatprep.mubr.f32.mxu0 0.0
      %381 = vmatmul.mubr.f32.gmra.mrb[0].mxu0 %v261
      %v382 = vpop.f32.mrb[0].mxu0
      %v383 = vadd.f32 %v245, %v382
      %v384 = vpop.f32.mrb[0].mxu0
      %385 = vmatprep.mubr.f32.mxu0 0.0
      %386 = vmatmul.mubr.f32.gmra.mrb[0].mxu0 %v264
      %v387 = vpop.f32.mrb[0].mxu0
      %v388 = vadd.f32 %v245, %v387
      %v389 = vpop.f32.mrb[0].mxu0
      %390 = vmatprep.mubr.f32.mxu0 0.0
      %391 = vmatmul.mubr.f32.gmra.mrb[0].mxu0 %v267
      %v392 = vpop.f32.mrb[0].mxu0
      %v393 = vadd.f32 %v245, %v392
      %v394 = vpop.f32.mrb[0].mxu0
      %395 = vmatprep.mubr.f32.mxu0 0.0
      %396 = vmatmul.mubr.f32.gmra.mrb[0].mxu0 %v270
      %v397 = vpop.f32.mrb[0].mxu0
      %v398 = vadd.f32 %v245, %v397
      %v399 = vpop.f32.mrb[0].mxu0
      %400 = vmatprep.mubr.f32.mxu0 0.0
      %401 = vmatmul.mubr.f32.gmra.mrb[0].mxu0 %v273
      %v402 = vpop.f32.mrb[0].mxu0
      %v403 = vadd.f32 %v245, %v402
      %v404 = vpop.f32.mrb[0].mxu0
      %405 = vmatprep.mubr.f32.mxu0 0.0
      %406 = vmatmul.mubr.f32.gmra.mrb[0].mxu0 %v276
      %v407 = vpop.f32.mrb[0].mxu0
      %v408 = vadd.f32 %v245, %v407
      %v409 = vpop.f32.mrb[0].mxu0
      %410 = vmatprep.mubr.f32.mxu0 0.0
      %411 = vmatmul.mubr.f32.gmra.mrb[0].mxu0 %v279
      %v412 = vpop.f32.mrb[0].mxu0
      %v413 = vadd.f32 %v245, %v412
      %v414 = vpop.f32.mrb[0].mxu0
      %415 = vmatprep.mubr.f32.mxu0 0.0
      %416 = vmatmul.mubr.f32.gmra.mrb[0].mxu0 %v282
      %v417 = vpop.f32.mrb[0].mxu0
      %v418 = vadd.f32 %v245, %v417
      %v419 = vpop.f32.mrb[0].mxu0
      %420 = vmatprep.mubr.f32.mxu0 0.0
      %421 = vmatmul.mubr.f32.gmra.mrb[0].mxu0 %v285
      %v422 = vpop.f32.mrb[0].mxu0
      %v423 = vadd.f32 %v245, %v422
      %v424 = vpop.f32.mrb[0].mxu0
      %425 = vmatprep.mubr.f32.mxu0 0.0
      %426 = vmatmul.mubr.f32.gmra.mrb[0].mxu0 %v288
      %v427 = vpop.f32.mrb[0].mxu0
      %v428 = vadd.f32 %v245, %v427
      %v429 = vpop.f32.mrb[0].mxu0
      %430 = vmatprep.mubr.f32.mxu0 0.0
      %431 = vmatmul.mubr.f32.gmra.mrb[0].mxu0 %v291
      %v432 = vpop.f32.mrb[0].mxu0
      %v433 = vadd.f32 %v245, %v432
      %v434 = vpop.f32.mrb[0].mxu0
      %435 = vmatprep.mubr.f32.mxu0 0.0
      %436 = vmatmul.mubr.f32.gmra.mrb[0].mxu0 %v294
      %v437 = vpop.f32.mrb[0].mxu0
      %v438 = vadd.f32 %v245, %v437
      %v439 = vpop.f32.mrb[0].mxu0
      %440 = vdwg.mxu0
      %v441 = vld [vmem:[%s215] sm:$0xff]
      %v442 = vld [vmem:[%s215 + $0x8] sm:$0xff]
      %v443 = vld [vmem:[%s215 + $0x10] sm:$0xff]
      %v444 = vld [vmem:[%s215 + $0x18] sm:$0xff]
      %v445 = vld [vmem:[%s215 + $0x20] sm:$0xff]
      %v446 = vld [vmem:[%s215 + $0x28] sm:$0xff]
      %v447 = vld [vmem:[%s215 + $0x30] sm:$0xff]
      %v448 = vld [vmem:[%s215 + $0x38] sm:$0xff]
      %v449 = vld [vmem:[%s215 + $0x40] sm:$0xff]
      %v450 = vld [vmem:[%s215 + $0x48] sm:$0xff]
      %v451 = vld [vmem:[%s215 + $0x50] sm:$0xff]
      %v452 = vld [vmem:[%s215 + $0x58] sm:$0xff]
      %v453 = vld [vmem:[%s215 + $0x60] sm:$0xff]
      %v454 = vld [vmem:[%s215 + $0x68] sm:$0xff]
      %v455 = vld [vmem:[%s215 + $0x70] sm:$0xff]
      %v456 = vld [vmem:[%s215 + $0x78] sm:$0xff]
      %v457 = vadd.f32 %v363, %v441
      %v458 = vadd.f32 %v368, %v442
      %v459 = vadd.f32 %v373, %v443
      %v460 = vadd.f32 %v378, %v444
      %v461 = vadd.f32 %v383, %v445
      %v462 = vadd.f32 %v388, %v446
      %v463 = vadd.f32 %v393, %v447
      %v464 = vadd.f32 %v398, %v448
      %v465 = vadd.f32 %v403, %v449
      %v466 = vadd.f32 %v408, %v450
      %v467 = vadd.f32 %v413, %v451
      %v468 = vadd.f32 %v418, %v452
      %v469 = vadd.f32 %v423, %v453
      %v470 = vadd.f32 %v428, %v454
      %v471 = vadd.f32 %v433, %v455
      %v472 = vadd.f32 %v438, %v456
      %vm473 = vcmask 31744
      %474 = vst.msk [vmem:[%s221] sm:$0xff] %vm473, %v457
      %475 = vst.msk [vmem:[%s221 + $0x8] sm:$0xff] %vm473, %v458
      %476 = vst.msk [vmem:[%s221 + $0x10] sm:$0xff] %vm473, %v459
      %477 = vst.msk [vmem:[%s221 + $0x18] sm:$0xff] %vm473, %v460
      %478 = vst.msk [vmem:[%s221 + $0x20] sm:$0xff] %vm473, %v461
      %479 = vst.msk [vmem:[%s221 + $0x28] sm:$0xff] %vm473, %v462
      %480 = vst.msk [vmem:[%s221 + $0x30] sm:$0xff] %vm473, %v463
      %481 = vst.msk [vmem:[%s221 + $0x38] sm:$0xff] %vm473, %v464
      %482 = vst.msk [vmem:[%s221 + $0x40] sm:$0xff] %vm473, %v465
      %483 = vst.msk [vmem:[%s221 + $0x48] sm:$0xff] %vm473, %v466
      %484 = vst.msk [vmem:[%s221 + $0x50] sm:$0xff] %vm473, %v467
      %485 = vst.msk [vmem:[%s221 + $0x58] sm:$0xff] %vm473, %v468
      %486 = vst.msk [vmem:[%s221 + $0x60] sm:$0xff] %vm473, %v469
      %487 = vst.msk [vmem:[%s221 + $0x68] sm:$0xff] %vm473, %v470
      %488 = vst.msk [vmem:[%s221 + $0x70] sm:$0xff] %vm473, %v471
      %489 = vst.msk [vmem:[%s221 + $0x78] sm:$0xff] %vm473, %v472
      %s490 = smul.u32 16, %s15
      %p491 = scmp.lt.s32.totalorder %s490, 63
      %s492 = scalar_select %p491, %s490, 63
      %s493 = smul.addr %s492, 8
      %s494 = scalar_lea.vmem %s4, %s493
      // Predicated region
      $region37: #{identical_block.5} parent=35 // pred_check
        %p495 = pneg %p127
      $region38: #{identical_block.5} parent=35 // pred_check_branch
        %497 = sbr.rel (%p495) target = $region40
      $region39: #{identical_block.5} parent=35 // pred_region
        %s498 = smul.u32 16, %s15
      $region40: #{identical_block.5} parent=35 // pred_fallthru
        _
    $region36: #{identical_block.5} parent=5 // pred_fallthru
      _
    %p499 = scmp.le.s32.totalorder 2, %s10
    // Predicated region
    $region41: #{identical_block.5} parent=5 // pred_check
      %p500 = pneg %p499
    $region42: #{identical_block.5} parent=5 // pred_check_branch
      %502 = sbr.rel (%p500) target = $region44
    $region43: #{identical_block.5} parent=5 // pred_region
      %s503 = ssub.s32 %s10, 2
      // Predicated region
      $region45: #{identical_block.5} parent=43 // pred_check
        %p504 = pneg %p133
      $region46: #{identical_block.5} parent=43 // pred_check_branch
        %506 = sbr.rel (%p504) target = $region48
      $region47: #{identical_block.5} parent=43 // pred_region
        %s507 = smul.u32 16, %s16
        %p508 = scmp.lt.s32.totalorder %s507, 63
        %s509 = scalar_select %p508, %s507, 63
        %s510 = smul.addr %s509, 8
        %s511 = scalar_lea.vmem %s4, %s510
      $region48: #{identical_block.5} parent=43 // pred_fallthru
        _
    $region44: #{identical_block.5} parent=5 // pred_fallthru
      _
  $region6: #{identical_block.5} parent=0 // loop_footer
    %s14 = sadd.s32 1, %s10
  $region7: #{identical_block.5} parent=0 // loop_footer_branch
    %9 = sbr.rel target = $region3
  $region8: #{identical_block.5} parent=0 // loop_exit
    _

// kernel: identical_block.4
$region0: #{identical_block.4}
  #allocation0 [shape = 'u32[]', space=smem, size = 0x4, offset = 0x4, fixed_abs, tag = 'smem constant byte address 0x4 - core index']
  #allocation1 [shape = 'u32[144,128]{1,0:T(1,128)}', space=vmem, size = 0x12000, scoped, tag = 'internal scratch']
  %s0 = inlined_call_operand.vmem [shape: f32[2,16,16,8], index: 0, kind: input, shape index: {}]
  %s1 = inlined_call_operand.vmem [shape: f32[1,8], index: 1, kind: input, shape index: {}]
  %s2 = inlined_call_operand.vmem [shape: f32[1,8], index: 2, kind: input, shape index: {}]
  %s3 = inlined_call_operand.vmem [shape: f32[24,24], index: 3, kind: input, shape index: {}]
  %s4 = inlined_call_operand.vmem [shape: f32[2,16,16,8], index: 4, kind: output, shape index: {0}]
  %s5 = inlined_call_operand.vmem [shape: f32[2,1,8], index: 5, kind: output, shape index: {1}]
  %s6 = inlined_call_operand.vmem [shape: f32[2,8,8], index: 6, kind: output, shape index: {2}]
  %7 = xla_tuple %s4, %s5, %s6
  %s8 = sld [smem:[#allocation0]]
  $region65: #{identical_block.4} parent=0
    _
  %s10 = ssub.s32 1, %s8
  %s11 = scalar_select 0, %s10, %s8
  loop: start=0, step=1, limit=4
  $region2: #{identical_block.4} parent=0 // loop_pre_header
    _
  $region3: #{identical_block.4} parent=0 // loop_header
    %s13 = sphi 0, %s17
    %p14 = scmp.ge.s32.totalorder %s13, 4
    %s23 = sphi 0, %s25
    %s26 = sphi 0, %s23
    %s27 = sphi 0, %s26
    %s43 = sphi 0, %s27
    %s47 = sphi 0, %s47
    %s49 = sphi 0, %s47
    %s50 = sphi 0, %s49
    %s64 = sphi 0, %s50
    %s68 = sphi 0, %s68
    %s70 = sphi 0, %s68
    %s71 = sphi 0, %s70
    %s85 = sphi 0, %s71
    %s89 = sphi 0, %s89
    %s91 = sphi 0, %s89
    %s92 = sphi 0, %s91
    %s106 = sphi 0, %s92
    %s112 = sphi 0, %s114
    %s115 = sphi 0, %s112
    %s116 = sphi 0, %s115
    %s132 = sphi 0, %s116
    %s138 = sphi 0, %s140
    %s141 = sphi 0, %s138
    %s142 = sphi 0, %s141
    %s158 = sphi 0, %s142
    %s164 = sphi 0, %s166
    %s167 = sphi 0, %s164
    %s168 = sphi 0, %s167
    %s184 = sphi 0, %s168
  $region4: #{identical_block.4} parent=0 // loop_header_branch
    %16 = sbr.rel (%p14) target = $region8
  $region5: #{identical_block.4} parent=0 // loop_body
    %s18 = ssub.s32 %s13, 1
    %s19 = ssub.s32 %s13, 2
    %s20 = sadd.s32 %s13, 1
    %s21 = ssub.s32 %s13, %s20
    %p22 = scmp.eq.s32.totalorder %s21, 0
    %s24 = sadd.s32 %s23, 1
    %s25 = scalar_select %p22, %s23, %s24
    %p28 = pneg %p22
    %p29 = scmp.eq.s32.totalorder %s13, 1
    %p30 = por %p28, %p29
    %p31 = scmp.ne.s32.totalorder %s23, %s26
    %p32 = scmp.eq.s32.totalorder %s13, 0
    %p33 = por %p31, %p32
    %p34 = scmp.ne.s32.totalorder %s23, %s26
    %p35 = scmp.eq.s32.totalorder %s18, 1
    %p36 = por %p34, %p35
    %p37 = scmp.ne.s32.totalorder %s26, %s27
    %p38 = scmp.eq.s32.totalorder %s18, 0
    %p39 = por %p37, %p38
    %p40 = scmp.ne.s32.totalorder %s26, %s27
    %p41 = scmp.eq.s32.totalorder %s19, 1
    %p42 = por %p40, %p41
    %p44 = scmp.ne.s32.totalorder %s27, %s43
    %p45 = scmp.eq.s32.totalorder %s19, 0
    %p46 = por %p44, %p45
    %s48 = sadd.s32 %s47, 1
    %p51 = scmp.eq.s32.totalorder %s13, 1
    %p52 = scmp.ne.s32.totalorder %s47, %s49
    %p53 = scmp.eq.s32.totalorder %s13, 0
    %p54 = por %p52, %p53
    %p55 = scmp.ne.s32.totalorder %s47, %s49
    %p56 = scmp.eq.s32.totalorder %s18, 1
    %p57 = por %p55, %p56
    %p58 = scmp.ne.s32.totalorder %s49, %s50
    %p59 = scmp.eq.s32.totalorder %s18, 0
    %p60 = por %p58, %p59
    %p61 = scmp.ne.s32.totalorder %s49, %s50
    %p62 = scmp.eq.s32.totalorder %s19, 1
    %p63 = por %p61, %p62
    %p65 = scmp.ne.s32.totalorder %s50, %s64
    %p66 = scmp.eq.s32.totalorder %s19, 0
    %p67 = por %p65, %p66
    %s69 = sadd.s32 %s68, 1
    %p72 = scmp.eq.s32.totalorder %s13, 1
    %p73 = scmp.ne.s32.totalorder %s68, %s70
    %p74 = scmp.eq.s32.totalorder %s13, 0
    %p75 = por %p73, %p74
    %p76 = scmp.ne.s32.totalorder %s68, %s70
    %p77 = scmp.eq.s32.totalorder %s18, 1
    %p78 = por %p76, %p77
    %p79 = scmp.ne.s32.totalorder %s70, %s71
    %p80 = scmp.eq.s32.totalorder %s18, 0
    %p81 = por %p79, %p80
    %p82 = scmp.ne.s32.totalorder %s70, %s71
    %p83 = scmp.eq.s32.totalorder %s19, 1
    %p84 = por %p82, %p83
    %p86 = scmp.ne.s32.totalorder %s71, %s85
    %p87 = scmp.eq.s32.totalorder %s19, 0
    %p88 = por %p86, %p87
    %s90 = sadd.s32 %s89, 1
    %p93 = scmp.eq.s32.totalorder %s13, 1
    %p94 = scmp.ne.s32.totalorder %s89, %s91
    %p95 = scmp.eq.s32.totalorder %s13, 0
    %p96 = por %p94, %p95
    %p97 = scmp.ne.s32.totalorder %s89, %s91
    %p98 = scmp.eq.s32.totalorder %s18, 1
    %p99 = por %p97, %p98
    %p100 = scmp.ne.s32.totalorder %s91, %s92
    %p101 = scmp.eq.s32.totalorder %s18, 0
    %p102 = por %p100, %p101
    %p103 = scmp.ne.s32.totalorder %s91, %s92
    %p104 = scmp.eq.s32.totalorder %s19, 1
    %p105 = por %p103, %p104
    %p107 = scmp.ne.s32.totalorder %s92, %s106
    %p108 = scmp.eq.s32.totalorder %s19, 0
    %p109 = por %p107, %p108
    %s110 = ssub.s32 %s13, %s20
    %p111 = scmp.eq.s32.totalorder %s110, 0
    %s113 = sadd.s32 %s112, 1
    %s114 = scalar_select %p111, %s112, %s113
    %p117 = pneg %p111
    %p118 = scmp.eq.s32.totalorder %s13, 1
    %p119 = por %p117, %p118
    %p120 = scmp.ne.s32.totalorder %s112, %s115
    %p121 = scmp.eq.s32.totalorder %s13, 0
    %p122 = por %p120, %p121
    %p123 = scmp.ne.s32.totalorder %s112, %s115
    %p124 = scmp.eq.s32.totalorder %s18, 1
    %p125 = por %p123, %p124
    %p126 = scmp.ne.s32.totalorder %s115, %s116
    %p127 = scmp.eq.s32.totalorder %s18, 0
    %p128 = por %p126, %p127
    %p129 = scmp.ne.s32.totalorder %s115, %s116
    %p130 = scmp.eq.s32.totalorder %s19, 1
    %p131 = por %p129, %p130
    %p133 = scmp.ne.s32.totalorder %s116, %s132
    %p134 = scmp.eq.s32.totalorder %s19, 0
    %p135 = por %p133, %p134
    %s136 = ssub.s32 %s13, %s20
    %p137 = scmp.eq.s32.totalorder %s136, 0
    %s139 = sadd.s32 %s138, 1
    %s140 = scalar_select %p137, %s138, %s139
    %p143 = pneg %p137
    %p144 = scmp.eq.s32.totalorder %s13, 1
    %p145 = por %p143, %p144
    %p146 = scmp.ne.s32.totalorder %s138, %s141
    %p147 = scmp.eq.s32.totalorder %s13, 0
    %p148 = por %p146, %p147
    %p149 = scmp.ne.s32.totalorder %s138, %s141
    %p150 = scmp.eq.s32.totalorder %s18, 1
    %p151 = por %p149, %p150
    %p152 = scmp.ne.s32.totalorder %s141, %s142
    %p153 = scmp.eq.s32.totalorder %s18, 0
    %p154 = por %p152, %p153
    %p155 = scmp.ne.s32.totalorder %s141, %s142
    %p156 = scmp.eq.s32.totalorder %s19, 1
    %p157 = por %p155, %p156
    %p159 = scmp.ne.s32.totalorder %s142, %s158
    %p160 = scmp.eq.s32.totalorder %s19, 0
    %p161 = por %p159, %p160
    %s162 = ssub.s32 %s13, %s20
    %p163 = scmp.eq.s32.totalorder %s162, 0
    %s165 = sadd.s32 %s164, 1
    %s166 = scalar_select %p163, %s164, %s165
    %p169 = pneg %p163
    %p170 = scmp.eq.s32.totalorder %s13, 1
    %p171 = por %p169, %p170
    %p172 = scmp.ne.s32.totalorder %s164, %s167
    %p173 = scmp.eq.s32.totalorder %s13, 0
    %p174 = por %p172, %p173
    %p175 = scmp.ne.s32.totalorder %s164, %s167
    %p176 = scmp.eq.s32.totalorder %s18, 1
    %p177 = por %p175, %p176
    %p178 = scmp.ne.s32.totalorder %s167, %s168
    %p179 = scmp.eq.s32.totalorder %s18, 0
    %p180 = por %p178, %p179
    %p181 = scmp.ne.s32.totalorder %s167, %s168
    %p182 = scmp.eq.s32.totalorder %s19, 1
    %p183 = por %p181, %p182
    %p185 = scmp.ne.s32.totalorder %s168, %s184
    %p186 = scmp.eq.s32.totalorder %s19, 0
    %p187 = por %p185, %p186
    %p188 = scmp.le.s32.totalorder 1, %s13
    %p189 = scmp.lt.s32.totalorder %s13, 3
    %p190 = pnand %p188, %p189
    %p191 = pneg %p190
    // Predicated region
    $region9: #{identical_block.4} parent=5 // pred_check
      _
    $region10: #{identical_block.4} parent=5 // pred_check_branch
      %193 = sbr.rel (%p190) target = $region12
    $region11: #{identical_block.4} parent=5 // pred_region
      %s194 = ssub.s32 %s13, 1
      // Predicated region
      $region13: #{identical_block.4} parent=11 // pred_check
        %p195 = pneg %p60
      $region14: #{identical_block.4} parent=11 // pred_check_branch
        %197 = sbr.rel (%p195) target = $region16
      $region15: #{identical_block.4} parent=11 // pred_region
        _
      $region16: #{identical_block.4} parent=11 // pred_fallthru
        _
      // Predicated region
      $region17: #{identical_block.4} parent=11 // pred_check
        %p198 = pneg %p81
      $region18: #{identical_block.4} parent=11 // pred_check_branch
        %200 = sbr.rel (%p198) target = $region20
      $region19: #{identical_block.4} parent=11 // pred_region
        _
      $region20: #{identical_block.4} parent=11 // pred_fallthru
        _
      // Predicated region
      $region21: #{identical_block.4} parent=11 // pred_check
        %p201 = pneg %p102
      $region22: #{identical_block.4} parent=11 // pred_check_branch
        %203 = sbr.rel (%p201) target = $region24
      $region23: #{identical_block.4} parent=11 // pred_region
        _
      $region24: #{identical_block.4} parent=11 // pred_fallthru
        _
    $region12: #{identical_block.4} parent=5 // pred_fallthru
      _
    %p204 = scmp.lt.s32.totalorder %s13, 2
    // Predicated region
    $region25: #{identical_block.4} parent=5 // pred_check
      %p205 = pneg %p204
    $region26: #{identical_block.4} parent=5 // pred_check_branch
      %207 = sbr.rel (%p205) target = $region28
    $region27: #{identical_block.4} parent=5 // pred_region
      // Predicated region
      $region29: #{identical_block.4} parent=27 // pred_check
        %p208 = pneg %p33
      $region30: #{identical_block.4} parent=27 // pred_check_branch
        %210 = sbr.rel (%p208) target = $region32
      $region31: #{identical_block.4} parent=27 // pred_region
        %p211 = scmp.lt.s32.totalorder %s13, 1
        %s212 = scalar_select %p211, %s13, 1
        %s213 = smul.addr %s212, 32
        %s214 = smul.addr %s213, 8
        %s215 = scalar_lea.vmem %s0, %s214
      $region32: #{identical_block.4} parent=27 // pred_fallthru
        _
    $region28: #{identical_block.4} parent=5 // pred_fallthru
      _
    %p216 = scmp.le.s32.totalorder 1, %s13
    %p217 = scmp.lt.s32.totalorder %s13, 3
    %p218 = pnand %p216, %p217
    %p219 = pneg %p218
    // Predicated region
    $region33: #{identical_block.4} parent=5 // pred_check
      _
    $region34: #{identical_block.4} parent=5 // pred_check_branch
      %221 = sbr.rel (%p218) target = $region36
    $region35: #{identical_block.4} parent=5 // pred_region
      %s222 = ssub.s32 %s13, 1
      %p223 = scmp.lt.s32.totalorder %s18, 1
      %s224 = scalar_select %p223, %s18, 1
      %s225 = smul.addr %s224, 32
      %s226 = smul.addr %s225, 8
      %s227 = scalar_lea.vmem %s0, %s226
      %p228 = pneg %p39
      %p229 = pneg %p36
      %p230 = pneg %p60
      %p231 = pneg %p57
      %p232 = pneg %p81
      %p233 = pneg %p78
      %p234 = pneg %p102
      %p235 = pneg %p99
      %p236 = pneg %p128
      %p237 = pneg %p125
      %p238 = scmp.lt.s32.totalorder %s18, 1
      %s239 = scalar_select %p238, %s18, 1
      %s240 = smul.addr %s239, 32
      %s241 = smul.addr %s240, 8
      %s242 = scalar_lea.vmem %s4, %s241
      %p243 = pneg %p154
      %p244 = pneg %p151
      %p245 = scmp.lt.s32.totalorder %s18, 1
      %s246 = scalar_select %p245, %s18, 1
      %s247 = scalar_lea.vmem %s5, %s246
      %p248 = pneg %p180
      %p249 = pneg %p177
      %p250 = scmp.lt.s32.totalorder %s18, 1
      %s251 = scalar_select %p250, %s18, 1
      %s252 = smul.addr %s251, 8
      %s253 = scalar_lea.vmem %s6, %s252
      %p254 = scmp.lt.s32.totalorder %s18, 1
      %s255 = scalar_select %p254, %s18, 1
      %s256 = smul.addr %s255, 32
      %s257 = smul.addr %s256, 8
      %s258 = scalar_lea.vmem %s0, %s257
      %p259 = scmp.lt.s32.totalorder %s18, 1
      %s260 = scalar_select %p259, %s18, 1
      %s261 = smul.addr %s260, 32
      %s262 = smul.addr %s261, 8
      %s263 = scalar_lea.vmem %s4, %s262
      %p264 = scmp.lt.s32.totalorder %s18, 1
      %s265 = scalar_select %p264, %s18, 1
      %s266 = scalar_lea.vmem %s5, %s265
      %p267 = scmp.lt.s32.totalorder %s18, 1
      %s268 = scalar_select %p267, %s18, 1
      %s269 = smul.addr %s268, 8
      %s270 = scalar_lea.vmem %s6, %s269
      %v271 = vld [vmem:[%s258] sm:$0xff]
      %v272 = vld [vmem:[%s258 + $0x8] sm:$0xff]
      %v273 = vld [vmem:[%s258 + $0x10] sm:$0xff]
      %v274 = vld [vmem:[%s258 + $0x18] sm:$0xff]
      %v275 = vld [vmem:[%s258 + $0x20] sm:$0xff]
      %v276 = vld [vmem:[%s258 + $0x28] sm:$0xff]
      %v277 = vld [vmem:[%s258 + $0x30] sm:$0xff]
      %v278 = vld [vmem:[%s258 + $0x38] sm:$0xff]
      %v279 = vld [vmem:[%s258 + $0x40] sm:$0xff]
      %v280 = vld [vmem:[%s258 + $0x48] sm:$0xff]
      %v281 = vld [vmem:[%s258 + $0x50] sm:$0xff]
      %v282 = vld [vmem:[%s258 + $0x58] sm:$0xff]
      %v283 = vld [vmem:[%s258 + $0x60] sm:$0xff]
      %v284 = vld [vmem:[%s258 + $0x68] sm:$0xff]
      %v285 = vld [vmem:[%s258 + $0x70] sm:$0xff]
      %v286 = vld [vmem:[%s258 + $0x78] sm:$0xff]
      %v287 = vld [vmem:[%s258 + $0x80] sm:$0xff]
      %v288 = vld [vmem:[%s258 + $0x88] sm:$0xff]
      %v289 = vld [vmem:[%s258 + $0x90] sm:$0xff]
      %v290 = vld [vmem:[%s258 + $0x98] sm:$0xff]
      %v291 = vld [vmem:[%s258 + $0xa0] sm:$0xff]
      %v292 = vld [vmem:[%s258 + $0xa8] sm:$0xff]
      %v293 = vld [vmem:[%s258 + $0xb0] sm:$0xff]
      %v294 = vld [vmem:[%s258 + $0xb8] sm:$0xff]
      %v295 = vld [vmem:[%s258 + $0xc0] sm:$0xff]
      %v296 = vld [vmem:[%s258 + $0xc8] sm:$0xff]
      %v297 = vld [vmem:[%s258 + $0xd0] sm:$0xff]
      %v298 = vld [vmem:[%s258 + $0xd8] sm:$0xff]
      %v299 = vld [vmem:[%s258 + $0xe0] sm:$0xff]
      %v300 = vld [vmem:[%s258 + $0xe8] sm:$0xff]
      %v301 = vld [vmem:[%s258 + $0xf0] sm:$0xff]
      %v302 = vld [vmem:[%s258 + $0xf8] sm:$0xff]
      %v303 = vld [vmem:[%s1] sm:$0x1]
      %v305 = vlaneseq
      %v306 = vshrl.u32 %v305, 7
      %v307 = vsub.s32 0, %v306
      %v308 = vrot.slane %v303, %v307
      %v310 = vmul.f32 %v271, %v308
      %v311 = vmul.f32 %v272, %v308
      %v312 = vmul.f32 %v273, %v308
      %v313 = vmul.f32 %v274, %v308
      %v314 = vmul.f32 %v275, %v308
      %v315 = vmul.f32 %v276, %v308
      %v316 = vmul.f32 %v277, %v308
      %v317 = vmul.f32 %v278, %v308
      %v318 = vmul.f32 %v279, %v308
      %v319 = vmul.f32 %v280, %v308
      %v320 = vmul.f32 %v281, %v308
      %v321 = vmul.f32 %v282, %v308
      %v322 = vmul.f32 %v283, %v308
      %v323 = vmul.f32 %v284, %v308
      %v324 = vmul.f32 %v285, %v308
      %v325 = vmul.f32 %v286, %v308
      %v326 = vmul.f32 %v287, %v308
      %v327 = vmul.f32 %v288, %v308
      %v328 = vmul.f32 %v289, %v308
      %v329 = vmul.f32 %v290, %v308
      %v330 = vmul.f32 %v291, %v308
      %v331 = vmul.f32 %v292, %v308
      %v332 = vmul.f32 %v293, %v308
      %v333 = vmul.f32 %v294, %v308
      %v334 = vmul.f32 %v295, %v308
      %v335 = vmul.f32 %v296, %v308
      %v336 = vmul.f32 %v297, %v308
      %v337 = vmul.f32 %v298, %v308
      %v338 = vmul.f32 %v299, %v308
      %v339 = vmul.f32 %v300, %v308
      %v340 = vmul.f32 %v301, %v308
      %v341 = vmul.f32 %v302, %v308
      %v342 = vld [vmem:[%s2] sm:$0x1]
      %v344 = vlaneseq
      %v345 = vshrl.u32 %v344, 7
      %v346 = vsub.s32 0, %v345
      %v347 = vrot.slane %v342, %v346
      %v349 = vadd.f32 %v310, %v347
      %v350 = vadd.f32 %v311, %v347
      %v351 = vadd.f32 %v312, %v347
      %v352 = vadd.f32 %v313, %v347
      %v353 = vadd.f32 %v314, %v347
      %v354 = vadd.f32 %v315, %v347
      %v355 = vadd.f32 %v316, %v347
      %v356 = vadd.f32 %v317, %v347
      %v357 = vadd.f32 %v318, %v347
      %v358 = vadd.f32 %v319, %v347
      %v359 = vadd.f32 %v320, %v347
      %v360 = vadd.f32 %v321, %v347
      %v361 = vadd.f32 %v322, %v347
      %v362 = vadd.f32 %v323, %v347
      %v363 = vadd.f32 %v324, %v347
      %v364 = vadd.f32 %v325, %v347
      %v365 = vadd.f32 %v326, %v347
      %v366 = vadd.f32 %v327, %v347
      %v367 = vadd.f32 %v328, %v347
      %v368 = vadd.f32 %v329, %v347
      %v369 = vadd.f32 %v330, %v347
      %v370 = vadd.f32 %v331, %v347
      %v371 = vadd.f32 %v332, %v347
      %v372 = vadd.f32 %v333, %v347
      %v373 = vadd.f32 %v334, %v347
      %v374 = vadd.f32 %v335, %v347
      %v375 = vadd.f32 %v336, %v347
      %v376 = vadd.f32 %v337, %v347
      %v377 = vadd.f32 %v338, %v347
      %v378 = vadd.f32 %v339, %v347
      %v379 = vadd.f32 %v340, %v347
      %v380 = vadd.f32 %v341, %v347
      %v381 = vlaneseq
      %v382 = vshrl.u32 %v381, 7
      %v383 = vadd.s32 %v382, 8
      %vm384 = vcmp.eq.s32.totalorder %v382, 0
      %vm385 = vcmp.eq.s32.totalorder %v383, 0
      %v386 = vrot.slane %v349, 7
      %v387 = vrot.slane %v351, 7
      %v388 = vrot.slane %v353, 7
      %v389 = vrot.slane %v355, 7
      %v390 = vrot.slane %v357, 7
      %v391 = vrot.slane %v359, 7
      %v392 = vrot.slane %v361, 7
      %v393 = vrot.slane %v363, 7
      %v394 = vrot.slane %v365, 7
      %v395 = vrot.slane %v367, 7
      %v396 = vrot.slane %v369, 7
      %v397 = vrot.slane %v371, 7
      %v398 = vrot.slane %v373, 7
      %v399 = vrot.slane %v375, 7
      %v400 = vrot.slane %v377, 7
      %v401 = vrot.slane %v379, 7
      %v402 = vrot.slane %v350, 7
      %v403 = vrot.slane %v352, 7
      %v404 = vrot.slane %v354, 7
      %v405 = vrot.slane %v356, 7
      %v406 = vrot.slane %v358, 7
      %v407 = vrot.slane %v360, 7
      %v408 = vrot.slane %v362, 7
      %v409 = vrot.slane %v364, 7
      %v410 = vrot.slane %v366, 7
      %v411 = vrot.slane %v368, 7
      %v412 = vrot.slane %v370, 7
      %v413 = vrot.slane %v372, 7
      %v414 = vrot.slane %v374, 7
      %v415 = vrot.slane %v376, 7
      %v416 = vrot.slane %v378, 7
      %v417 = vrot.slane %v380, 7
      %vm418 = vcmp.lt.s32.totalorder %v382, 1
      %v419 = vsel %vm418, %v386, %v402
      %v420 = vsel %vm418, %v387, %v403
      %v421 = vsel %vm418, %v388, %v404
      %v422 = vsel %vm418, %v389, %v405
      %v423 = vsel %vm418, %v390, %v406
      %v424 = vsel %vm418, %v391, %v407
      %v425 = vsel %vm418, %v392, %v408
      %v426 = vsel %vm418, %v393, %v409
      %v427 = vsel %vm418, %v394, %v410
      %v428 = vsel %vm418, %v395, %v411
      %v429 = vsel %vm418, %v396, %v412
      %v430 = vsel %vm418, %v397, %v413
      %v431 = vsel %vm418, %v398, %v414
      %v432 = vsel %vm418, %v399, %v415
      %v433 = vsel %vm418, %v400, %v416
      %v434 = vsel %vm418, %v401, %v417
      %v435 = vsel %vm418, %v402, %v386
      %v436 = vsel %vm418, %v403, %v387
      %v437 = vsel %vm418, %v404, %v388
      %v438 = vsel %vm418, %v405, %v389
      %v439 = vsel %vm418, %v406, %v390
      %v440 = vsel %vm418, %v407, %v391
      %v441 = vsel %vm418, %v408, %v392
      %v442 = vsel %vm418, %v409, %v393
      %v443 = vsel %vm418, %v410, %v394
      %v444 = vsel %vm418, %v411, %v395
      %v445 = vsel %vm418, %v412, %v396
      %v446 = vsel %vm418, %v413, %v397
      %v447 = vsel %vm418, %v414, %v398
      %v448 = vsel %vm418, %v415, %v399
      %v449 = vsel %vm418, %v416, %v400
      %v450 = vsel %vm418, %v417, %v401
      %v451 = vsel %vm384, 0.0, %v435
      %v452 = vsel %vm385, 0.0, %v419
      %v453 = vsel %vm384, 0.0, %v436
      %v454 = vsel %vm385, 0.0, %v420
      %v455 = vsel %vm384, 0.0, %v437
      %v456 = vsel %vm385, 0.0, %v421
      %v457 = vsel %vm384, 0.0, %v438
      %v458 = vsel %vm385, 0.0, %v422
      %v459 = vsel %vm384, 0.0, %v439
      %v460 = vsel %vm385, 0.0, %v423
      %v461 = vsel %vm384, 0.0, %v440
      %v462 = vsel %vm385, 0.0, %v424
      %v463 = vsel %vm384, 0.0, %v441
      %v464 = vsel %vm385, 0.0, %v425
      %v465 = vsel %vm384, 0.0, %v442
      %v466 = vsel %vm385, 0.0, %v426
      %v467 = vsel %vm384, 0.0, %v443
      %v468 = vsel %vm385, 0.0, %v427
      %v469 = vsel %vm384, 0.0, %v444
      %v470 = vsel %vm385, 0.0, %v428
      %v471 = vsel %vm384, 0.0, %v445
      %v472 = vsel %vm385, 0.0, %v429
      %v473 = vsel %vm384, 0.0, %v446
      %v474 = vsel %vm385, 0.0, %v430
      %v475 = vsel %vm384, 0.0, %v447
      %v476 = vsel %vm385, 0.0, %v431
      %v477 = vsel %vm384, 0.0, %v448
      %v478 = vsel %vm385, 0.0, %v432
      %v479 = vsel %vm384, 0.0, %v449
      %v480 = vsel %vm385, 0.0, %v433
      %v481 = vsel %vm384, 0.0, %v450
      %v482 = vsel %vm385, 0.0, %v434
      %vm483 = vcmp.eq.s32.totalorder %v382, 15
      %vm484 = vcmp.eq.s32.totalorder %v383, 15
      %v485 = vrot.slane %v349, 1
      %v486 = vrot.slane %v351, 1
      %v487 = vrot.slane %v353, 1
      %v488 = vrot.slane %v355, 1
      %v489 = vrot.slane %v357, 1
      %v490 = vrot.slane %v359, 1
      %v491 = vrot.slane %v361, 1
      %v492 = vrot.slane %v363, 1
      %v493 = vrot.slane %v365, 1
      %v494 = vrot.slane %v367, 1
      %v495 = vrot.slane %v369, 1
      %v496 = vrot.slane %v371, 1
      %v497 = vrot.slane %v373, 1
      %v498 = vrot.slane %v375, 1
      %v499 = vrot.slane %v377, 1
      %v500 = vrot.slane %v379, 1
      %v501 = vrot.slane %v350, 1
      %v502 = vrot.slane %v352, 1
      %v503 = vrot.slane %v354, 1
      %v504 = vrot.slane %v356, 1
      %v505 = vrot.slane %v358, 1
      %v506 = vrot.slane %v360, 1
      %v507 = vrot.slane %v362, 1
      %v508 = vrot.slane %v364, 1
      %v509 = vrot.slane %v366, 1
      %v510 = vrot.slane %v368, 1
      %v511 = vrot.slane %v370, 1
      %v512 = vrot.slane %v372, 1
      %v513 = vrot.slane %v374, 1
      %v514 = vrot.slane %v376, 1
      %v515 = vrot.slane %v378, 1
      %v516 = vrot.slane %v380, 1
      %vm517 = vcmp.lt.s32.totalorder %v382, 7
      %v518 = vsel %vm517, %v485, %v501
      %v519 = vsel %vm517, %v486, %v502
      %v520 = vsel %vm517, %v487, %v503
      %v521 = vsel %vm517, %v488, %v504
      %v522 = vsel %vm517, %v489, %v505
      %v523 = vsel %vm517, %v490, %v506
      %v524 = vsel %vm517, %v491, %v507
      %v525 = vsel %vm517, %v492, %v508
      %v526 = vsel %vm517, %v493, %v509
      %v527 = vsel %vm517, %v494, %v510
      %v528 = vsel %vm517, %v495, %v511
      %v529 = vsel %vm517, %v496, %v512
      %v530 = vsel %vm517, %v497, %v513
      %v531 = vsel %vm517, %v498, %v514
      %v532 = vsel %vm517, %v499, %v515
      %v533 = vsel %vm517, %v500, %v516
      %v534 = vsel %vm517, %v501, %v485
      %v535 = vsel %vm517, %v502, %v486
      %v536 = vsel %vm517, %v503, %v487
      %v537 = vsel %vm517, %v504, %v488
      %v538 = vsel %vm517, %v505, %v489
      %v539 = vsel %vm517, %v506, %v490
      %v540 = vsel %vm517, %v507, %v491
      %v541 = vsel %vm517, %v508, %v492
      %v542 = vsel %vm517, %v509, %v493
      %v543 = vsel %vm517, %v510, %v494
      %v544 = vsel %vm517, %v511, %v495
      %v545 = vsel %vm517, %v512, %v496
      %v546 = vsel %vm517, %v513, %v497
      %v547 = vsel %vm517, %v514, %v498
      %v548 = vsel %vm517, %v515, %v499
      %v549 = vsel %vm517, %v516, %v500
      %v550 = vsel %vm483, 0.0, %v518
      %v551 = vsel %vm484, 0.0, %v534
      %v552 = vsel %vm483, 0.0, %v519
      %v553 = vsel %vm484, 0.0, %v535
      %v554 = vsel %vm483, 0.0, %v520
      %v555 = vsel %vm484, 0.0, %v536
      %v556 = vsel %vm483, 0.0, %v521
      %v557 = vsel %vm484, 0.0, %v537
      %v558 = vsel %vm483, 0.0, %v522
      %v559 = vsel %vm484, 0.0, %v538
      %v560 = vsel %vm483, 0.0, %v523
      %v561 = vsel %vm484, 0.0, %v539
      %v562 = vsel %vm483, 0.0, %v524
      %v563 = vsel %vm484, 0.0, %v540
      %v564 = vsel %vm483, 0.0, %v525
      %v565 = vsel %vm484, 0.0, %v541
      %v566 = vsel %vm483, 0.0, %v526
      %v567 = vsel %vm484, 0.0, %v542
      %v568 = vsel %vm483, 0.0, %v527
      %v569 = vsel %vm484, 0.0, %v543
      %v570 = vsel %vm483, 0.0, %v528
      %v571 = vsel %vm484, 0.0, %v544
      %v572 = vsel %vm483, 0.0, %v529
      %v573 = vsel %vm484, 0.0, %v545
      %v574 = vsel %vm483, 0.0, %v530
      %v575 = vsel %vm484, 0.0, %v546
      %v576 = vsel %vm483, 0.0, %v531
      %v577 = vsel %vm484, 0.0, %v547
      %v578 = vsel %vm483, 0.0, %v532
      %v579 = vsel %vm484, 0.0, %v548
      %v580 = vsel %vm483, 0.0, %v533
      %v581 = vsel %vm484, 0.0, %v549
      %614 = vrot.lane.b32.xlu0 %v349, 8
      %v615 = vpop.permute.xlu0 %614
      %616 = vrot.lane.b32.xlu0 %v350, 8
      %v617 = vpop.permute.xlu0 %616
      %618 = vrot.lane.b32.xlu0 %v351, 8
      %v619 = vpop.permute.xlu0 %618
      %620 = vrot.lane.b32.xlu0 %v352, 8
      %v621 = vpop.permute.xlu0 %620
      %622 = vrot.lane.b32.xlu0 %v353, 8
      %v623 = vpop.permute.xlu0 %622
      %624 = vrot.lane.b32.xlu0 %v354, 8
      %v625 = vpop.permute.xlu0 %624
      %626 = vrot.lane.b32.xlu0 %v355, 8
      %v627 = vpop.permute.xlu0 %626
      %628 = vrot.lane.b32.xlu0 %v356, 8
      %v629 = vpop.permute.xlu0 %628
      %630 = vrot.lane.b32.xlu0 %v357, 8
      %v631 = vpop.permute.xlu0 %630
      %632 = vrot.lane.b32.xlu0 %v358, 8
      %v633 = vpop.permute.xlu0 %632
      %634 = vrot.lane.b32.xlu0 %v359, 8
      %v635 = vpop.permute.xlu0 %634
      %636 = vrot.lane.b32.xlu0 %v360, 8
      %v637 = vpop.permute.xlu0 %636
      %638 = vrot.lane.b32.xlu0 %v361, 8
      %v639 = vpop.permute.xlu0 %638
      %640 = vrot.lane.b32.xlu0 %v362, 8
      %v641 = vpop.permute.xlu0 %640
      %642 = vrot.lane.b32.xlu0 %v363, 8
      %v643 = vpop.permute.xlu0 %642
      %644 = vrot.lane.b32.xlu0 %v364, 8
      %v645 = vpop.permute.xlu0 %644
      %646 = vrot.lane.b32.xlu0 %v365, 8
      %v647 = vpop.permute.xlu0 %646
      %648 = vrot.lane.b32.xlu0 %v366, 8
      %v649 = vpop.permute.xlu0 %648
      %650 = vrot.lane.b32.xlu0 %v367, 8
      %v651 = vpop.permute.xlu0 %650
      %652 = vrot.lane.b32.xlu0 %v368, 8
      %v653 = vpop.permute.xlu0 %652
      %654 = vrot.lane.b32.xlu0 %v369, 8
      %v655 = vpop.permute.xlu0 %654
      %656 = vrot.lane.b32.xlu0 %v370, 8
      %v657 = vpop.permute.xlu0 %656
      %658 = vrot.lane.b32.xlu0 %v371, 8
      %v659 = vpop.permute.xlu0 %658
      %660 = vrot.lane.b32.xlu0 %v372, 8
      %v661 = vpop.permute.xlu0 %660
      %662 = vrot.lane.b32.xlu0 %v373, 8
      %v663 = vpop.permute.xlu0 %662
      %664 = vrot.lane.b32.xlu0 %v374, 8
      %v665 = vpop.permute.xlu0 %664
      %666 = vrot.lane.b32.xlu0 %v375, 8
      %v667 = vpop.permute.xlu0 %666
      %668 = vrot.lane.b32.xlu0 %v376, 8
      %v669 = vpop.permute.xlu0 %668
      %670 = vrot.lane.b32.xlu0 %v377, 8
      %v671 = vpop.permute.xlu0 %670
      %672 = vrot.lane.b32.xlu0 %v378, 8
      %v673 = vpop.permute.xlu0 %672
      %674 = vrot.lane.b32.xlu0 %v379, 8
      %v675 = vpop.permute.xlu0 %674
      %676 = vrot.lane.b32.xlu0 %v380, 8
      %v677 = vpop.permute.xlu0 %676
      %742 = vrot.lane.b32.xlu0 %v550, 16
      %v743 = vpop.permute.xlu0 %742
      %744 = vrot.lane.b32.xlu0 %v551, 16
      %v745 = vpop.permute.xlu0 %744
      %746 = vrot.lane.b32.xlu0 %v552, 16
      %v747 = vpop.permute.xlu0 %746
      %748 = vrot.lane.b32.xlu0 %v553, 16
      %v749 = vpop.permute.xlu0 %748
      %750 = vrot.lane.b32.xlu0 %v554, 16
      %v751 = vpop.permute.xlu0 %750
      %752 = vrot.lane.b32.xlu0 %v555, 16
      %v753 = vpop.permute.xlu0 %752
      %754 = vrot.lane.b32.xlu0 %v556, 16
      %v755 = vpop.permute.xlu0 %754
      %756 = vrot.lane.b32.xlu0 %v557, 16
      %v757 = vpop.permute.xlu0 %756
      %758 = vrot.lane.b32.xlu0 %v558, 16
      %v759 = vpop.permute.xlu0 %758
      %760 = vrot.lane.b32.xlu0 %v559, 16
      %v761 = vpop.permute.xlu0 %760
      %762 = vrot.lane.b32.xlu0 %v560, 16
      %v763 = vpop.permute.xlu0 %762
      %764 = vrot.lane.b32.xlu0 %v561, 16
      %v765 = vpop.permute.xlu0 %764
      %766 = vrot.lane.b32.xlu0 %v562, 16
      %v767 = vpop.permute.xlu0 %766
      %768 = vrot.lane.b32.xlu0 %v563, 16
      %v769 = vpop.permute.xlu0 %768
      %770 = vrot.lane.b32.xlu0 %v564, 16
      %v771 = vpop.permute.xlu0 %770
      %772 = vrot.lane.b32.xlu0 %v565, 16
      %v773 = vpop.permute.xlu0 %772
      %774 = vrot.lane.b32.xlu0 %v566, 16
      %v775 = vpop.permute.xlu0 %774
      %776 = vrot.lane.b32.xlu0 %v567, 16
      %v777 = vpop.permute.xlu0 %776
      %778 = vrot.lane.b32.xlu0 %v568, 16
      %v779 = vpop.permute.xlu0 %778
      %780 = vrot.lane.b32.xlu0 %v569, 16
      %v781 = vpop.permute.xlu0 %780
      %782 = vrot.lane.b32.xlu0 %v570, 16
      %v783 = vpop.permute.xlu0 %782
      %784 = vrot.lane.b32.xlu0 %v571, 16
      %v785 = vpop.permute.xlu0 %784
      %786 = vrot.lane.b32.xlu0 %v572, 16
      %v787 = vpop.permute.xlu0 %786
      %788 = vrot.lane.b32.xlu0 %v573, 16
      %v789 = vpop.permute.xlu0 %788
      %790 = vrot.lane.b32.xlu0 %v574, 16
      %v791 = vpop.permute.xlu0 %790
      %792 = vrot.lane.b32.xlu0 %v575, 16
      %v793 = vpop.permute.xlu0 %792
      %794 = vrot.lane.b32.xlu0 %v576, 16
      %v795 = vpop.permute.xlu0 %794
      %796 = vrot.lane.b32.xlu0 %v577, 16
      %v797 = vpop.permute.xlu0 %796
      %798 = vrot.lane.b32.xlu0 %v578, 16
      %v799 = vpop.permute.xlu0 %798
      %800 = vrot.lane.b32.xlu0 %v579, 16
      %v801 = vpop.permute.xlu0 %800
      %802 = vrot.lane.b32.xlu0 %v580, 16
      %v803 = vpop.permute.xlu0 %802
      %804 = vrot.lane.b32.xlu0 %v581, 16
      %v805 = vpop.permute.xlu0 %804
      %vm838 = vcmask 64512
      %v839 = vsel %vm838, %v451, %v615
      %v840 = vsel %vm838, %v452, %v617
      %v841 = vsel %vm838, %v453, %v619
      %v842 = vsel %vm838, %v454, %v621
      %v843 = vsel %vm838, %v455, %v623
      %v844 = vsel %vm838, %v456, %v625
      %v845 = vsel %vm838, %v457, %v627
      %v846 = vsel %vm838, %v458, %v629
      %v847 = vsel %vm838, %v459, %v631
      %v848 = vsel %vm838, %v460, %v633
      %v849 = vsel %vm838, %v461, %v635
      %v850 = vsel %vm838, %v462, %v637
      %v851 = vsel %vm838, %v463, %v639
      %v852 = vsel %vm838, %v464, %v641
      %v853 = vsel %vm838, %v465, %v643
      %v854 = vsel %vm838, %v466, %v645
      %v855 = vsel %vm838, %v467, %v647
      %v856 = vsel %vm838, %v468, %v649
      %v857 = vsel %vm838, %v469, %v651
      %v858 = vsel %vm838, %v470, %v653
      %v859 = vsel %vm838, %v471, %v655
      %v860 = vsel %vm838, %v472, %v657
      %v861 = vsel %vm838, %v473, %v659
      %v862 = vsel %vm838, %v474, %v661
      %v863 = vsel %vm838, %v475, %v663
      %v864 = vsel %vm838, %v476, %v665
      %v865 = vsel %vm838, %v477, %v667
      %v866 = vsel %vm838, %v478, %v669
      %v867 = vsel %vm838, %v479, %v671
      %v868 = vsel %vm838, %v480, %v673
      %v869 = vsel %vm838, %v481, %v675
      %v870 = vsel %vm838, %v482, %v677
      %vm871 = vcmask 130048
      %v872 = vsel %vm871, %v839, %v743
      %v873 = vsel %vm871, %v840, %v745
      %v874 = vsel %vm871, %v841, %v747
      %v875 = vsel %vm871, %v842, %v749
      %v876 = vsel %vm871, %v843, %v751
      %v877 = vsel %vm871, %v844, %v753
      %v878 = vsel %vm871, %v845, %v755
      %v879 = vsel %vm871, %v846, %v757
      %v880 = vsel %vm871, %v847, %v759
      %v881 = vsel %vm871, %v848, %v761
      %v882 = vsel %vm871, %v849, %v763
      %v883 = vsel %vm871, %v850, %v765
      %v884 = vsel %vm871, %v851, %v767
      %v885 = vsel %vm871, %v852, %v769
      %v886 = vsel %vm871, %v853, %v771
      %v887 = vsel %vm871, %v854, %v773
      %v888 = vsel %vm871, %v855, %v775
      %v889 = vsel %vm871, %v856, %v777
      %v890 = vsel %vm871, %v857, %v779
      %v891 = vsel %vm871, %v858, %v781
      %v892 = vsel %vm871, %v859, %v783
      %v893 = vsel %vm871, %v860, %v785
      %v894 = vsel %vm871, %v861, %v787
      %v895 = vsel %vm871, %v862, %v789
      %v896 = vsel %vm871, %v863, %v791
      %v897 = vsel %vm871, %v864, %v793
      %v898 = vsel %vm871, %v865, %v795
      %v899 = vsel %vm871, %v866, %v797
      %v900 = vsel %vm871, %v867, %v799
      %v901 = vsel %vm871, %v868, %v801
      %v902 = vsel %vm871, %v869, %v803
      %v903 = vsel %vm871, %v870, %v805
      %v904 = vld [vmem:[%s3] sm:$0xff]
      %v905 = vld [vmem:[%s3 + $0x8] sm:$0xff]
      %v906 = vld [vmem:[%s3 + $0x10] sm:$0xff]
      %vm907 = vcmask 195584
      %v909 = vsel %vm907, %v872, 0
      %v912 = vsel %vm907, %v873, 0
      %v915 = vsel %vm907, %v874, 0
      %v918 = vsel %vm907, %v875, 0
      %v921 = vsel %vm907, %v876, 0
      %v924 = vsel %vm907, %v877, 0
      %v927 = vsel %vm907, %v878, 0
      %v930 = vsel %vm907, %v879, 0
      %v933 = vsel %vm907, %v880, 0
      %v936 = vsel %vm907, %v881, 0
      %v939 = vsel %vm907, %v882, 0
      %v942 = vsel %vm907, %v883, 0
      %v945 = vsel %vm907, %v884, 0
      %v948 = vsel %vm907, %v885, 0
      %v951 = vsel %vm907, %v886, 0
      %v954 = vsel %vm907, %v887, 0
      %v957 = vsel %vm907, %v888, 0
      %v960 = vsel %vm907, %v889, 0
      %v963 = vsel %vm907, %v890, 0
      %v966 = vsel %vm907, %v891, 0
      %v969 = vsel %vm907, %v892, 0
      %v972 = vsel %vm907, %v893, 0
      %v975 = vsel %vm907, %v894, 0
      %v978 = vsel %vm907, %v895, 0
      %v981 = vsel %vm907, %v896, 0
      %v984 = vsel %vm907, %v897, 0
      %v987 = vsel %vm907, %v898, 0
      %v990 = vsel %vm907, %v899, 0
      %v993 = vsel %vm907, %v900, 0
      %v996 = vsel %vm907, %v901, 0
      %v999 = vsel %vm907, %v902, 0
      %v1002 = vsel %vm907, %v903, 0
      %1004 = vmatprep.subr.mxu0 0.0
      %1005 = vmatpush1.msra.mxu0 %v904
      %1006 = vmatprep.subr.mxu0 0.0
      %1007 = vmatpush1.msra.mxu0 %v905
      %1008 = vmatprep.subr.mxu0 0.0
      %1009 = vmatpush1.msra.mxu0 %v906
      %1010 = vmatprep.subr.mxu0 0.0
      %1011 = vmatpush1.msra.mxu0 0.0
      %1012 = vmatprep.subr.mxu0 0.0
      %1013 = vmatpush1.msra.mxu0 0.0
      %1014 = vmatprep.subr.mxu0 0.0
      %1015 = vmatpush1.msra.mxu0 0.0
      %1016 = vmatprep.subr.mxu0 0.0
      %1017 = vmatpush1.msra.mxu0 0.0
      %1018 = vmatprep.subr.mxu0 0.0
      %1019 = vmatpush1.msra.mxu0 0.0
      %1020 = vmatprep.subr.mxu0 0.0
      %1021 = vmatpush1.msra.mxu0 0.0
      %1022 = vmatprep.subr.mxu0 0.0
      %1023 = vmatpush1.msra.mxu0 0.0
      %1024 = vmatprep.subr.mxu0 0.0
      %1025 = vmatpush1.msra.mxu0 0.0
      %1026 = vmatprep.subr.mxu0 0.0
      %1027 = vmatpush1.msra.mxu0 0.0
      %1028 = vmatprep.subr.mxu0 0.0
      %1029 = vmatpush1.msra.mxu0 0.0
      %1030 = vmatprep.subr.mxu0 0.0
      %1031 = vmatpush1.msra.mxu0 0.0
      %1032 = vmatprep.subr.mxu0 0.0
      %1033 = vmatpush1.msra.mxu0 0.0
      %1034 = vmatprep.subr.mxu0 0.0
      %1035 = vmatpush1.msra.mxu0 0.0
      %1036 = vmatprep.subr.mxu0 0.0
      %1037 = vmatpush1.msra.mxu0 0.0
      %1038 = vmatprep.subr.mxu0 0.0
      %1039 = vmatpush1.msra.mxu0 0.0
      %1040 = vmatprep.subr.mxu0 0.0
      %1041 = vmatpush1.msra.mxu0 0.0
      %1042 = vmatprep.subr.mxu0 0.0
      %1043 = vmatpush1.msra.mxu0 0.0
      %1044 = vmatprep.subr.mxu0 0.0
      %1045 = vmatpush1.msra.mxu0 0.0
      %1046 = vmatprep.subr.mxu0 0.0
      %1047 = vmatpush1.msra.mxu0 0.0
      %1048 = vmatprep.subr.mxu0 0.0
      %1049 = vmatpush1.msra.mxu0 0.0
      %1050 = vmatprep.subr.mxu0 0.0
      %1051 = vmatpush1.msra.mxu0 0.0
      %1052 = vmatprep.subr.mxu0 0.0
      %1053 = vmatpush1.msra.mxu0 0.0
      %1054 = vmatprep.subr.mxu0 0.0
      %1055 = vmatpush1.msra.mxu0 0.0
      %1056 = vmatprep.subr.mxu0 0.0
      %1057 = vmatpush1.msra.mxu0 0.0
      %1058 = vmatprep.subr.mxu0 0.0
      %1059 = vmatpush1.msra.mxu0 0.0
      %1060 = vmatprep.subr.mxu0 0.0
      %1061 = vmatpush1.msra.mxu0 0.0
      %1062 = vmatprep.subr.mxu0 0.0
      %1063 = vmatpush1.msra.mxu0 0.0
      %1064 = vmatprep.subr.mxu0 0.0
      %1065 = vmatpush1.msra.mxu0 0.0
      %1066 = vmatprep.subr.mxu0 0.0
      %1067 = vmatpush1.msra.mxu0 0.0
      %1068 = vmatprep.mubr.f32.mxu0 0.0
      %1069 = vmatmul.mubr.f32.gmra.mrb[0].mxu0 %v909
      %v1070 = vpop.f32.mrb[0].mxu0
      %v1071 = vadd.f32 0.0, %v1070
      %v1072 = vpop.f32.mrb[0].mxu0
      %1073 = vmatprep.mubr.f32.mxu0 0.0
      %1074 = vmatmul.mubr.f32.gmra.mrb[0].mxu0 %v912
      %v1075 = vpop.f32.mrb[0].mxu0
      %v1076 = vadd.f32 0.0, %v1075
      %v1077 = vpop.f32.mrb[0].mxu0
      %1078 = vmatprep.mubr.f32.mxu0 0.0
      %1079 = vmatmul.mubr.f32.gmra.mrb[0].mxu0 %v915
      %v1080 = vpop.f32.mrb[0].mxu0
      %v1081 = vadd.f32 0.0, %v1080
      %v1082 = vpop.f32.mrb[0].mxu0
      %1083 = vmatprep.mubr.f32.mxu0 0.0
      %1084 = vmatmul.mubr.f32.gmra.mrb[0].mxu0 %v918
      %v1085 = vpop.f32.mrb[0].mxu0
      %v1086 = vadd.f32 0.0, %v1085
      %v1087 = vpop.f32.mrb[0].mxu0
      %1088 = vmatprep.mubr.f32.mxu0 0.0
      %1089 = vmatmul.mubr.f32.gmra.mrb[0].mxu0 %v921
      %v1090 = vpop.f32.mrb[0].mxu0
      %v1091 = vadd.f32 0.0, %v1090
      %v1092 = vpop.f32.mrb[0].mxu0
      %1093 = vmatprep.mubr.f32.mxu0 0.0
      %1094 = vmatmul.mubr.f32.gmra.mrb[0].mxu0 %v924
      %v1095 = vpop.f32.mrb[0].mxu0
      %v1096 = vadd.f32 0.0, %v1095
      %v1097 = vpop.f32.mrb[0].mxu0
      %1098 = vmatprep.mubr.f32.mxu0 0.0
      %1099 = vmatmul.mubr.f32.gmra.mrb[0].mxu0 %v927
      %v1100 = vpop.f32.mrb[0].mxu0
      %v1101 = vadd.f32 0.0, %v1100
      %v1102 = vpop.f32.mrb[0].mxu0
      %1103 = vmatprep.mubr.f32.mxu0 0.0
      %1104 = vmatmul.mubr.f32.gmra.mrb[0].mxu0 %v930
      %v1105 = vpop.f32.mrb[0].mxu0
      %v1106 = vadd.f32 0.0, %v1105
      %v1107 = vpop.f32.mrb[0].mxu0
      %1108 = vmatprep.mubr.f32.mxu0 0.0
      %1109 = vmatmul.mubr.f32.gmra.mrb[0].mxu0 %v933
      %v1110 = vpop.f32.mrb[0].mxu0
      %v1111 = vadd.f32 0.0, %v1110
      %v1112 = vpop.f32.mrb[0].mxu0
      %1113 = vmatprep.mubr.f32.mxu0 0.0
      %1114 = vmatmul.mubr.f32.gmra.mrb[0].mxu0 %v936
      %v1115 = vpop.f32.mrb[0].mxu0
      %v1116 = vadd.f32 0.0, %v1115
      %v1117 = vpop.f32.mrb[0].mxu0
      %1118 = vmatprep.mubr.f32.mxu0 0.0
      %1119 = vmatmul.mubr.f32.gmra.mrb[0].mxu0 %v939
      %v1120 = vpop.f32.mrb[0].mxu0
      %v1121 = vadd.f32 0.0, %v1120
      %v1122 = vpop.f32.mrb[0].mxu0
      %1123 = vmatprep.mubr.f32.mxu0 0.0
      %1124 = vmatmul.mubr.f32.gmra.mrb[0].mxu0 %v942
      %v1125 = vpop.f32.mrb[0].mxu0
      %v1126 = vadd.f32 0.0, %v1125
      %v1127 = vpop.f32.mrb[0].mxu0
      %1128 = vmatprep.mubr.f32.mxu0 0.0
      %1129 = vmatmul.mubr.f32.gmra.mrb[0].mxu0 %v945
      %v1130 = vpop.f32.mrb[0].mxu0
      %v1131 = vadd.f32 0.0, %v1130
      %v1132 = vpop.f32.mrb[0].mxu0
      %1133 = vmatprep.mubr.f32.mxu0 0.0
      %1134 = vmatmul.mubr.f32.gmra.mrb[0].mxu0 %v948
      %v1135 = vpop.f32.mrb[0].mxu0
      %v1136 = vadd.f32 0.0, %v1135
      %v1137 = vpop.f32.mrb[0].mxu0
      %1138 = vmatprep.mubr.f32.mxu0 0.0
      %1139 = vmatmul.mubr.f32.gmra.mrb[0].mxu0 %v951
      %v1140 = vpop.f32.mrb[0].mxu0
      %v1141 = vadd.f32 0.0, %v1140
      %v1142 = vpop.f32.mrb[0].mxu0
      %1143 = vmatprep.mubr.f32.mxu0 0.0
      %1144 = vmatmul.mubr.f32.gmra.mrb[0].mxu0 %v954
      %v1145 = vpop.f32.mrb[0].mxu0
      %v1146 = vadd.f32 0.0, %v1145
      %v1147 = vpop.f32.mrb[0].mxu0
      %1148 = vmatprep.mubr.f32.mxu0 0.0
      %1149 = vmatmul.mubr.f32.gmra.mrb[0].mxu0 %v957
      %v1150 = vpop.f32.mrb[0].mxu0
      %v1151 = vadd.f32 0.0, %v1150
      %v1152 = vpop.f32.mrb[0].mxu0
      %1153 = vmatprep.mubr.f32.mxu0 0.0
      %1154 = vmatmul.mubr.f32.gmra.mrb[0].mxu0 %v960
      %v1155 = vpop.f32.mrb[0].mxu0
      %v1156 = vadd.f32 0.0, %v1155
      %v1157 = vpop.f32.mrb[0].mxu0
      %1158 = vmatprep.mubr.f32.mxu0 0.0
      %1159 = vmatmul.mubr.f32.gmra.mrb[0].mxu0 %v963
      %v1160 = vpop.f32.mrb[0].mxu0
      %v1161 = vadd.f32 0.0, %v1160
      %v1162 = vpop.f32.mrb[0].mxu0
      %1163 = vmatprep.mubr.f32.mxu0 0.0
      %1164 = vmatmul.mubr.f32.gmra.mrb[0].mxu0 %v966
      %v1165 = vpop.f32.mrb[0].mxu0
      %v1166 = vadd.f32 0.0, %v1165
      %v1167 = vpop.f32.mrb[0].mxu0
      %1168 = vmatprep.mubr.f32.mxu0 0.0
      %1169 = vmatmul.mubr.f32.gmra.mrb[0].mxu0 %v969
      %v1170 = vpop.f32.mrb[0].mxu0
      %v1171 = vadd.f32 0.0, %v1170
      %v1172 = vpop.f32.mrb[0].mxu0
      %1173 = vmatprep.mubr.f32.mxu0 0.0
      %1174 = vmatmul.mubr.f32.gmra.mrb[0].mxu0 %v972
      %v1175 = vpop.f32.mrb[0].mxu0
      %v1176 = vadd.f32 0.0, %v1175
      %v1177 = vpop.f32.mrb[0].mxu0
      %1178 = vmatprep.mubr.f32.mxu0 0.0
      %1179 = vmatmul.mubr.f32.gmra.mrb[0].mxu0 %v975
      %v1180 = vpop.f32.mrb[0].mxu0
      %v1181 = vadd.f32 0.0, %v1180
      %v1182 = vpop.f32.mrb[0].mxu0
      %1183 = vmatprep.mubr.f32.mxu0 0.0
      %1184 = vmatmul.mubr.f32.gmra.mrb[0].mxu0 %v978
      %v1185 = vpop.f32.mrb[0].mxu0
      %v1186 = vadd.f32 0.0, %v1185
      %v1187 = vpop.f32.mrb[0].mxu0
      %1188 = vmatprep.mubr.f32.mxu0 0.0
      %1189 = vmatmul.mubr.f32.gmra.mrb[0].mxu0 %v981
      %v1190 = vpop.f32.mrb[0].mxu0
      %v1191 = vadd.f32 0.0, %v1190
      %v1192 = vpop.f32.mrb[0].mxu0
      %1193 = vmatprep.mubr.f32.mxu0 0.0
      %1194 = vmatmul.mubr.f32.gmra.mrb[0].mxu0 %v984
      %v1195 = vpop.f32.mrb[0].mxu0
      %v1196 = vadd.f32 0.0, %v1195
      %v1197 = vpop.f32.mrb[0].mxu0
      %1198 = vmatprep.mubr.f32.mxu0 0.0
      %1199 = vmatmul.mubr.f32.gmra.mrb[0].mxu0 %v987
      %v1200 = vpop.f32.mrb[0].mxu0
      %v1201 = vadd.f32 0.0, %v1200
      %v1202 = vpop.f32.mrb[0].mxu0
      %1203 = vmatprep.mubr.f32.mxu0 0.0
      %1204 = vmatmul.mubr.f32.gmra.mrb[0].mxu0 %v990
      %v1205 = vpop.f32.mrb[0].mxu0
      %v1206 = vadd.f32 0.0, %v1205
      %v1207 = vpop.f32.mrb[0].mxu0
      %1208 = vmatprep.mubr.f32.mxu0 0.0
      %1209 = vmatmul.mubr.f32.gmra.mrb[0].mxu0 %v993
      %v1210 = vpop.f32.mrb[0].mxu0
      %v1211 = vadd.f32 0.0, %v1210
      %v1212 = vpop.f32.mrb[0].mxu0
      %1213 = vmatprep.mubr.f32.mxu0 0.0
      %1214 = vmatmul.mubr.f32.gmra.mrb[0].mxu0 %v996
      %v1215 = vpop.f32.mrb[0].mxu0
      %v1216 = vadd.f32 0.0, %v1215
      %v1217 = vpop.f32.mrb[0].mxu0
      %1218 = vmatprep.mubr.f32.mxu0 0.0
      %1219 = vmatmul.mubr.f32.gmra.mrb[0].mxu0 %v999
      %v1220 = vpop.f32.mrb[0].mxu0
      %v1221 = vadd.f32 0.0, %v1220
      %v1222 = vpop.f32.mrb[0].mxu0
      %1223 = vmatprep.mubr.f32.mxu0 0.0
      %1224 = vmatmul.mubr.f32.gmra.mrb[0].mxu0 %v1002
      %v1225 = vpop.f32.mrb[0].mxu0
      %v1226 = vadd.f32 0.0, %v1225
      %v1227 = vpop.f32.mrb[0].mxu0
      %1228 = vdwg.mxu0
      %v1229 = vadd.s32 %v382, 16
      %v1230 = vadd.s32 %v382, 24
      %v1231 = vadd.s32 %v382, 32
      %v1232 = vadd.s32 %v382, 40
      %v1233 = vadd.s32 %v382, 48
      %v1234 = vadd.s32 %v382, 56
      %v1235 = vadd.s32 %v382, 64
      %v1236 = vadd.s32 %v382, 72
      %v1237 = vadd.s32 %v382, 80
      %v1238 = vadd.s32 %v382, 88
      %v1239 = vadd.s32 %v382, 96
      %v1240 = vadd.s32 %v382, 104
      %v1241 = vadd.s32 %v382, 112
      %v1242 = vadd.s32 %v382, 120
      %v1243 = vadd.s32 %v382, 128
      %v1244 = vadd.s32 %v382, 136
      %v1245 = vadd.s32 %v382, 144
      %v1246 = vadd.s32 %v382, 152
      %v1247 = vadd.s32 %v382, 160
      %v1248 = vadd.s32 %v382, 168
      %v1249 = vadd.s32 %v382, 176
      %v1250 = vadd.s32 %v382, 184
      %v1251 = vadd.s32 %v382, 192
      %v1252 = vadd.s32 %v382, 200
      %v1253 = vadd.s32 %v382, 208
      %v1254 = vadd.s32 %v382, 216
      %v1255 = vadd.s32 %v382, 224
      %v1256 = vadd.s32 %v382, 232
      %v1257 = vadd.s32 %v382, 240
      %v1258 = vadd.s32 %v382, 248
      %vm1259 = vcmp.lt.s32.totalorder %v382, 16
      %vm1260 = vcmp.lt.s32.totalorder %v383, 16
      %vm1261 = vcmp.lt.s32.totalorder %v1229, 16
      %vm1262 = vcmp.lt.s32.totalorder %v1230, 16
      %vm1263 = vcmp.lt.s32.totalorder %v1231, 16
      %vm1264 = vcmp.lt.s32.totalorder %v1232, 16
      %vm1265 = vcmp.lt.s32.totalorder %v1233, 16
      %vm1266 = vcmp.lt.s32.totalorder %v1234, 16
      %vm1267 = vcmp.lt.s32.totalorder %v1235, 16
      %vm1268 = vcmp.lt.s32.totalorder %v1236, 16
      %vm1269 = vcmp.lt.s32.totalorder %v1237, 16
      %vm1270 = vcmp.lt.s32.totalorder %v1238, 16
      %vm1271 = vcmp.lt.s32.totalorder %v1239, 16
      %vm1272 = vcmp.lt.s32.totalorder %v1240, 16
      %vm1273 = vcmp.lt.s32.totalorder %v1241, 16
      %vm1274 = vcmp.lt.s32.totalorder %v1242, 16
      %vm1275 = vcmp.lt.s32.totalorder %v1243, 16
      %vm1276 = vcmp.lt.s32.totalorder %v1244, 16
      %vm1277 = vcmp.lt.s32.totalorder %v1245, 16
      %vm1278 = vcmp.lt.s32.totalorder %v1246, 16
      %vm1279 = vcmp.lt.s32.totalorder %v1247, 16
      %vm1280 = vcmp.lt.s32.totalorder %v1248, 16
      %vm1281 = vcmp.lt.s32.totalorder %v1249, 16
      %vm1282 = vcmp.lt.s32.totalorder %v1250, 16
      %vm1283 = vcmp.lt.s32.totalorder %v1251, 16
      %vm1284 = vcmp.lt.s32.totalorder %v1252, 16
      %vm1285 = vcmp.lt.s32.totalorder %v1253, 16
      %vm1286 = vcmp.lt.s32.totalorder %v1254, 16
      %vm1287 = vcmp.lt.s32.totalorder %v1255, 16
      %vm1288 = vcmp.lt.s32.totalorder %v1256, 16
      %vm1289 = vcmp.lt.s32.totalorder %v1257, 16
      %vm1290 = vcmp.lt.s32.totalorder %v1258, 16
      %v1291 = vsel %vm1259, 0.0, %v1221
      %v1292 = vsel %vm1260, 0.0, %v1226
      %v1293 = vsel %vm1261, 0.0, %v1071
      %v1294 = vsel %vm1262, 0.0, %v1076
      %v1295 = vsel %vm1263, 0.0, %v1081
      %v1296 = vsel %vm1264, 0.0, %v1086
      %v1297 = vsel %vm1265, 0.0, %v1091
      %v1298 = vsel %vm1266, 0.0, %v1096
      %v1299 = vsel %vm1267, 0.0, %v1101
      %v1300 = vsel %vm1268, 0.0, %v1106
      %v1301 = vsel %vm1269, 0.0, %v1111
      %v1302 = vsel %vm1270, 0.0, %v1116
      %v1303 = vsel %vm1271, 0.0, %v1121
      %v1304 = vsel %vm1272, 0.0, %v1126
      %v1305 = vsel %vm1273, 0.0, %v1131
      %v1306 = vsel %vm1274, 0.0, %v1136
      %v1307 = vsel %vm1275, 0.0, %v1141
      %v1308 = vsel %vm1276, 0.0, %v1146
      %v1309 = vsel %vm1277, 0.0, %v1151
      %v1310 = vsel %vm1278, 0.0, %v1156
      %v1311 = vsel %vm1279, 0.0, %v1161
      %v1312 = vsel %vm1280, 0.0, %v1166
      %v1313 = vsel %vm1281, 0.0, %v1171
      %v1314 = vsel %vm1282, 0.0, %v1176
      %v1315 = vsel %vm1283, 0.0, %v1181
      %v1316 = vsel %vm1284, 0.0, %v1186
      %v1317 = vsel %vm1285, 0.0, %v1191
      %v1318 = vsel %vm1286, 0.0, %v1196
      %v1319 = vsel %vm1287, 0.0, %v1201
      %v1320 = vsel %vm1288, 0.0, %v1206
      %v1321 = vsel %vm1289, 0.0, %v1211
      %v1322 = vsel %vm1290, 0.0, %v1216
      %1355 = vrot.lane.b32.xlu0 %v1071, 120
      %v1356 = vpop.permute.xlu0 %1355
      %1357 = vrot.lane.b32.xlu0 %v1076, 120
      %v1358 = vpop.permute.xlu0 %1357
      %1359 = vrot.lane.b32.xlu0 %v1081, 120
      %v1360 = vpop.permute.xlu0 %1359
      %1361 = vrot.lane.b32.xlu0 %v1086, 120
      %v1362 = vpop.permute.xlu0 %1361
      %1363 = vrot.lane.b32.xlu0 %v1091, 120
      %v1364 = vpop.permute.xlu0 %1363
      %1365 = vrot.lane.b32.xlu0 %v1096, 120
      %v1366 = vpop.permute.xlu0 %1365
      %1367 = vrot.lane.b32.xlu0 %v1101, 120
      %v1368 = vpop.permute.xlu0 %1367
      %1369 = vrot.lane.b32.xlu0 %v1106, 120
      %v1370 = vpop.permute.xlu0 %1369
      %1371 = vrot.lane.b32.xlu0 %v1111, 120
      %v1372 = vpop.permute.xlu0 %1371
      %1373 = vrot.lane.b32.xlu0 %v1116, 120
      %v1374 = vpop.permute.xlu0 %1373
      %1375 = vrot.lane.b32.xlu0 %v1121, 120
      %v1376 = vpop.permute.xlu0 %1375
      %1377 = vrot.lane.b32.xlu0 %v1126, 120
      %v1378 = vpop.permute.xlu0 %1377
      %1379 = vrot.lane.b32.xlu0 %v1131, 120
      %v1380 = vpop.permute.xlu0 %1379
      %1381 = vrot.lane.b32.xlu0 %v1136, 120
      %v1382 = vpop.permute.xlu0 %1381
      %1383 = vrot.lane.b32.xlu0 %v1141, 120
      %v1384 = vpop.permute.xlu0 %1383
      %1385 = vrot.lane.b32.xlu0 %v1146, 120
      %v1386 = vpop.permute.xlu0 %1385
      %1387 = vrot.lane.b32.xlu0 %v1151, 120
      %v1388 = vpop.permute.xlu0 %1387
      %1389 = vrot.lane.b32.xlu0 %v1156, 120
      %v1390 = vpop.permute.xlu0 %1389
      %1391 = vrot.lane.b32.xlu0 %v1161, 120
      %v1392 = vpop.permute.xlu0 %1391
      %1393 = vrot.lane.b32.xlu0 %v1166, 120
      %v1394 = vpop.permute.xlu0 %1393
      %1395 = vrot.lane.b32.xlu0 %v1171, 120
      %v1396 = vpop.permute.xlu0 %1395
      %1397 = vrot.lane.b32.xlu0 %v1176, 120
      %v1398 = vpop.permute.xlu0 %1397
      %1399 = vrot.lane.b32.xlu0 %v1181, 120
      %v1400 = vpop.permute.xlu0 %1399
      %1401 = vrot.lane.b32.xlu0 %v1186, 120
      %v1402 = vpop.permute.xlu0 %1401
      %1403 = vrot.lane.b32.xlu0 %v1191, 120
      %v1404 = vpop.permute.xlu0 %1403
      %1405 = vrot.lane.b32.xlu0 %v1196, 120
      %v1406 = vpop.permute.xlu0 %1405
      %1407 = vrot.lane.b32.xlu0 %v1201, 120
      %v1408 = vpop.permute.xlu0 %1407
      %1409 = vrot.lane.b32.xlu0 %v1206, 120
      %v1410 = vpop.permute.xlu0 %1409
      %1411 = vrot.lane.b32.xlu0 %v1211, 120
      %v1412 = vpop.permute.xlu0 %1411
      %1413 = vrot.lane.b32.xlu0 %v1216, 120
      %v1414 = vpop.permute.xlu0 %1413
      %1415 = vrot.lane.b32.xlu0 %v1221, 120
      %v1416 = vpop.permute.xlu0 %1415
      %1417 = vrot.lane.b32.xlu0 %v1226, 120
      %v1418 = vpop.permute.xlu0 %1417
      %v1451 = vadd.f32 %v1291, %v1356
      %v1452 = vadd.f32 %v1292, %v1358
      %v1453 = vadd.f32 %v1293, %v1360
      %v1454 = vadd.f32 %v1294, %v1362
      %v1455 = vadd.f32 %v1295, %v1364
      %v1456 = vadd.f32 %v1296, %v1366
      %v1457 = vadd.f32 %v1297, %v1368
      %v1458 = vadd.f32 %v1298, %v1370
      %v1459 = vadd.f32 %v1299, %v1372
      %v1460 = vadd.f32 %v1300, %v1374
      %v1461 = vadd.f32 %v1301, %v1376
      %v1462 = vadd.f32 %v1302, %v1378
      %v1463 = vadd.f32 %v1303, %v1380
      %v1464 = vadd.f32 %v1304, %v1382
      %v1465 = vadd.f32 %v1305, %v1384
      %v1466 = vadd.f32 %v1306, %v1386
      %v1467 = vadd.f32 %v1307, %v1388
      %v1468 = vadd.f32 %v1308, %v1390
      %v1469 = vadd.f32 %v1309, %v1392
      %v1470 = vadd.f32 %v1310, %v1394
      %v1471 = vadd.f32 %v1311, %v1396
      %v1472 = vadd.f32 %v1312, %v1398
      %v1473 = vadd.f32 %v1313, %v1400
      %v1474 = vadd.f32 %v1314, %v1402
      %v1475 = vadd.f32 %v1315, %v1404
      %v1476 = vadd.f32 %v1316, %v1406
      %v1477 = vadd.f32 %v1317, %v1408
      %v1478 = vadd.f32 %v1318, %v1410
      %v1479 = vadd.f32 %v1319, %v1412
      %v1480 = vadd.f32 %v1320, %v1414
      %v1481 = vadd.f32 %v1321, %v1416
      %v1482 = vadd.f32 %v1322, %v1418
      %vm1483 = vcmp.ge.s32.totalorder %v382, 240
      %vm1484 = vcmp.ge.s32.totalorder %v383, 240
      %vm1485 = vcmp.ge.s32.totalorder %v1229, 240
      %vm1486 = vcmp.ge.s32.totalorder %v1230, 240
      %vm1487 = vcmp.ge.s32.totalorder %v1231, 240
      %vm1488 = vcmp.ge.s32.totalorder %v1232, 240
      %vm1489 = vcmp.ge.s32.totalorder %v1233, 240
      %vm1490 = vcmp.ge.s32.totalorder %v1234, 240
      %vm1491 = vcmp.ge.s32.totalorder %v1235, 240
      %vm1492 = vcmp.ge.s32.totalorder %v1236, 240
      %vm1493 = vcmp.ge.s32.totalorder %v1237, 240
      %vm1494 = vcmp.ge.s32.totalorder %v1238, 240
      %vm1495 = vcmp.ge.s32.totalorder %v1239, 240
      %vm1496 = vcmp.ge.s32.totalorder %v1240, 240
      %vm1497 = vcmp.ge.s32.totalorder %v1241, 240
      %vm1498 = vcmp.ge.s32.totalorder %v1242, 240
      %vm1499 = vcmp.ge.s32.totalorder %v1243, 240
      %vm1500 = vcmp.ge.s32.totalorder %v1244, 240
      %vm1501 = vcmp.ge.s32.totalorder %v1245, 240
      %vm1502 = vcmp.ge.s32.totalorder %v1246, 240
      %vm1503 = vcmp.ge.s32.totalorder %v1247, 240
      %vm1504 = vcmp.ge.s32.totalorder %v1248, 240
      %vm1505 = vcmp.ge.s32.totalorder %v1249, 240
      %vm1506 = vcmp.ge.s32.totalorder %v1250, 240
      %vm1507 = vcmp.ge.s32.totalorder %v1251, 240
      %vm1508 = vcmp.ge.s32.totalorder %v1252, 240
      %vm1509 = vcmp.ge.s32.totalorder %v1253, 240
      %vm1510 = vcmp.ge.s32.totalorder %v1254, 240
      %vm1511 = vcmp.ge.s32.totalorder %v1255, 240
      %vm1512 = vcmp.ge.s32.totalorder %v1256, 240
      %vm1513 = vcmp.ge.s32.totalorder %v1257, 240
      %vm1514 = vcmp.ge.s32.totalorder %v1258, 240
      %1515 = vrot.lane.b32.xlu0 %v1071, 112
      %v1516 = vpop.permute.xlu0 %1515
      %1517 = vrot.lane.b32.xlu0 %v1076, 112
      %v1518 = vpop.permute.xlu0 %1517
      %1519 = vrot.lane.b32.xlu0 %v1081, 112
      %v1520 = vpop.permute.xlu0 %1519
      %1521 = vrot.lane.b32.xlu0 %v1086, 112
      %v1522 = vpop.permute.xlu0 %1521
      %1523 = vrot.lane.b32.xlu0 %v1091, 112
      %v1524 = vpop.permute.xlu0 %1523
      %1525 = vrot.lane.b32.xlu0 %v1096, 112
      %v1526 = vpop.permute.xlu0 %1525
      %1527 = vrot.lane.b32.xlu0 %v1101, 112
      %v1528 = vpop.permute.xlu0 %1527
      %1529 = vrot.lane.b32.xlu0 %v1106, 112
      %v1530 = vpop.permute.xlu0 %1529
      %1531 = vrot.lane.b32.xlu0 %v1111, 112
      %v1532 = vpop.permute.xlu0 %1531
      %1533 = vrot.lane.b32.xlu0 %v1116, 112
      %v1534 = vpop.permute.xlu0 %1533
      %1535 = vrot.lane.b32.xlu0 %v1121, 112
      %v1536 = vpop.permute.xlu0 %1535
      %1537 = vrot.lane.b32.xlu0 %v1126, 112
      %v1538 = vpop.permute.xlu0 %1537
      %1539 = vrot.lane.b32.xlu0 %v1131, 112
      %v1540 = vpop.permute.xlu0 %1539
      %1541 = vrot.lane.b32.xlu0 %v1136, 112
      %v1542 = vpop.permute.xlu0 %1541
      %1543 = vrot.lane.b32.xlu0 %v1141, 112
      %v1544 = vpop.permute.xlu0 %1543
      %1545 = vrot.lane.b32.xlu0 %v1146, 112
      %v1546 = vpop.permute.xlu0 %1545
      %1547 = vrot.lane.b32.xlu0 %v1151, 112
      %v1548 = vpop.permute.xlu0 %1547
      %1549 = vrot.lane.b32.xlu0 %v1156, 112
      %v1550 = vpop.permute.xlu0 %1549
      %1551 = vrot.lane.b32.xlu0 %v1161, 112
      %v1552 = vpop.permute.xlu0 %1551
      %1553 = vrot.lane.b32.xlu0 %v1166, 112
      %v1554 = vpop.permute.xlu0 %1553
      %1555 = vrot.lane.b32.xlu0 %v1171, 112
      %v1556 = vpop.permute.xlu0 %1555
      %1557 = vrot.lane.b32.xlu0 %v1176, 112
      %v1558 = vpop.permute.xlu0 %1557
      %1559 = vrot.lane.b32.xlu0 %v1181, 112
      %v1560 = vpop.permute.xlu0 %1559
      %1561 = vrot.lane.b32.xlu0 %v1186, 112
      %v1562 = vpop.permute.xlu0 %1561
      %1563 = vrot.lane.b32.xlu0 %v1191, 112
      %v1564 = vpop.permute.xlu0 %1563
      %1565 = vrot.lane.b32.xlu0 %v1196, 112
      %v1566 = vpop.permute.xlu0 %1565
      %1567 = vrot.lane.b32.xlu0 %v1201, 112
      %v1568 = vpop.permute.xlu0 %1567
      %1569 = vrot.lane.b32.xlu0 %v1206, 112
      %v1570 = vpop.permute.xlu0 %1569
      %1571 = vrot.lane.b32.xlu0 %v1211, 112
      %v1572 = vpop.permute.xlu0 %1571
      %1573 = vrot.lane.b32.xlu0 %v1216, 112
      %v1574 = vpop.permute.xlu0 %1573
      %1575 = vrot.lane.b32.xlu0 %v1221, 112
      %v1576 = vpop.permute.xlu0 %1575
      %1577 = vrot.lane.b32.xlu0 %v1226, 112
      %v1578 = vpop.permute.xlu0 %1577
      %v1611 = vsel %vm1483, 0.0, %v1520
      %v1612 = vsel %vm1484, 0.0, %v1522
      %v1613 = vsel %vm1485, 0.0, %v1524
      %v1614 = vsel %vm1486, 0.0, %v1526
      %v1615 = vsel %vm1487, 0.0, %v1528
      %v1616 = vsel %vm1488, 0.0, %v1530
      %v1617 = vsel %vm1489, 0.0, %v1532
      %v1618 = vsel %vm1490, 0.0, %v1534
      %v1619 = vsel %vm1491, 0.0, %v1536
      %v1620 = vsel %vm1492, 0.0, %v1538
      %v1621 = vsel %vm1493, 0.0, %v1540
      %v1622 = vsel %vm1494, 0.0, %v1542
      %v1623 = vsel %vm1495, 0.0, %v1544
      %v1624 = vsel %vm1496, 0.0, %v1546
      %v1625 = vsel %vm1497, 0.0, %v1548
      %v1626 = vsel %vm1498, 0.0, %v1550
      %v1627 = vsel %vm1499, 0.0, %v1552
      %v1628 = vsel %vm1500, 0.0, %v1554
      %v1629 = vsel %vm1501, 0.0, %v1556
      %v1630 = vsel %vm1502, 0.0, %v1558
      %v1631 = vsel %vm1503, 0.0, %v1560
      %v1632 = vsel %vm1504, 0.0, %v1562
      %v1633 = vsel %vm1505, 0.0, %v1564
      %v1634 = vsel %vm1506, 0.0, %v1566
      %v1635 = vsel %vm1507, 0.0, %v1568
      %v1636 = vsel %vm1508, 0.0, %v1570
      %v1637 = vsel %vm1509, 0.0, %v1572
      %v1638 = vsel %vm1510, 0.0, %v1574
      %v1639 = vsel %vm1511, 0.0, %v1576
      %v1640 = vsel %vm1512, 0.0, %v1578
      %v1641 = vsel %vm1513, 0.0, %v1516
      %v1642 = vsel %vm1514, 0.0, %v1518
      %v1643 = vadd.f32 %v1451, %v1611
      %v1644 = vadd.f32 %v1452, %v1612
      %v1645 = vadd.f32 %v1453, %v1613
      %v1646 = vadd.f32 %v1454, %v1614
      %v1647 = vadd.f32 %v1455, %v1615
      %v1648 = vadd.f32 %v1456, %v1616
      %v1649 = vadd.f32 %v1457, %v1617
      %v1650 = vadd.f32 %v1458, %v1618
      %v1651 = vadd.f32 %v1459, %v1619
      %v1652 = vadd.f32 %v1460, %v1620
      %v1653 = vadd.f32 %v1461, %v1621
      %v1654 = vadd.f32 %v1462, %v1622
      %v1655 = vadd.f32 %v1463, %v1623
      %v1656 = vadd.f32 %v1464, %v1624
      %v1657 = vadd.f32 %v1465, %v1625
      %v1658 = vadd.f32 %v1466, %v1626
      %v1659 = vadd.f32 %v1467, %v1627
      %v1660 = vadd.f32 %v1468, %v1628
      %v1661 = vadd.f32 %v1469, %v1629
      %v1662 = vadd.f32 %v1470, %v1630
      %v1663 = vadd.f32 %v1471, %v1631
      %v1664 = vadd.f32 %v1472, %v1632
      %v1665 = vadd.f32 %v1473, %v1633
      %v1666 = vadd.f32 %v1474, %v1634
      %v1667 = vadd.f32 %v1475, %v1635
      %v1668 = vadd.f32 %v1476, %v1636
      %v1669 = vadd.f32 %v1477, %v1637
      %v1670 = vadd.f32 %v1478, %v1638
      %v1671 = vadd.f32 %v1479, %v1639
      %v1672 = vadd.f32 %v1480, %v1640
      %v1673 = vadd.f32 %v1481, %v1641
      %v1674 = vadd.f32 %v1482, %v1642
      %1675 = vst.msk [vmem:[%s263] sm:$0xff] %vm838, %v1643
      %1676 = vst.msk [vmem:[%s263 + $0x8] sm:$0xff] %vm838, %v1644
      %1677 = vst.msk [vmem:[%s263 + $0x10] sm:$0xff] %vm838, %v1645
      %1678 = vst.msk [vmem:[%s263 + $0x18] sm:$0xff] %vm838, %v1646
      %1679 = vst.msk [vmem:[%s263 + $0x20] sm:$0xff] %vm838, %v1647
      %1680 = vst.msk [vmem:[%s263 + $0x28] sm:$0xff] %vm838, %v1648
      %1681 = vst.msk [vmem:[%s263 + $0x30] sm:$0xff] %vm838, %v1649
      %1682 = vst.msk [vmem:[%s263 + $0x38] sm:$0xff] %vm838, %v1650
      %1683 = vst.msk [vmem:[%s263 + $0x40] sm:$0xff] %vm838, %v1651
      %1684 = vst.msk [vmem:[%s263 + $0x48] sm:$0xff] %vm838, %v1652
      %1685 = vst.msk [vmem:[%s263 + $0x50] sm:$0xff] %vm838, %v1653
      %1686 = vst.msk [vmem:[%s263 + $0x58] sm:$0xff] %vm838, %v1654
      %1687 = vst.msk [vmem:[%s263 + $0x60] sm:$0xff] %vm838, %v1655
      %1688 = vst.msk [vmem:[%s263 + $0x68] sm:$0xff] %vm838, %v1656
      %1689 = vst.msk [vmem:[%s263 + $0x70] sm:$0xff] %vm838, %v1657
      %1690 = vst.msk [vmem:[%s263 + $0x78] sm:$0xff] %vm838, %v1658
      %1691 = vst.msk [vmem:[%s263 + $0x80] sm:$0xff] %vm838, %v1659
      %1692 = vst.msk [vmem:[%s263 + $0x88] sm:$0xff] %vm838, %v1660
      %1693 = vst.msk [vmem:[%s263 + $0x90] sm:$0xff] %vm838, %v1661
      %1694 = vst.msk [vmem:[%s263 + $0x98] sm:$0xff] %vm838, %v1662
      %1695 = vst.msk [vmem:[%s263 + $0xa0] sm:$0xff] %vm838, %v1663
      %1696 = vst.msk [vmem:[%s263 + $0xa8] sm:$0xff] %vm838, %v1664
      %1697 = vst.msk [vmem:[%s263 + $0xb0] sm:$0xff] %vm838, %v1665
      %1698 = vst.msk [vmem:[%s263 + $0xb8] sm:$0xff] %vm838, %v1666
      %1699 = vst.msk [vmem:[%s263 + $0xc0] sm:$0xff] %vm838, %v1667
      %1700 = vst.msk [vmem:[%s263 + $0xc8] sm:$0xff] %vm838, %v1668
      %1701 = vst.msk [vmem:[%s263 + $0xd0] sm:$0xff] %vm838, %v1669
      %1702 = vst.msk [vmem:[%s263 + $0xd8] sm:$0xff] %vm838, %v1670
      %1703 = vst.msk [vmem:[%s263 + $0xe0] sm:$0xff] %vm838, %v1671
      %1704 = vst.msk [vmem:[%s263 + $0xe8] sm:$0xff] %vm838, %v1672
      %1705 = vst.msk [vmem:[%s263 + $0xf0] sm:$0xff] %vm838, %v1673
      %1706 = vst.msk [vmem:[%s263 + $0xf8] sm:$0xff] %vm838, %v1674
      %v1707 = vsel %vm838, %v1643, 0.0
      %v1708 = vsel %vm838, %v1644, 0.0
      %v1709 = vadd.f32 %v1707, %v1708
      %v1710 = vsel %vm838, %v1645, 0.0
      %v1711 = vadd.f32 %v1709, %v1710
      %v1712 = vsel %vm838, %v1646, 0.0
      %v1713 = vadd.f32 %v1711, %v1712
      %v1714 = vsel %vm838, %v1647, 0.0
      %v1715 = vadd.f32 %v1713, %v1714
      %v1716 = vsel %vm838, %v1648, 0.0
      %v1717 = vadd.f32 %v1715, %v1716
      %v1718 = vsel %vm838, %v1649, 0.0
      %v1719 = vadd.f32 %v1717, %v1718
      %v1720 = vsel %vm838, %v1650, 0.0
      %v1721 = vadd.f32 %v1719, %v1720
      %v1722 = vsel %vm838, %v1651, 0.0
      %v1723 = vadd.f32 %v1721, %v1722
      %v1724 = vsel %vm838, %v1652, 0.0
      %v1725 = vadd.f32 %v1723, %v1724
      %v1726 = vsel %vm838, %v1653, 0.0
      %v1727 = vadd.f32 %v1725, %v1726
      %v1728 = vsel %vm838, %v1654, 0.0
      %v1729 = vadd.f32 %v1727, %v1728
      %v1730 = vsel %vm838, %v1655, 0.0
      %v1731 = vadd.f32 %v1729, %v1730
      %v1732 = vsel %vm838, %v1656, 0.0
      %v1733 = vadd.f32 %v1731, %v1732
      %v1734 = vsel %vm838, %v1657, 0.0
      %v1735 = vadd.f32 %v1733, %v1734
      %v1736 = vsel %vm838, %v1658, 0.0
      %v1737 = vadd.f32 %v1735, %v1736
      %v1738 = vsel %vm838, %v1659, 0.0
      %v1739 = vadd.f32 %v1737, %v1738
      %v1740 = vsel %vm838, %v1660, 0.0
      %v1741 = vadd.f32 %v1739, %v1740
      %v1742 = vsel %vm838, %v1661, 0.0
      %v1743 = vadd.f32 %v1741, %v1742
      %v1744 = vsel %vm838, %v1662, 0.0
      %v1745 = vadd.f32 %v1743, %v1744
      %v1746 = vsel %vm838, %v1663, 0.0
      %v1747 = vadd.f32 %v1745, %v1746
      %v1748 = vsel %vm838, %v1664, 0.0
      %v1749 = vadd.f32 %v1747, %v1748
      %v1750 = vsel %vm838, %v1665, 0.0
      %v1751 = vadd.f32 %v1749, %v1750
      %v1752 = vsel %vm838, %v1666, 0.0
      %v1753 = vadd.f32 %v1751, %v1752
      %v1754 = vsel %vm838, %v1667, 0.0
      %v1755 = vadd.f32 %v1753, %v1754
      %v1756 = vsel %vm838, %v1668, 0.0
      %v1757 = vadd.f32 %v1755, %v1756
      %v1758 = vsel %vm838, %v1669, 0.0
      %v1759 = vadd.f32 %v1757, %v1758
      %v1760 = vsel %vm838, %v1670, 0.0
      %v1761 = vadd.f32 %v1759, %v1760
      %v1762 = vsel %vm838, %v1671, 0.0
      %v1763 = vadd.f32 %v1761, %v1762
      %v1764 = vsel %vm838, %v1672, 0.0
      %v1765 = vadd.f32 %v1763, %v1764
      %v1766 = vsel %vm838, %v1673, 0.0
      %v1767 = vadd.f32 %v1765, %v1766
      %v1768 = vsel %vm838, %v1674, 0.0
      %v1769 = vadd.f32 %v1767, %v1768
      %v1770 = vrot.slane %v1769, 4
      %v1771 = vadd.f32 %v1769, %v1770
      %v1772 = vrot.slane %v1771, 2
      %v1773 = vadd.f32 %v1771, %v1772
      %v1774 = vrot.slane %v1773, 1
      %v1775 = vadd.f32 %v1773, %v1774
      %vm1776 = vcmask 57344
      %1777 = vst.msk [vmem:[%s266] sm:$0x1] %vm1776, %v1775
      %1778 = vxpose.xlu0.b32.start [1/16] %v1643, 128
      %1779 = vxpose.xlu0.b32.cont [2/16] %v1644, 128
      %1780 = vxpose.xlu0.b32.cont [3/16] %v1645, 128
      %1781 = vxpose.xlu0.b32.cont [4/16] %v1646, 128
      %1782 = vxpose.xlu0.b32.cont [5/16] %v1647, 128
      %1783 = vxpose.xlu0.b32.cont [6/16] %v1648, 128
      %1784 = vxpose.xlu0.b32.cont [7/16] %v1649, 128
      %1785 = vxpose.xlu0.b32.cont [8/16] %v1650, 128
      %1786 = vxpose.xlu0.b32.cont [9/16] %v1651, 128
      %1787 = vxpose.xlu0.b32.cont [10/16] %v1652, 128
      %1788 = vxpose.xlu0.b32.cont [11/16] %v1653, 128
      %1789 = vxpose.xlu0.b32.cont [12/16] %v1654, 128
      %1790 = vxpose.xlu0.b32.cont [13/16] %v1655, 128
      %1791 = vxpose.xlu0.b32.cont [14/16] %v1656, 128
      %1792 = vxpose.xlu0.b32.cont [15/16] %v1657, 128
      %1793 = vxpose.xlu0.b32.end [16/16] %v1658, 128
      %v1794 = vpop.trf.xlu0
      %v1795 = vpop.trf.xlu0
      %v1796 = vpop.trf.xlu0
      %v1797 = vpop.trf.xlu0
      %v1798 = vpop.trf.xlu0
      %v1799 = vpop.trf.xlu0
      %v1800 = vpop.trf.xlu0
      %v1801 = vpop.trf.xlu0
      %v1802 = vpop.trf.xlu0
      %v1803 = vpop.trf.xlu0
      %v1804 = vpop.trf.xlu0
      %v1805 = vpop.trf.xlu0
      %v1806 = vpop.trf.xlu0
      %v1807 = vpop.trf.xlu0
      %v1808 = vpop.trf.xlu0
      %v1809 = vpop.trf.xlu0
      %1810 = vxpose.xlu0.b32.start [1/16] %v1659, 128
      %1811 = vxpose.xlu0.b32.cont [2/16] %v1660, 128
      %1812 = vxpose.xlu0.b32.cont [3/16] %v1661, 128
      %1813 = vxpose.xlu0.b32.cont [4/16] %v1662, 128
      %1814 = vxpose.xlu0.b32.cont [5/16] %v1663, 128
      %1815 = vxpose.xlu0.b32.cont [6/16] %v1664, 128
      %1816 = vxpose.xlu0.b32.cont [7/16] %v1665, 128
      %1817 = vxpose.xlu0.b32.cont [8/16] %v1666, 128
      %1818 = vxpose.xlu0.b32.cont [9/16] %v1667, 128
      %1819 = vxpose.xlu0.b32.cont [10/16] %v1668, 128
      %1820 = vxpose.xlu0.b32.cont [11/16] %v1669, 128
      %1821 = vxpose.xlu0.b32.cont [12/16] %v1670, 128
      %1822 = vxpose.xlu0.b32.cont [13/16] %v1671, 128
      %1823 = vxpose.xlu0.b32.cont [14/16] %v1672, 128
      %1824 = vxpose.xlu0.b32.cont [15/16] %v1673, 128
      %1825 = vxpose.xlu0.b32.end [16/16] %v1674, 128
      %v1826 = vpop.trf.xlu0
      %v1827 = vpop.trf.xlu0
      %v1828 = vpop.trf.xlu0
      %v1829 = vpop.trf.xlu0
      %v1830 = vpop.trf.xlu0
      %v1831 = vpop.trf.xlu0
      %v1832 = vpop.trf.xlu0
      %v1833 = vpop.trf.xlu0
      %v1834 = vpop.trf.xlu0
      %v1835 = vpop.trf.xlu0
      %v1836 = vpop.trf.xlu0
      %v1837 = vpop.trf.xlu0
      %v1838 = vpop.trf.xlu0
      %v1839 = vpop.trf.xlu0
      %v1840 = vpop.trf.xlu0
      %v1841 = vpop.trf.xlu0
      %1842 = vmatprep.subr.mxu0 0.0
      %1843 = vmatpush1.msra.mxu0 %v1643
      %1844 = vmatprep.subr.mxu0 0.0
      %1845 = vmatpush1.msra.mxu0 %v1644
      %1846 = vmatprep.subr.mxu0 0.0
      %1847 = vmatpush1.msra.mxu0 %v1645
      %1848 = vmatprep.subr.mxu0 0.0
      %1849 = vmatpush1.msra.mxu0 %v1646
      %1850 = vmatprep.subr.mxu0 0.0
      %1851 = vmatpush1.msra.mxu0 %v1647
      %1852 = vmatprep.subr.mxu0 0.0
      %1853 = vmatpush1.msra.mxu0 %v1648
      %1854 = vmatprep.subr.mxu0 0.0
      %1855 = vmatpush1.msra.mxu0 %v1649
      %1856 = vmatprep.subr.mxu0 0.0
      %1857 = vmatpush1.msra.mxu0 %v1650
      %1858 = vmatprep.subr.mxu0 0.0
      %1859 = vmatpush1.msra.mxu0 %v1651
      %1860 = vmatprep.subr.mxu0 0.0
      %1861 = vmatpush1.msra.mxu0 %v1652
      %1862 = vmatprep.subr.mxu0 0.0
      %1863 = vmatpush1.msra.mxu0 %v1653
      %1864 = vmatprep.subr.mxu0 0.0
      %1865 = vmatpush1.msra.mxu0 %v1654
      %1866 = vmatprep.subr.mxu0 0.0
      %1867 = vmatpush1.msra.mxu0 %v1655
      %1868 = vmatprep.subr.mxu0 0.0
      %1869 = vmatpush1.msra.mxu0 %v1656
      %1870 = vmatprep.subr.mxu0 0.0
      %1871 = vmatpush1.msra.mxu0 %v1657
      %1872 = vmatprep.subr.mxu0 0.0
      %1873 = vmatpush1.msra.mxu0 %v1658
      %1874 = vmatprep.subr.mxu0 0.0
      %1875 = vmatpush1.msra.mxu0 %v1659
      %1876 = vmatprep.subr.mxu0 0.0
      %1877 = vmatpush1.msra.mxu0 %v1660
      %1878 = vmatprep.subr.mxu0 0.0
      %1879 = vmatpush1.msra.mxu0 %v1661
      %1880 = vmatprep.subr.mxu0 0.0
      %1881 = vmatpush1.msra.mxu0 %v1662
      %1882 = vmatprep.subr.mxu0 0.0
      %1883 = vmatpush1.msra.mxu0 %v1663
      %1884 = vmatprep.subr.mxu0 0.0
      %1885 = vmatpush1.msra.mxu0 %v1664
      %1886 = vmatprep.subr.mxu0 0.0
      %1887 = vmatpush1.msra.mxu0 %v1665
      %1888 = vmatprep.subr.mxu0 0.0
      %1889 = vmatpush1.msra.mxu0 %v1666
      %1890 = vmatprep.subr.mxu0 0.0
      %1891 = vmatpush1.msra.mxu0 %v1667
      %1892 = vmatprep.subr.mxu0 0.0
      %1893 = vmatpush1.msra.mxu0 %v1668
      %1894 = vmatprep.subr.mxu0 0.0
      %1895 = vmatpush1.msra.mxu0 %v1669
      %1896 = vmatprep.subr.mxu0 0.0
      %1897 = vmatpush1.msra.mxu0 %v1670
      %1898 = vmatprep.subr.mxu0 0.0
      %1899 = vmatpush1.msra.mxu0 %v1671
      %1900 = vmatprep.subr.mxu0 0.0
      %1901 = vmatpush1.msra.mxu0 %v1672
      %1902 = vmatprep.subr.mxu0 0.0
      %1903 = vmatpush1.msra.mxu0 %v1673
      %1904 = vmatprep.subr.mxu0 0.0
      %1905 = vmatpush1.msra.mxu0 %v1674
      %1906 = vmatprep.mubr.f32.mxu0 %v1826
      %1907 = vmatmul.mubr.f32.gmra.mrb[0].mxu0 %v1794
      %v1908 = vpop.f32.mrb[0].mxu0
      %v1909 = vadd.f32 0.0, %v1908
      %v1910 = vpop.f32.mrb[0].mxu0
      %1911 = vdwg.mxu0
      %1912 = vst.msk [vmem:[%s270] sm:$0xff] %vm838, %v1909
      %p1913 = scmp.lt.s32.totalorder %s18, 1
      %s1914 = scalar_select %p1913, %s18, 1
      %s1915 = smul.addr %s1914, 32
      %s1916 = smul.addr %s1915, 8
      %s1917 = scalar_lea.vmem %s4, %s1916
      %p1918 = scmp.lt.s32.totalorder %s18, 1
      %s1919 = scalar_select %p1918, %s18, 1
      %s1920 = scalar_lea.vmem %s5, %s1919
      %p1921 = scmp.lt.s32.totalorder %s18, 1
      %s1922 = scalar_select %p1921, %s18, 1
      %s1923 = smul.addr %s1922, 8
      %s1924 = scalar_lea.vmem %s6, %s1923
      // Predicated region
      $region37: #{identical_block.4} parent=35 // pred_check
        %p1925 = pneg %p125
      $region38: #{identical_block.4} parent=35 // pred_check_branch
        %1927 = sbr.rel (%p1925) target = $region40
      $region39: #{identical_block.4} parent=35 // pred_region
        _
      $region40: #{identical_block.4} parent=35 // pred_fallthru
        _
      // Predicated region
      $region41: #{identical_block.4} parent=35 // pred_check
        %p1928 = pneg %p151
      $region42: #{identical_block.4} parent=35 // pred_check_branch
        %1930 = sbr.rel (%p1928) target = $region44
      $region43: #{identical_block.4} parent=35 // pred_region
        _
      $region44: #{identical_block.4} parent=35 // pred_fallthru
        _
      // Predicated region
      $region45: #{identical_block.4} parent=35 // pred_check
        %p1931 = pneg %p177
      $region46: #{identical_block.4} parent=35 // pred_check_branch
        %1933 = sbr.rel (%p1931) target = $region48
      $region47: #{identical_block.4} parent=35 // pred_region
        _
      $region48: #{identical_block.4} parent=35 // pred_fallthru
        _
    $region36: #{identical_block.4} parent=5 // pred_fallthru
      _
    %p1934 = scmp.le.s32.totalorder 2, %s13
    // Predicated region
    $region49: #{identical_block.4} parent=5 // pred_check
      %p1935 = pneg %p1934
    $region50: #{identical_block.4} parent=5 // pred_check_branch
      %1937 = sbr.rel (%p1935) target = $region52
    $region51: #{identical_block.4} parent=5 // pred_region
      %s1938 = ssub.s32 %s13, 2
      // Predicated region
      $region53: #{identical_block.4} parent=51 // pred_check
        %p1939 = pneg %p131
      $region54: #{identical_block.4} parent=51 // pred_check_branch
        %1941 = sbr.rel (%p1939) target = $region56
      $region55: #{identical_block.4} parent=51 // pred_region
        %p1942 = scmp.lt.s32.totalorder %s19, 1
        %s1943 = scalar_select %p1942, %s19, 1
        %s1944 = smul.addr %s1943, 32
        %s1945 = smul.addr %s1944, 8
        %s1946 = scalar_lea.vmem %s4, %s1945
      $region56: #{identical_block.4} parent=51 // pred_fallthru
        _
      // Predicated region
      $region57: #{identical_block.4} parent=51 // pred_check
        %p1947 = pneg %p157
      $region58: #{identical_block.4} parent=51 // pred_check_branch
        %1949 = sbr.rel (%p1947) target = $region60
      $region59: #{identical_block.4} parent=51 // pred_region
        %p1950 = scmp.lt.s32.totalorder %s19, 1
        %s1951 = scalar_select %p1950, %s19, 1
        %s1952 = scalar_lea.vmem %s5, %s1951
      $region60: #{identical_block.4} parent=51 // pred_fallthru
        _
      // Predicated region
      $region61: #{identical_block.4} parent=51 // pred_check
        %p1953 = pneg %p183
      $region62: #{identical_block.4} parent=51 // pred_check_branch
        %1955 = sbr.rel (%p1953) target = $region64
      $region63: #{identical_block.4} parent=51 // pred_region
        %p1956 = scmp.lt.s32.totalorder %s19, 1
        %s1957 = scalar_select %p1956, %s19, 1
        %s1958 = smul.addr %s1957, 8
        %s1959 = scalar_lea.vmem %s6, %s1958
      $region64: #{identical_block.4} parent=51 // pred_fallthru
        _
    $region52: #{identical_block.4} parent=5 // pred_fallthru
      _
  $region6: #{identical_block.4} parent=0 // loop_footer
    %s17 = sadd.s32 1, %s13
  $region7: #{identical_block.4} parent=0 // loop_footer_branch
    %12 = sbr.rel target = $region3
  $region8: #{identical_block.4} parent=0 // loop_exit
    _

</llo_original>
